<compile_context>
chip_gen: v7x
topology: tpu7x:2x2x1
jax: 0.10.0
libtpu: 0.0.40
codegen_flags: <defaults>
</compile_context>

<pallas_src>
import functools
import math

import jax
import jax.numpy as jnp
from jax.experimental import pallas as pl
from jax.experimental.pallas import tpu as pltpu


# ------------------------------- helpers -------------------------------------

def _round_up(x, m):
    return ((x + m - 1) // m) * m


def _nbytes(arr):
    return arr.size * arr.dtype.itemsize


def _vmem_limit(request_bytes):
    # Explicit scoped-VMEM budget (feedback #10); never above v7x physical 64MiB.
    return int(min(64 * 1024 * 1024, max(8 * 1024 * 1024, request_bytes)))


def _choose_bt(batch):
    # Pack several batch elements per grid step so the MXU M dimension sees
    # Bt*S rows instead of S (feedback #1).  Largest divisor of `batch` <= 8;
    # for realistic batch sizes this also keeps the parallel grid extent >= 2
    # for v7x megacore balance (feedback #11).
    for bt in range(min(8, batch), 0, -1):
        if batch % bt == 0:
            return bt
    return 1


# --------------------------- fused decoder block -----------------------------

def _decoder_block_kernel(x_ref, pad_ref, wqkv_ref, bqkv_ref, wo_ref, bo_ref,
                          lng_ref, lnb_ref, *ffn_and_out, scale, num_heads):
    o_ref = ffn_and_out[-1]
    ffn_refs = ffn_and_out[:-1]            # alternating (w_ref, b_ref) pairs

    bt, seq, d = x_ref.shape
    dh = d // num_heads
    rows = bt * seq

    x_bf = x_ref[...].reshape(rows, d)                   # bf16 (Bt*S, D)
    x_f32 = x_bf.astype(jnp.float32)

    # ---- QKV projection: one (Bt*S, D) @ (D, 3D) MXU pass, f32 accumulate ----
    qkv_f = jnp.dot(x_bf, wqkv_ref[...],
                    preferred_element_type=jnp.float32) + bqkv_ref[0]
    qkv = qkv_f.astype(jnp.bfloat16)                     # single cast (fb #5)

    # ---- masks shared by all heads ----
    row_i = jax.lax.broadcasted_iota(jnp.int32, (seq, seq), 0)
    col_i = jax.lax.broadcasted_iota(jnp.int32, (seq, seq), 1)
    causal = (col_i > row_i)[None, :, :]                 # (1, S, S)
    key_pad = pad_ref[...] > 0.5                         # (Bt, 1, S)
    mask = causal | key_pad                              # (Bt, S, S)

    # ---- per-head attention; head-merge folded into the out projection ----
    # wo_ref is the out-proj weight reshaped to (H, Dh, D) on the wrapper side
    # so no in-kernel (S, H, Dh) -> (S, D) relayout is needed (feedback #4).
    attn = None
    for h in range(num_heads):
        q_h = qkv[:, h * dh:(h + 1) * dh].reshape(bt, seq, dh)
        k_h = qkv[:, d + h * dh: d + (h + 1) * dh].reshape(bt, seq, dh)
        v_h = qkv[:, 2 * d + h * dh: 2 * d + (h + 1) * dh].reshape(bt, seq, dh)

        s = jnp.einsum("bqd,bkd->bqk", q_h, k_h,
                       preferred_element_type=jnp.float32) * scale
        s = jnp.where(mask, -1e30, s)    # finite => no NaN on fully-masked rows
        m = jnp.max(s, axis=-1, keepdims=True)
        e = jnp.exp(s - m)
        p = e * pl.reciprocal(jnp.sum(e, axis=-1, keepdims=True), approx=True)

        o_h = jnp.einsum("bqk,bkd->bqd", p.astype(jnp.bfloat16), v_h,
                         preferred_element_type=jnp.float32)       # (Bt,S,Dh)
        part = jnp.dot(o_h.reshape(rows, dh).astype(jnp.bfloat16), wo_ref[h],
                       preferred_element_type=jnp.float32)         # (Bt*S, D)
        attn = part if attn is None else attn + part
    attn_out = attn + bo_ref[0]

    # ---- residual + LayerNorm (f32 statistics) ----
    residual_one = x_f32 + attn_out
    mean = jnp.mean(residual_one, axis=-1, keepdims=True)
    var = jnp.mean(jnp.square(residual_one - mean), axis=-1, keepdims=True)
    normalized = ((residual_one - mean) * jax.lax.rsqrt(var + 1e-5)
                  * lng_ref[0] + lnb_ref[0])

    # ---- FFN (fused): [Linear + ReLU] * hidden layers, final Linear ----
    act = normalized.astype(jnp.bfloat16)
    n_ffn = len(ffn_refs) // 2
    out_f = None
    for li in range(n_ffn):
        w_ref = ffn_refs[2 * li]
        b_ref = ffn_refs[2 * li + 1]
        out_f = jnp.dot(act, w_ref[...],
                        preferred_element_type=jnp.float32) + b_ref[0]
        if li < n_ffn - 1:
            out_f = jnp.maximum(out_f, 0.0)
            act = out_f.astype(jnp.bfloat16)

    # ---- second residual, bf16 writeback ----
    o_ref[...] = (residual_one + out_f).reshape(bt, seq, d).astype(o_ref.dtype)


def _const_spec(shape, single_buffer):
    index_map = lambda *_: (0,) * len(shape)
    if single_buffer:
        # Constant-index weights: one resident VMEM buffer instead of the
        # default double-buffer (feedback #2).
        return pl.BlockSpec(shape, index_map, pipeline_mode=pl.Buffered(1))
    return pl.BlockSpec(shape, index_map)


def _decoder_block_call(x, pad, blk, num_heads, single_buffer):
    B, S, D = x.shape
    dh = D // num_heads
    bt = _choose_bt(B)
    scale = 1.0 / math.sqrt(dh)

    # Reshape the out-proj weight once on the wrapper side (free) so the kernel
    # can contract per head without an in-kernel head-merge relayout (fb #4).
    w_o_r = blk["w_o"].reshape(num_heads, dh, D)
    b_qkv = blk["b_qkv"].reshape(1, -1)
    b_o = blk["b_o"].reshape(1, -1)
    ln_g = blk["ln_g"].reshape(1, -1)
    ln_b = blk["ln_b"].reshape(1, -1)

    weights = [blk["w_qkv"], b_qkv, w_o_r, b_o, ln_g, ln_b]
    for layer in blk["ffn"]:
        weights += [layer["w"], layer["b"].reshape(1, -1)]
    weight_specs = [_const_spec(w.shape, single_buffer) for w in weights]

    # explicit scoped-VMEM budget sized from the real footprint (feedback #10)
    w_bytes = sum(_nbytes(w) for w in weights) * (1 if single_buffer else 2)
    act_bytes = 2 * (2 * bt * S * D * 2 + bt * S * 4)      # x/out/pad, dbl-buf
    tmp_bytes = bt * S * (3 * D) * 2 + 4 * bt * S * S * 4 + 8 * bt * S * D * 4
    vmem_limit = _vmem_limit(2 * (w_bytes + act_bytes + tmp_bytes) + (2 << 20))

    kernel = functools.partial(_decoder_block_kernel,
                               scale=scale, num_heads=num_heads)
    return pl.pallas_call(
        kernel,
        out_shape=jax.ShapeDtypeStruct((B, S, D), x.dtype),
        grid_spec=pltpu.PrefetchScalarGridSpec(
            num_scalar_prefetch=0,
            grid=(B // bt,),
            in_specs=[
                pl.BlockSpec((bt, S, D), lambda bi: (bi, 0, 0)),   # x tile
                pl.BlockSpec((bt, 1, S), lambda bi: (bi, 0, 0)),   # padding
            ] + weight_specs,
            out_specs=pl.BlockSpec((bt, S, D), lambda bi: (bi, 0, 0)),
        ),
        compiler_params=pltpu.CompilerParams(
            dimension_semantics=("parallel",),
            vmem_limit_bytes=vmem_limit),
    )(x, pad, *weights)


_WEIGHT_BUFFERING = {"single": None}     # resolved on the first block call


def decoder_block(x, pad, blk, num_heads):
    if _WEIGHT_BUFFERING["single"] is None:
        try:
            out = jax.block_until_ready(
                _decoder_block_call(x, pad, blk, num_heads, single_buffer=True))
            _WEIGHT_BUFFERING["single"] = True
            return out
        except Exception:
            # TODO(synk): pl.Buffered(1) rejected by this jax/Mosaic build;
            # fall back to default double-buffered weight pipelining.
            _WEIGHT_BUFFERING["single"] = False
    return _decoder_block_call(x, pad, blk, num_heads,
                               single_buffer=_WEIGHT_BUFFERING["single"])


# ----------------------- fused final LN + tied logits ------------------------

def _final_ln_logits_kernel(x_ref, g_ref, b_ref, emb_ref, lb_ref, o_ref, xn_ref):
    # LayerNorm hoisted out of the vocab-tile loop: computed once per row tile
    # (innermost grid axis j == 0) into a bf16 VMEM scratch (feedback #6).
    @pl.when(pl.program_id(1) == 0)
    def _():
        x = x_ref[...].astype(jnp.float32)
        mean = jnp.mean(x, axis=-1, keepdims=True)
        var = jnp.mean(jnp.square(x - mean), axis=-1, keepdims=True)
        xn = (x - mean) * jax.lax.rsqrt(var + 1e-5) * g_ref[0] + b_ref[0]
        xn_ref[...] = xn.astype(jnp.bfloat16)

    # tied weights: logits = xn @ emb.T, contracting D of both operands so the
    # (V, D) embedding is consumed as-is (no transpose / extra HBM copy).
    y = jax.lax.dot_general(
        xn_ref[...], emb_ref[...],
        dimension_numbers=(((1,), (1,)), ((), ())),
        preferred_element_type=jnp.float32)
    o_ref[...] = (y + lb_ref[0]).astype(o_ref.dtype)     # bf16 store (fb #9)


def final_ln_logits(x2, gamma, beta, emb, logits_b, *, tm_pref=512, tn_pref=1024):
    M, D = x2.shape
    V = emb.shape[0]

    # Large, lane-dense tiles; pad instead of letting the tile size decay to
    # sub-(8,128) partial stores (feedback #7 / #8).
    tm = min(tm_pref, _round_up(M, 8))
    tn = min(tn_pref, _round_up(V, 128))
    mp = _round_up(M, tm)
    vp = _round_up(V, tn)
    if mp != M:
        x2 = jnp.pad(x2, ((0, mp - M), (0, 0)))
    if vp != V:
        emb = jnp.pad(emb, ((0, vp - V), (0, 0)))
        logits_b = jnp.pad(logits_b, (0, vp - V))

    vmem_limit = _vmem_limit(
        2 * (3 * tm * D * 2 + 2 * tn * D * 2 + 2 * tm * tn * 2
             + 2 * tn * 4 + 4 * D * 4) + (2 << 20))

    out = pl.pallas_call(
        _final_ln_logits_kernel,
        out_shape=jax.ShapeDtypeStruct((mp, vp), jnp.bfloat16),
        grid_spec=pltpu.PrefetchScalarGridSpec(
            num_scalar_prefetch=0,
            grid=(mp // tm, vp // tn),
            in_specs=[
                pl.BlockSpec((tm, D), lambda i, j: (i, 0)),   # x rows
                pl.BlockSpec((1, D), lambda i, j: (0, 0)),    # ln gamma
                pl.BlockSpec((1, D), lambda i, j: (0, 0)),    # ln beta
                pl.BlockSpec((tn, D), lambda i, j: (j, 0)),   # emb vocab tile
                pl.BlockSpec((1, tn), lambda i, j: (0, j)),   # logits bias
            ],
            out_specs=pl.BlockSpec((tm, tn), lambda i, j: (i, j)),
            scratch_shapes=[pltpu.VMEM((tm, D), jnp.bfloat16)],
        ),
        compiler_params=pltpu.CompilerParams(
            dimension_semantics=("parallel", "arbitrary"),
            vmem_limit_bytes=vmem_limit),
    )(x2, gamma.reshape(1, -1), beta.reshape(1, -1), emb,
      logits_b.reshape(1, -1))
    return out[:M, :V]


# --------------------------- parameters & model ------------------------------

def init_params(key, cfg):
    keys = iter(jax.random.split(key, 256))

    def nrm(shape, scale=0.1):
        return (scale * jax.random.normal(next(keys), shape,
                                          dtype=jnp.float32)).astype(jnp.bfloat16)

    def vec(shape, scale=0.02):
        return scale * jax.random.normal(next(keys), shape, dtype=jnp.float32)

    D = cfg["d_model"]
    Hh = cfg["d_hidden"]
    V = cfg["vocab_size"]
    C = cfg["context_length"]

    params = {"emb": nrm((V, D))}            # bf16, tied with to_logits

    # TODO(synk): PositionalEncoder body not provided; standard sinusoidal PE.
    pos = jnp.arange(C, dtype=jnp.float32)[:, None]
    i = jnp.arange(0, D, 2, dtype=jnp.float32)
    div = jnp.exp(-math.log(10000.0) * i / D)
    pe = jnp.zeros((C, D), dtype=jnp.float32)
    pe = pe.at[:, 0::2].set(jnp.sin(pos * div))
    pe = pe.at[:, 1::2].set(jnp.cos(pos * div))
    params["pe"] = pe

    blocks = []
    for _ in range(cfg["num_decoders"]):
        blk = {
            "w_qkv": nrm((D, 3 * D)), "b_qkv": vec((3 * D,)),
            "w_o": nrm((D, D)), "b_o": vec((D,)),
            "ln_g": jnp.ones((D,), jnp.float32),
            "ln_b": jnp.zeros((D,), jnp.float32),
        }
        ffn = []
        in_d = D
        for _ in range(cfg["num_hidden_layers"]):
            ffn.append({"w": nrm((in_d, Hh)), "b": vec((Hh,))})
            in_d = Hh
        ffn.append({"w": nrm((in_d, D)), "b": vec((D,))})
        blk["ffn"] = ffn
        blocks.append(blk)
    params["blocks"] = blocks

    params["final_ln_g"] = jnp.ones((D,), jnp.float32)
    params["final_ln_b"] = jnp.zeros((D,), jnp.float32)
    params["logits_b"] = vec((V,))
    return params


def next_byte_transformer_forward(params, tokens, cfg):
    B, S = tokens.shape
    D = cfg["d_model"]
    H = cfg["num_heads"]

    pad = (tokens == 0).astype(jnp.float32).reshape(B, 1, S)  # key_padding_mask
    # TODO(synk): embedding gather kept as XLA glue (data-dependent gather has
    #             no worthwhile Pallas formulation at this size).
    x = jnp.take(params["emb"], tokens, axis=0).astype(jnp.float32)
    x = (x + params["pe"][:S][None, :, :]).astype(jnp.bfloat16)

    for blk in params["blocks"]:
        x = decoder_block(x, pad, blk, H)          # one fused kernel per block

    x2 = x.reshape(B * S, D)
    logits = final_ln_logits(x2, params["final_ln_g"], params["final_ln_b"],
                             params["emb"], params["logits_b"])
    return logits.reshape(B, S, cfg["vocab_size"])


# --------------------- plain-JAX structural reference ------------------------

def _reference_forward(params, tokens, cfg):
    """Plain jnp forward mirroring the kernels' dtype policy (bf16 matmul
    operands, f32 accumulation / statistics) to validate the kernel structure."""
    B, S = tokens.shape
    D = cfg["d_model"]
    H = cfg["num_heads"]
    Dh = D // H

    pad = tokens == 0
    x = jnp.take(params["emb"], tokens, axis=0).astype(jnp.float32)
    x = (x + params["pe"][:S][None]).astype(jnp.bfloat16).astype(jnp.float32)

    causal = jnp.triu(jnp.ones((S, S), dtype=bool), 1)
    mask = causal[None, None] | pad[:, None, None, :]             # (B,1,S,S)

    for blk in params["blocks"]:
        xb = x.astype(jnp.bfloat16)
        qkv = (jnp.dot(xb, blk["w_qkv"], preferred_element_type=jnp.float32)
               + blk["b_qkv"]).astype(jnp.bfloat16)
        q = qkv[..., :D].reshape(B, S, H, Dh).transpose(0, 2, 1, 3)
        k = qkv[..., D:2 * D].reshape(B, S, H, Dh).transpose(0, 2, 1, 3)
        v = qkv[..., 2 * D:].reshape(B, S, H, Dh).transpose(0, 2, 1, 3)
        s = jnp.einsum("bhqd,bhkd->bhqk", q, k,
                       preferred_element_type=jnp.float32) * (1.0 / math.sqrt(Dh))
        s = jnp.where(mask, -1e30, s)
        p = jax.nn.softmax(s, axis=-1)
        o = jnp.einsum("bhqk,bhkd->bhqd", p.astype(jnp.bfloat16), v,
                       preferred_element_type=jnp.float32)
        o = o.transpose(0, 2, 1, 3).reshape(B, S, D)
        attn_out = jnp.dot(o.astype(jnp.bfloat16), blk["w_o"],
                           preferred_element_type=jnp.float32) + blk["b_o"]
        residual_one = x + attn_out
        mean = residual_one.mean(-1, keepdims=True)
        var = jnp.square(residual_one - mean).mean(-1, keepdims=True)
        normalized = ((residual_one - mean) * jax.lax.rsqrt(var + 1e-5)
                      * blk["ln_g"] + blk["ln_b"])
        h = normalized.astype(jnp.bfloat16)
        n = len(blk["ffn"])
        for li, layer in enumerate(blk["ffn"]):
            hf = jnp.dot(h, layer["w"],
                         preferred_element_type=jnp.float32) + layer["b"]
            if li < n - 1:
                hf = jnp.maximum(hf, 0.0)
                h = hf.astype(jnp.bfloat16)
        # mirror the kernel's bf16 HBM writeback of the residual stream
        x = (residual_one + hf).astype(jnp.bfloat16).astype(jnp.float32)

    mean = x.mean(-1, keepdims=True)
    var = jnp.square(x - mean).mean(-1, keepdims=True)
    xn = ((x - mean) * jax.lax.rsqrt(var + 1e-5)
          * params["final_ln_g"] + params["final_ln_b"]).astype(jnp.bfloat16)
    logits = jnp.dot(xn, params["emb"].T,
                     preferred_element_type=jnp.float32) + params["logits_b"]
    return logits


# ---------------------------------- main -------------------------------------

if __name__ == "__main__":
    cfg = dict(
        vocab_size=64,
        context_length=16,
        d_model=32,
        d_hidden=64,
        num_hidden_layers=1,
        num_heads=4,
        num_decoders=2,
    )
    B, S = 2, cfg["context_length"]

    key = jax.random.PRNGKey(0)
    k_param, k_tok = jax.random.split(key)
    params = init_params(k_param, cfg)

    tokens = jax.random.randint(k_tok, (B, S), 1, cfg["vocab_size"], dtype=jnp.int32)
    tokens = tokens.at[1, -1].set(0)   # exercise key_padding_mask (token == 0)

    logits = jax.block_until_ready(next_byte_transformer_forward(params, tokens, cfg))

    ref = _reference_forward(params, tokens, cfg)
    tol = 0.05 * max(float(jnp.max(jnp.abs(ref))), 1.0)
    err = float(jnp.max(jnp.abs(logits.astype(jnp.float32) - ref)))
    if err > tol and _WEIGHT_BUFFERING["single"]:
        # TODO(synk): guard against a pl.Buffered(1) miscompile in older
        # builds: redo with default double-buffered weight pipelining.
        _WEIGHT_BUFFERING["single"] = False
        logits = jax.block_until_ready(
            next_byte_transformer_forward(params, tokens, cfg))
        err = float(jnp.max(jnp.abs(logits.astype(jnp.float32) - ref)))

    assert logits.shape == (B, S, cfg["vocab_size"])
    assert bool(jnp.all(jnp.isfinite(logits.astype(jnp.float32))))
    assert err <= tol, f"kernel vs reference mismatch: {err} > {tol}"

    print("KERNEL_OK")
</pallas_src>

<mosaic_0001>
module attributes {stable_mosaic.version = 11 : i64} {
  func.func @_decoder_block_kernel(%arg0: i32, %arg1: memref<2x16x32xbf16, #tpu.memory_space<vmem>>, %arg2: memref<2x1x16xf32, #tpu.memory_space<vmem>>, %arg3: memref<32x96xbf16, #tpu.memory_space<vmem>>, %arg4: memref<1x96xf32, #tpu.memory_space<vmem>>, %arg5: memref<4x8x32xbf16, #tpu.memory_space<vmem>>, %arg6: memref<1x32xf32, #tpu.memory_space<vmem>>, %arg7: memref<1x32xf32, #tpu.memory_space<vmem>>, %arg8: memref<1x32xf32, #tpu.memory_space<vmem>>, %arg9: memref<32x64xbf16, #tpu.memory_space<vmem>>, %arg10: memref<1x64xf32, #tpu.memory_space<vmem>>, %arg11: memref<64x32xbf16, #tpu.memory_space<vmem>>, %arg12: memref<1x32xf32, #tpu.memory_space<vmem>>, %arg13: memref<2x16x32xbf16, #tpu.memory_space<vmem>>) attributes {dimension_semantics = [#tpu.dimension_semantics<parallel>], iteration_bounds = array<i64: 1>, scalar_prefetch = 0 : i64, scratch_operands = 0 : i64, tpu.core_type = #tpu.core_type<tc>, window_params = [{transform_indices = @transform_0, window_bounds = array<i64: 2, 16, 32>}, {transform_indices = @transform_1, window_bounds = array<i64: 2, 1, 16>}, {pipeline_mode = #tpu.pipeline_mode<synchronous>, transform_indices = @transform_2, window_bounds = array<i64: 32, 96>}, {pipeline_mode = #tpu.pipeline_mode<synchronous>, transform_indices = @transform_3, window_bounds = array<i64: 1, 96>}, {pipeline_mode = #tpu.pipeline_mode<synchronous>, transform_indices = @transform_4, window_bounds = array<i64: 4, 8, 32>}, {pipeline_mode = #tpu.pipeline_mode<synchronous>, transform_indices = @transform_5, window_bounds = array<i64: 1, 32>}, {pipeline_mode = #tpu.pipeline_mode<synchronous>, transform_indices = @transform_6, window_bounds = array<i64: 1, 32>}, {pipeline_mode = #tpu.pipeline_mode<synchronous>, transform_indices = @transform_7, window_bounds = array<i64: 1, 32>}, {pipeline_mode = #tpu.pipeline_mode<synchronous>, transform_indices = @transform_8, window_bounds = array<i64: 32, 64>}, {pipeline_mode = #tpu.pipeline_mode<synchronous>, transform_indices = @transform_9, window_bounds = array<i64: 1, 64>}, {pipeline_mode = #tpu.pipeline_mode<synchronous>, transform_indices = @transform_10, window_bounds = array<i64: 64, 32>}, {pipeline_mode = #tpu.pipeline_mode<synchronous>, transform_indices = @transform_11, window_bounds = array<i64: 1, 32>}, {transform_indices = @transform_12, window_bounds = array<i64: 2, 16, 32>}]} {
    %c0 = arith.constant 0 : index
    %c0_0 = arith.constant 0 : index
    %c0_1 = arith.constant 0 : index
    %0 = vector.load %arg1[%c0, %c0_0, %c0_1] : memref<2x16x32xbf16, #tpu.memory_space<vmem>>, vector<2x16x32xbf16>
    %1 = vector.shape_cast %0 : vector<2x16x32xbf16> to vector<32x32xbf16>
    %2 = arith.extf %1 : vector<32x32xbf16> to vector<32x32xf32>
    %c0_2 = arith.constant 0 : index
    %c0_3 = arith.constant 0 : index
    %3 = vector.load %arg3[%c0_2, %c0_3] : memref<32x96xbf16, #tpu.memory_space<vmem>>, vector<32x96xbf16>
    %cst = arith.constant dense<0.000000e+00> : vector<32x96xf32>
    %4 = tpu.matmul %1, %3, %cst {dimension_numbers = #tpu.dot_dimension_numbers<[1], [0], [0], [1], [0, 0, 1, 1], [], []>} : vector<32x32xbf16>, vector<32x96xbf16>, vector<32x96xf32> -> vector<32x96xf32>
    %c0_4 = arith.constant 0 : index
    %c0_5 = arith.constant 0 : index
    %5 = vector.load %arg4[%c0_4, %c0_5] : memref<1x96xf32, #tpu.memory_space<vmem>>, vector<1x96xf32>
    %6 = vector.shape_cast %5 : vector<1x96xf32> to vector<96xf32>
    %7 = vector.shape_cast %6 : vector<96xf32> to vector<1x96xf32>
    %8 = vector.broadcast %7 : vector<1x96xf32> to vector<32x96xf32>
    %9 = arith.addf %4, %8 : vector<32x96xf32>
    %10 = arith.truncf %9 : vector<32x96xf32> to vector<32x96xbf16>
    %11 = tpu.iota {dimensions = array<i32: 0>} : vector<16x16xi32>
    %12 = tpu.iota {dimensions = array<i32: 1>} : vector<16x16xi32>
    %13 = arith.cmpi sgt, %12, %11 : vector<16x16xi32>
    %14 = vector.shape_cast %13 : vector<16x16xi1> to vector<1x16x16xi1>
    %c0_6 = arith.constant 0 : index
    %c0_7 = arith.constant 0 : index
    %c0_8 = arith.constant 0 : index
    %15 = vector.load %arg2[%c0_6, %c0_7, %c0_8] : memref<2x1x16xf32, #tpu.memory_space<vmem>>, vector<2x1x16xf32>
    %cst_9 = arith.constant 5.000000e-01 : f32
    %16 = vector.broadcast %cst_9 : f32 to vector<2x1x16xf32>
    %17 = arith.cmpf ogt, %15, %16 : vector<2x1x16xf32>
    %18 = vector.broadcast %14 : vector<1x16x16xi1> to vector<2x16x16xi1>
    %19 = vector.broadcast %17 : vector<2x1x16xi1> to vector<2x16x16xi1>
    %20 = arith.ori %18, %19 : vector<2x16x16xi1>
    %21 = vector.extract_strided_slice %10 {offsets = [0, 0], sizes = [32, 8], strides = [1, 1]} : vector<32x96xbf16> to vector<32x8xbf16>
    %22 = vector.shape_cast %21 : vector<32x8xbf16> to vector<2x16x8xbf16>
    %23 = vector.extract_strided_slice %10 {offsets = [0, 32], sizes = [32, 8], strides = [1, 1]} : vector<32x96xbf16> to vector<32x8xbf16>
    %24 = vector.shape_cast %23 : vector<32x8xbf16> to vector<2x16x8xbf16>
    %25 = vector.extract_strided_slice %10 {offsets = [0, 64], sizes = [32, 8], strides = [1, 1]} : vector<32x96xbf16> to vector<32x8xbf16>
    %26 = vector.shape_cast %25 : vector<32x8xbf16> to vector<2x16x8xbf16>
    "tpu.trace_start"() <{level = 10 : i32, message = "bqd,bkd->bqk"}> : () -> ()
    %cst_10 = arith.constant dense<0.000000e+00> : vector<2x16x16xf32>
    %27 = tpu.matmul %22, %24, %cst_10 {dimension_numbers = #tpu.dot_dimension_numbers<[2], [2], [1], [1], [0, 0, 0, 1, 1, 1], [0], [0]>} : vector<2x16x8xbf16>, vector<2x16x8xbf16>, vector<2x16x16xf32> -> vector<2x16x16xf32>
    "tpu.trace_stop"() : () -> ()
    %cst_11 = arith.constant 0.353553385 : f32
    %28 = vector.broadcast %cst_11 : f32 to vector<2x16x16xf32>
    %29 = arith.mulf %27, %28 : vector<2x16x16xf32>
    %cst_12 = arith.constant -1.000000e+30 : f32
    %30 = vector.broadcast %cst_12 : f32 to vector<2x16x16xf32>
    %31 = arith.select %20, %30, %29 : vector<2x16x16xi1>, vector<2x16x16xf32>
    %cst_13 = arith.constant dense<0xFF800000> : vector<2x16xf32>
    %32 = vector.multi_reduction <maximumf>, %31, %cst_13 [2] : vector<2x16x16xf32> to vector<2x16xf32>
    %33 = vector.shape_cast %32 : vector<2x16xf32> to vector<2x16x1xf32>
    %34 = vector.broadcast %33 : vector<2x16x1xf32> to vector<2x16x16xf32>
    %35 = arith.subf %31, %34 : vector<2x16x16xf32>
    %36 = math.exp %35 : vector<2x16x16xf32>
    %cst_14 = arith.constant dense<0.000000e+00> : vector<2x16xf32>
    %37 = vector.multi_reduction <add>, %36, %cst_14 [2] : vector<2x16x16xf32> to vector<2x16xf32>
    %38 = vector.shape_cast %37 : vector<2x16xf32> to vector<2x16x1xf32>
    %39 = tpu.reciprocal %38 {approx = true} : vector<2x16x1xf32> -> vector<2x16x1xf32>
    %40 = vector.broadcast %39 : vector<2x16x1xf32> to vector<2x16x16xf32>
    %41 = arith.mulf %36, %40 : vector<2x16x16xf32>
    %42 = arith.truncf %41 : vector<2x16x16xf32> to vector<2x16x16xbf16>
    "tpu.trace_start"() <{level = 10 : i32, message = "bqk,bkd->bqd"}> : () -> ()
    %cst_15 = arith.constant dense<0.000000e+00> : vector<2x16x8xf32>
    %43 = tpu.matmul %42, %26, %cst_15 {dimension_numbers = #tpu.dot_dimension_numbers<[2], [1], [1], [2], [0, 0, 0, 1, 1, 2], [0], [0]>} : vector<2x16x16xbf16>, vector<2x16x8xbf16>, vector<2x16x8xf32> -> vector<2x16x8xf32>
    "tpu.trace_stop"() : () -> ()
    %44 = vector.shape_cast %43 : vector<2x16x8xf32> to vector<32x8xf32>
    %45 = arith.truncf %44 : vector<32x8xf32> to vector<32x8xbf16>
    %c0_16 = arith.constant 0 : index
    %c0_17 = arith.constant 0 : index
    %c0_18 = arith.constant 0 : index
    %46 = vector.load %arg5[%c0_16, %c0_17, %c0_18] : memref<4x8x32xbf16, #tpu.memory_space<vmem>>, vector<1x8x32xbf16>
    %47 = vector.shape_cast %46 : vector<1x8x32xbf16> to vector<8x32xbf16>
    %cst_19 = arith.constant dense<0.000000e+00> : vector<32x32xf32>
    %48 = tpu.matmul %45, %47, %cst_19 {dimension_numbers = #tpu.dot_dimension_numbers<[1], [0], [0], [1], [0, 0, 1, 1], [], []>} : vector<32x8xbf16>, vector<8x32xbf16>, vector<32x32xf32> -> vector<32x32xf32>
    %49 = vector.extract_strided_slice %10 {offsets = [0, 8], sizes = [32, 8], strides = [1, 1]} : vector<32x96xbf16> to vector<32x8xbf16>
    %50 = vector.shape_cast %49 : vector<32x8xbf16> to vector<2x16x8xbf16>
    %51 = vector.extract_strided_slice %10 {offsets = [0, 40], sizes = [32, 8], strides = [1, 1]} : vector<32x96xbf16> to vector<32x8xbf16>
    %52 = vector.shape_cast %51 : vector<32x8xbf16> to vector<2x16x8xbf16>
    %53 = vector.extract_strided_slice %10 {offsets = [0, 72], sizes = [32, 8], strides = [1, 1]} : vector<32x96xbf16> to vector<32x8xbf16>
    %54 = vector.shape_cast %53 : vector<32x8xbf16> to vector<2x16x8xbf16>
    "tpu.trace_start"() <{level = 10 : i32, message = "bqd,bkd->bqk"}> : () -> ()
    %cst_20 = arith.constant dense<0.000000e+00> : vector<2x16x16xf32>
    %55 = tpu.matmul %50, %52, %cst_20 {dimension_numbers = #tpu.dot_dimension_numbers<[2], [2], [1], [1], [0, 0, 0, 1, 1, 1], [0], [0]>} : vector<2x16x8xbf16>, vector<2x16x8xbf16>, vector<2x16x16xf32> -> vector<2x16x16xf32>
    "tpu.trace_stop"() : () -> ()
    %cst_21 = arith.constant 0.353553385 : f32
    %56 = vector.broadcast %cst_21 : f32 to vector<2x16x16xf32>
    %57 = arith.mulf %55, %56 : vector<2x16x16xf32>
    %cst_22 = arith.constant -1.000000e+30 : f32
    %58 = vector.broadcast %cst_22 : f32 to vector<2x16x16xf32>
    %59 = arith.select %20, %58, %57 : vector<2x16x16xi1>, vector<2x16x16xf32>
    %cst_23 = arith.constant dense<0xFF800000> : vector<2x16xf32>
    %60 = vector.multi_reduction <maximumf>, %59, %cst_23 [2] : vector<2x16x16xf32> to vector<2x16xf32>
    %61 = vector.shape_cast %60 : vector<2x16xf32> to vector<2x16x1xf32>
    %62 = vector.broadcast %61 : vector<2x16x1xf32> to vector<2x16x16xf32>
    %63 = arith.subf %59, %62 : vector<2x16x16xf32>
    %64 = math.exp %63 : vector<2x16x16xf32>
    %cst_24 = arith.constant dense<0.000000e+00> : vector<2x16xf32>
    %65 = vector.multi_reduction <add>, %64, %cst_24 [2] : vector<2x16x16xf32> to vector<2x16xf32>
    %66 = vector.shape_cast %65 : vector<2x16xf32> to vector<2x16x1xf32>
    %67 = tpu.reciprocal %66 {approx = true} : vector<2x16x1xf32> -> vector<2x16x1xf32>
    %68 = vector.broadcast %67 : vector<2x16x1xf32> to vector<2x16x16xf32>
    %69 = arith.mulf %64, %68 : vector<2x16x16xf32>
    %70 = arith.truncf %69 : vector<2x16x16xf32> to vector<2x16x16xbf16>
    "tpu.trace_start"() <{level = 10 : i32, message = "bqk,bkd->bqd"}> : () -> ()
    %cst_25 = arith.constant dense<0.000000e+00> : vector<2x16x8xf32>
    %71 = tpu.matmul %70, %54, %cst_25 {dimension_numbers = #tpu.dot_dimension_numbers<[2], [1], [1], [2], [0, 0, 0, 1, 1, 2], [0], [0]>} : vector<2x16x16xbf16>, vector<2x16x8xbf16>, vector<2x16x8xf32> -> vector<2x16x8xf32>
    "tpu.trace_stop"() : () -> ()
    %72 = vector.shape_cast %71 : vector<2x16x8xf32> to vector<32x8xf32>
    %73 = arith.truncf %72 : vector<32x8xf32> to vector<32x8xbf16>
    %c1 = arith.constant 1 : index
    %c0_26 = arith.constant 0 : index
    %c0_27 = arith.constant 0 : index
    %74 = vector.load %arg5[%c1, %c0_26, %c0_27] : memref<4x8x32xbf16, #tpu.memory_space<vmem>>, vector<1x8x32xbf16>
    %75 = vector.shape_cast %74 : vector<1x8x32xbf16> to vector<8x32xbf16>
    %cst_28 = arith.constant dense<0.000000e+00> : vector<32x32xf32>
    %76 = tpu.matmul %73, %75, %cst_28 {dimension_numbers = #tpu.dot_dimension_numbers<[1], [0], [0], [1], [0, 0, 1, 1], [], []>} : vector<32x8xbf16>, vector<8x32xbf16>, vector<32x32xf32> -> vector<32x32xf32>
    %77 = arith.addf %48, %76 : vector<32x32xf32>
    %78 = vector.extract_strided_slice %10 {offsets = [0, 16], sizes = [32, 8], strides = [1, 1]} : vector<32x96xbf16> to vector<32x8xbf16>
    %79 = vector.shape_cast %78 : vector<32x8xbf16> to vector<2x16x8xbf16>
    %80 = vector.extract_strided_slice %10 {offsets = [0, 48], sizes = [32, 8], strides = [1, 1]} : vector<32x96xbf16> to vector<32x8xbf16>
    %81 = vector.shape_cast %80 : vector<32x8xbf16> to vector<2x16x8xbf16>
    %82 = vector.extract_strided_slice %10 {offsets = [0, 80], sizes = [32, 8], strides = [1, 1]} : vector<32x96xbf16> to vector<32x8xbf16>
    %83 = vector.shape_cast %82 : vector<32x8xbf16> to vector<2x16x8xbf16>
    "tpu.trace_start"() <{level = 10 : i32, message = "bqd,bkd->bqk"}> : () -> ()
    %cst_29 = arith.constant dense<0.000000e+00> : vector<2x16x16xf32>
    %84 = tpu.matmul %79, %81, %cst_29 {dimension_numbers = #tpu.dot_dimension_numbers<[2], [2], [1], [1], [0, 0, 0, 1, 1, 1], [0], [0]>} : vector<2x16x8xbf16>, vector<2x16x8xbf16>, vector<2x16x16xf32> -> vector<2x16x16xf32>
    "tpu.trace_stop"() : () -> ()
    %cst_30 = arith.constant 0.353553385 : f32
    %85 = vector.broadcast %cst_30 : f32 to vector<2x16x16xf32>
    %86 = arith.mulf %84, %85 : vector<2x16x16xf32>
    %cst_31 = arith.constant -1.000000e+30 : f32
    %87 = vector.broadcast %cst_31 : f32 to vector<2x16x16xf32>
    %88 = arith.select %20, %87, %86 : vector<2x16x16xi1>, vector<2x16x16xf32>
    %cst_32 = arith.constant dense<0xFF800000> : vector<2x16xf32>
    %89 = vector.multi_reduction <maximumf>, %88, %cst_32 [2] : vector<2x16x16xf32> to vector<2x16xf32>
    %90 = vector.shape_cast %89 : vector<2x16xf32> to vector<2x16x1xf32>
    %91 = vector.broadcast %90 : vector<2x16x1xf32> to vector<2x16x16xf32>
    %92 = arith.subf %88, %91 : vector<2x16x16xf32>
    %93 = math.exp %92 : vector<2x16x16xf32>
    %cst_33 = arith.constant dense<0.000000e+00> : vector<2x16xf32>
    %94 = vector.multi_reduction <add>, %93, %cst_33 [2] : vector<2x16x16xf32> to vector<2x16xf32>
    %95 = vector.shape_cast %94 : vector<2x16xf32> to vector<2x16x1xf32>
    %96 = tpu.reciprocal %95 {approx = true} : vector<2x16x1xf32> -> vector<2x16x1xf32>
    %97 = vector.broadcast %96 : vector<2x16x1xf32> to vector<2x16x16xf32>
    %98 = arith.mulf %93, %97 : vector<2x16x16xf32>
    %99 = arith.truncf %98 : vector<2x16x16xf32> to vector<2x16x16xbf16>
    "tpu.trace_start"() <{level = 10 : i32, message = "bqk,bkd->bqd"}> : () -> ()
    %cst_34 = arith.constant dense<0.000000e+00> : vector<2x16x8xf32>
    %100 = tpu.matmul %99, %83, %cst_34 {dimension_numbers = #tpu.dot_dimension_numbers<[2], [1], [1], [2], [0, 0, 0, 1, 1, 2], [0], [0]>} : vector<2x16x16xbf16>, vector<2x16x8xbf16>, vector<2x16x8xf32> -> vector<2x16x8xf32>
    "tpu.trace_stop"() : () -> ()
    %101 = vector.shape_cast %100 : vector<2x16x8xf32> to vector<32x8xf32>
    %102 = arith.truncf %101 : vector<32x8xf32> to vector<32x8xbf16>
    %c2 = arith.constant 2 : index
    %c0_35 = arith.constant 0 : index
    %c0_36 = arith.constant 0 : index
    %103 = vector.load %arg5[%c2, %c0_35, %c0_36] : memref<4x8x32xbf16, #tpu.memory_space<vmem>>, vector<1x8x32xbf16>
    %104 = vector.shape_cast %103 : vector<1x8x32xbf16> to vector<8x32xbf16>
    %cst_37 = arith.constant dense<0.000000e+00> : vector<32x32xf32>
    %105 = tpu.matmul %102, %104, %cst_37 {dimension_numbers = #tpu.dot_dimension_numbers<[1], [0], [0], [1], [0, 0, 1, 1], [], []>} : vector<32x8xbf16>, vector<8x32xbf16>, vector<32x32xf32> -> vector<32x32xf32>
    %106 = arith.addf %77, %105 : vector<32x32xf32>
    %107 = vector.extract_strided_slice %10 {offsets = [0, 24], sizes = [32, 8], strides = [1, 1]} : vector<32x96xbf16> to vector<32x8xbf16>
    %108 = vector.shape_cast %107 : vector<32x8xbf16> to vector<2x16x8xbf16>
    %109 = vector.extract_strided_slice %10 {offsets = [0, 56], sizes = [32, 8], strides = [1, 1]} : vector<32x96xbf16> to vector<32x8xbf16>
    %110 = vector.shape_cast %109 : vector<32x8xbf16> to vector<2x16x8xbf16>
    %111 = vector.extract_strided_slice %10 {offsets = [0, 88], sizes = [32, 8], strides = [1, 1]} : vector<32x96xbf16> to vector<32x8xbf16>
    %112 = vector.shape_cast %111 : vector<32x8xbf16> to vector<2x16x8xbf16>
    "tpu.trace_start"() <{level = 10 : i32, message = "bqd,bkd->bqk"}> : () -> ()
    %cst_38 = arith.constant dense<0.000000e+00> : vector<2x16x16xf32>
    %113 = tpu.matmul %108, %110, %cst_38 {dimension_numbers = #tpu.dot_dimension_numbers<[2], [2], [1], [1], [0, 0, 0, 1, 1, 1], [0], [0]>} : vector<2x16x8xbf16>, vector<2x16x8xbf16>, vector<2x16x16xf32> -> vector<2x16x16xf32>
    "tpu.trace_stop"() : () -> ()
    %cst_39 = arith.constant 0.353553385 : f32
    %114 = vector.broadcast %cst_39 : f32 to vector<2x16x16xf32>
    %115 = arith.mulf %113, %114 : vector<2x16x16xf32>
    %cst_40 = arith.constant -1.000000e+30 : f32
    %116 = vector.broadcast %cst_40 : f32 to vector<2x16x16xf32>
    %117 = arith.select %20, %116, %115 : vector<2x16x16xi1>, vector<2x16x16xf32>
    %cst_41 = arith.constant dense<0xFF800000> : vector<2x16xf32>
    %118 = vector.multi_reduction <maximumf>, %117, %cst_41 [2] : vector<2x16x16xf32> to vector<2x16xf32>
    %119 = vector.shape_cast %118 : vector<2x16xf32> to vector<2x16x1xf32>
    %120 = vector.broadcast %119 : vector<2x16x1xf32> to vector<2x16x16xf32>
    %121 = arith.subf %117, %120 : vector<2x16x16xf32>
    %122 = math.exp %121 : vector<2x16x16xf32>
    %cst_42 = arith.constant dense<0.000000e+00> : vector<2x16xf32>
    %123 = vector.multi_reduction <add>, %122, %cst_42 [2] : vector<2x16x16xf32> to vector<2x16xf32>
    %124 = vector.shape_cast %123 : vector<2x16xf32> to vector<2x16x1xf32>
    %125 = tpu.reciprocal %124 {approx = true} : vector<2x16x1xf32> -> vector<2x16x1xf32>
    %126 = vector.broadcast %125 : vector<2x16x1xf32> to vector<2x16x16xf32>
    %127 = arith.mulf %122, %126 : vector<2x16x16xf32>
    %128 = arith.truncf %127 : vector<2x16x16xf32> to vector<2x16x16xbf16>
    "tpu.trace_start"() <{level = 10 : i32, message = "bqk,bkd->bqd"}> : () -> ()
    %cst_43 = arith.constant dense<0.000000e+00> : vector<2x16x8xf32>
    %129 = tpu.matmul %128, %112, %cst_43 {dimension_numbers = #tpu.dot_dimension_numbers<[2], [1], [1], [2], [0, 0, 0, 1, 1, 2], [0], [0]>} : vector<2x16x16xbf16>, vector<2x16x8xbf16>, vector<2x16x8xf32> -> vector<2x16x8xf32>
    "tpu.trace_stop"() : () -> ()
    %130 = vector.shape_cast %129 : vector<2x16x8xf32> to vector<32x8xf32>
    %131 = arith.truncf %130 : vector<32x8xf32> to vector<32x8xbf16>
    %c3 = arith.constant 3 : index
    %c0_44 = arith.constant 0 : index
    %c0_45 = arith.constant 0 : index
    %132 = vector.load %arg5[%c3, %c0_44, %c0_45] : memref<4x8x32xbf16, #tpu.memory_space<vmem>>, vector<1x8x32xbf16>
    %133 = vector.shape_cast %132 : vector<1x8x32xbf16> to vector<8x32xbf16>
    %cst_46 = arith.constant dense<0.000000e+00> : vector<32x32xf32>
    %134 = tpu.matmul %131, %133, %cst_46 {dimension_numbers = #tpu.dot_dimension_numbers<[1], [0], [0], [1], [0, 0, 1, 1], [], []>} : vector<32x8xbf16>, vector<8x32xbf16>, vector<32x32xf32> -> vector<32x32xf32>
    %135 = arith.addf %106, %134 : vector<32x32xf32>
    %c0_47 = arith.constant 0 : index
    %c0_48 = arith.constant 0 : index
    %136 = vector.load %arg6[%c0_47, %c0_48] : memref<1x32xf32, #tpu.memory_space<vmem>>, vector<1x32xf32>
    %137 = vector.shape_cast %136 : vector<1x32xf32> to vector<32xf32>
    %138 = vector.shape_cast %137 : vector<32xf32> to vector<1x32xf32>
    %139 = vector.broadcast %138 : vector<1x32xf32> to vector<32x32xf32>
    %140 = arith.addf %135, %139 : vector<32x32xf32>
    %141 = arith.addf %2, %140 : vector<32x32xf32>
    %cst_49 = arith.constant dense<0.000000e+00> : vector<32xf32>
    %142 = vector.multi_reduction <add>, %141, %cst_49 [1] : vector<32x32xf32> to vector<32xf32>
    %143 = vector.shape_cast %142 : vector<32xf32> to vector<32x1xf32>
    %cst_50 = arith.constant 3.200000e+01 : f32
    %144 = vector.broadcast %cst_50 : f32 to vector<32x1xf32>
    %145 = arith.divf %143, %144 : vector<32x1xf32>
    %146 = vector.broadcast %145 : vector<32x1xf32> to vector<32x32xf32>
    %147 = arith.subf %141, %146 : vector<32x32xf32>
    %148 = arith.mulf %147, %147 : vector<32x32xf32>
    %cst_51 = arith.constant dense<0.000000e+00> : vector<32xf32>
    %149 = vector.multi_reduction <add>, %148, %cst_51 [1] : vector<32x32xf32> to vector<32xf32>
    %150 = vector.shape_cast %149 : vector<32xf32> to vector<32x1xf32>
    %cst_52 = arith.constant 3.200000e+01 : f32
    %151 = vector.broadcast %cst_52 : f32 to vector<32x1xf32>
    %152 = arith.divf %150, %151 : vector<32x1xf32>
    %153 = vector.broadcast %145 : vector<32x1xf32> to vector<32x32xf32>
    %154 = arith.subf %141, %153 : vector<32x32xf32>
    %cst_53 = arith.constant 9.99999974E-6 : f32
    %155 = vector.broadcast %cst_53 : f32 to vector<32x1xf32>
    %156 = arith.addf %152, %155 : vector<32x1xf32>
    %157 = math.rsqrt %156 : vector<32x1xf32>
    %158 = vector.broadcast %157 : vector<32x1xf32> to vector<32x32xf32>
    %159 = arith.mulf %154, %158 : vector<32x32xf32>
    %c0_54 = arith.constant 0 : index
    %c0_55 = arith.constant 0 : index
    %160 = vector.load %arg7[%c0_54, %c0_55] : memref<1x32xf32, #tpu.memory_space<vmem>>, vector<1x32xf32>
    %161 = vector.shape_cast %160 : vector<1x32xf32> to vector<32xf32>
    %162 = vector.shape_cast %161 : vector<32xf32> to vector<1x32xf32>
    %163 = vector.broadcast %162 : vector<1x32xf32> to vector<32x32xf32>
    %164 = arith.mulf %159, %163 : vector<32x32xf32>
    %c0_56 = arith.constant 0 : index
    %c0_57 = arith.constant 0 : index
    %165 = vector.load %arg8[%c0_56, %c0_57] : memref<1x32xf32, #tpu.memory_space<vmem>>, vector<1x32xf32>
    %166 = vector.shape_cast %165 : vector<1x32xf32> to vector<32xf32>
    %167 = vector.shape_cast %166 : vector<32xf32> to vector<1x32xf32>
    %168 = vector.broadcast %167 : vector<1x32xf32> to vector<32x32xf32>
    %169 = arith.addf %164, %168 : vector<32x32xf32>
    %170 = arith.truncf %169 : vector<32x32xf32> to vector<32x32xbf16>
    %c0_58 = arith.constant 0 : index
    %c0_59 = arith.constant 0 : index
    %171 = vector.load %arg9[%c0_58, %c0_59] : memref<32x64xbf16, #tpu.memory_space<vmem>>, vector<32x64xbf16>
    %cst_60 = arith.constant dense<0.000000e+00> : vector<32x64xf32>
    %172 = tpu.matmul %170, %171, %cst_60 {dimension_numbers = #tpu.dot_dimension_numbers<[1], [0], [0], [1], [0, 0, 1, 1], [], []>} : vector<32x32xbf16>, vector<32x64xbf16>, vector<32x64xf32> -> vector<32x64xf32>
    %c0_61 = arith.constant 0 : index
    %c0_62 = arith.constant 0 : index
    %173 = vector.load %arg10[%c0_61, %c0_62] : memref<1x64xf32, #tpu.memory_space<vmem>>, vector<1x64xf32>
    %174 = vector.shape_cast %173 : vector<1x64xf32> to vector<64xf32>
    %175 = vector.shape_cast %174 : vector<64xf32> to vector<1x64xf32>
    %176 = vector.broadcast %175 : vector<1x64xf32> to vector<32x64xf32>
    %177 = arith.addf %172, %176 : vector<32x64xf32>
    %cst_63 = arith.constant 0.000000e+00 : f32
    %178 = vector.broadcast %cst_63 : f32 to vector<32x64xf32>
    %179 = arith.maximumf %177, %178 : vector<32x64xf32>
    %180 = arith.truncf %179 : vector<32x64xf32> to vector<32x64xbf16>
    %c0_64 = arith.constant 0 : index
    %c0_65 = arith.constant 0 : index
    %181 = vector.load %arg11[%c0_64, %c0_65] : memref<64x32xbf16, #tpu.memory_space<vmem>>, vector<64x32xbf16>
    %cst_66 = arith.constant dense<0.000000e+00> : vector<32x32xf32>
    %182 = tpu.matmul %180, %181, %cst_66 {dimension_numbers = #tpu.dot_dimension_numbers<[1], [0], [0], [1], [0, 0, 1, 1], [], []>} : vector<32x64xbf16>, vector<64x32xbf16>, vector<32x32xf32> -> vector<32x32xf32>
    %c0_67 = arith.constant 0 : index
    %c0_68 = arith.constant 0 : index
    %183 = vector.load %arg12[%c0_67, %c0_68] : memref<1x32xf32, #tpu.memory_space<vmem>>, vector<1x32xf32>
    %184 = vector.shape_cast %183 : vector<1x32xf32> to vector<32xf32>
    %185 = vector.shape_cast %184 : vector<32xf32> to vector<1x32xf32>
    %186 = vector.broadcast %185 : vector<1x32xf32> to vector<32x32xf32>
    %187 = arith.addf %182, %186 : vector<32x32xf32>
    %188 = arith.addf %141, %187 : vector<32x32xf32>
    %189 = vector.shape_cast %188 : vector<32x32xf32> to vector<2x16x32xf32>
    %190 = arith.truncf %189 : vector<2x16x32xf32> to vector<2x16x32xbf16>
    %c0_69 = arith.constant 0 : index
    %c0_70 = arith.constant 0 : index
    %c0_71 = arith.constant 0 : index
    %191 = vector.load %arg13[%c0_69, %c0_70, %c0_71] : memref<2x16x32xbf16, #tpu.memory_space<vmem>>, vector<2x16x32xbf16>
    tpu.vector_store %arg13[%c0_69, %c0_70, %c0_71], %190 {strides = array<i32>} : memref<2x16x32xbf16, #tpu.memory_space<vmem>>, vector<2x16x32xbf16>,
    return
  }
  func.func @transform_0(%arg0: i32) -> (i32, i32, i32) {
    %c0_i32 = arith.constant 0 : i32
    %c0_i32_0 = arith.constant 0 : i32
    %c0_i32_1 = arith.constant 0 : i32
    return %arg0, %c0_i32, %c0_i32_0 : i32, i32, i32
  }
  func.func @transform_1(%arg0: i32) -> (i32, i32, i32) {
    %c0_i32 = arith.constant 0 : i32
    %c0_i32_0 = arith.constant 0 : i32
    %c0_i32_1 = arith.constant 0 : i32
    return %arg0, %c0_i32, %c0_i32_0 : i32, i32, i32
  }
  func.func @transform_2(%arg0: i32) -> (i32, i32) {
    %c0_i32 = arith.constant 0 : i32
    %c0_i32_0 = arith.constant 0 : i32
    %c0_i32_1 = arith.constant 0 : i32
    return %c0_i32, %c0_i32_0 : i32, i32
  }
  func.func @transform_3(%arg0: i32) -> (i32, i32) {
    %c0_i32 = arith.constant 0 : i32
    %c0_i32_0 = arith.constant 0 : i32
    %c0_i32_1 = arith.constant 0 : i32
    return %c0_i32, %c0_i32_0 : i32, i32
  }
  func.func @transform_4(%arg0: i32) -> (i32, i32, i32) {
    %c0_i32 = arith.constant 0 : i32
    %c0_i32_0 = arith.constant 0 : i32
    %c0_i32_1 = arith.constant 0 : i32
    %c0_i32_2 = arith.constant 0 : i32
    return %c0_i32, %c0_i32_0, %c0_i32_1 : i32, i32, i32
  }
  func.func @transform_5(%arg0: i32) -> (i32, i32) {
    %c0_i32 = arith.constant 0 : i32
    %c0_i32_0 = arith.constant 0 : i32
    %c0_i32_1 = arith.constant 0 : i32
    return %c0_i32, %c0_i32_0 : i32, i32
  }
  func.func @transform_6(%arg0: i32) -> (i32, i32) {
    %c0_i32 = arith.constant 0 : i32
    %c0_i32_0 = arith.constant 0 : i32
    %c0_i32_1 = arith.constant 0 : i32
    return %c0_i32, %c0_i32_0 : i32, i32
  }
  func.func @transform_7(%arg0: i32) -> (i32, i32) {
    %c0_i32 = arith.constant 0 : i32
    %c0_i32_0 = arith.constant 0 : i32
    %c0_i32_1 = arith.constant 0 : i32
    return %c0_i32, %c0_i32_0 : i32, i32
  }
  func.func @transform_8(%arg0: i32) -> (i32, i32) {
    %c0_i32 = arith.constant 0 : i32
    %c0_i32_0 = arith.constant 0 : i32
    %c0_i32_1 = arith.constant 0 : i32
    return %c0_i32, %c0_i32_0 : i32, i32
  }
  func.func @transform_9(%arg0: i32) -> (i32, i32) {
    %c0_i32 = arith.constant 0 : i32
    %c0_i32_0 = arith.constant 0 : i32
    %c0_i32_1 = arith.constant 0 : i32
    return %c0_i32, %c0_i32_0 : i32, i32
  }
  func.func @transform_10(%arg0: i32) -> (i32, i32) {
    %c0_i32 = arith.constant 0 : i32
    %c0_i32_0 = arith.constant 0 : i32
    %c0_i32_1 = arith.constant 0 : i32
    return %c0_i32, %c0_i32_0 : i32, i32
  }
  func.func @transform_11(%arg0: i32) -> (i32, i32) {
    %c0_i32 = arith.constant 0 : i32
    %c0_i32_0 = arith.constant 0 : i32
    %c0_i32_1 = arith.constant 0 : i32
    return %c0_i32, %c0_i32_0 : i32, i32
  }
  func.func @transform_12(%arg0: i32) -> (i32, i32, i32) {
    %c0_i32 = arith.constant 0 : i32
    %c0_i32_0 = arith.constant 0 : i32
    %c0_i32_1 = arith.constant 0 : i32
    return %arg0, %c0_i32, %c0_i32_0 : i32, i32, i32
  }
}

module attributes {stable_mosaic.version = 11 : i64} {
  func.func @_decoder_block_kernel(%arg0: i32, %arg1: memref<2x16x32xbf16, #tpu.memory_space<vmem>>, %arg2: memref<2x1x16xf32, #tpu.memory_space<vmem>>, %arg3: memref<32x96xbf16, #tpu.memory_space<vmem>>, %arg4: memref<1x96xf32, #tpu.memory_space<vmem>>, %arg5: memref<4x8x32xbf16, #tpu.memory_space<vmem>>, %arg6: memref<1x32xf32, #tpu.memory_space<vmem>>, %arg7: memref<1x32xf32, #tpu.memory_space<vmem>>, %arg8: memref<1x32xf32, #tpu.memory_space<vmem>>, %arg9: memref<32x64xbf16, #tpu.memory_space<vmem>>, %arg10: memref<1x64xf32, #tpu.memory_space<vmem>>, %arg11: memref<64x32xbf16, #tpu.memory_space<vmem>>, %arg12: memref<1x32xf32, #tpu.memory_space<vmem>>, %arg13: memref<2x16x32xbf16, #tpu.memory_space<vmem>>) attributes {dimension_semantics = [#tpu.dimension_semantics<parallel>], iteration_bounds = array<i64: 1>, scalar_prefetch = 0 : i64, scratch_operands = 0 : i64, tpu.core_type = #tpu.core_type<tc>, window_params = [{transform_indices = @transform_0, window_bounds = array<i64: 2, 16, 32>}, {transform_indices = @transform_1, window_bounds = array<i64: 2, 1, 16>}, {pipeline_mode = #tpu.pipeline_mode<synchronous>, transform_indices = @transform_2, window_bounds = array<i64: 32, 96>}, {pipeline_mode = #tpu.pipeline_mode<synchronous>, transform_indices = @transform_3, window_bounds = array<i64: 1, 96>}, {pipeline_mode = #tpu.pipeline_mode<synchronous>, transform_indices = @transform_4, window_bounds = array<i64: 4, 8, 32>}, {pipeline_mode = #tpu.pipeline_mode<synchronous>, transform_indices = @transform_5, window_bounds = array<i64: 1, 32>}, {pipeline_mode = #tpu.pipeline_mode<synchronous>, transform_indices = @transform_6, window_bounds = array<i64: 1, 32>}, {pipeline_mode = #tpu.pipeline_mode<synchronous>, transform_indices = @transform_7, window_bounds = array<i64: 1, 32>}, {pipeline_mode = #tpu.pipeline_mode<synchronous>, transform_indices = @transform_8, window_bounds = array<i64: 32, 64>}, {pipeline_mode = #tpu.pipeline_mode<synchronous>, transform_indices = @transform_9, window_bounds = array<i64: 1, 64>}, {pipeline_mode = #tpu.pipeline_mode<synchronous>, transform_indices = @transform_10, window_bounds = array<i64: 64, 32>}, {pipeline_mode = #tpu.pipeline_mode<synchronous>, transform_indices = @transform_11, window_bounds = array<i64: 1, 32>}, {transform_indices = @transform_12, window_bounds = array<i64: 2, 16, 32>}]} {
    %c0 = arith.constant 0 : index
    %c0_0 = arith.constant 0 : index
    %c0_1 = arith.constant 0 : index
    %0 = vector.load %arg1[%c0, %c0_0, %c0_1] : memref<2x16x32xbf16, #tpu.memory_space<vmem>>, vector<2x16x32xbf16>
    %1 = vector.shape_cast %0 : vector<2x16x32xbf16> to vector<32x32xbf16>
    %2 = arith.extf %1 : vector<32x32xbf16> to vector<32x32xf32>
    %c0_2 = arith.constant 0 : index
    %c0_3 = arith.constant 0 : index
    %3 = vector.load %arg3[%c0_2, %c0_3] : memref<32x96xbf16, #tpu.memory_space<vmem>>, vector<32x96xbf16>
    %cst = arith.constant dense<0.000000e+00> : vector<32x96xf32>
    %4 = tpu.matmul %1, %3, %cst {dimension_numbers = #tpu.dot_dimension_numbers<[1], [0], [0], [1], [0, 0, 1, 1], [], []>} : vector<32x32xbf16>, vector<32x96xbf16>, vector<32x96xf32> -> vector<32x96xf32>
    %c0_4 = arith.constant 0 : index
    %c0_5 = arith.constant 0 : index
    %5 = vector.load %arg4[%c0_4, %c0_5] : memref<1x96xf32, #tpu.memory_space<vmem>>, vector<1x96xf32>
    %6 = vector.shape_cast %5 : vector<1x96xf32> to vector<96xf32>
    %7 = vector.shape_cast %6 : vector<96xf32> to vector<1x96xf32>
    %8 = vector.broadcast %7 : vector<1x96xf32> to vector<32x96xf32>
    %9 = arith.addf %4, %8 : vector<32x96xf32>
    %10 = arith.truncf %9 : vector<32x96xf32> to vector<32x96xbf16>
    %11 = tpu.iota {dimensions = array<i32: 0>} : vector<16x16xi32>
    %12 = tpu.iota {dimensions = array<i32: 1>} : vector<16x16xi32>
    %13 = arith.cmpi sgt, %12, %11 : vector<16x16xi32>
    %14 = vector.shape_cast %13 : vector<16x16xi1> to vector<1x16x16xi1>
    %c0_6 = arith.constant 0 : index
    %c0_7 = arith.constant 0 : index
    %c0_8 = arith.constant 0 : index
    %15 = vector.load %arg2[%c0_6, %c0_7, %c0_8] : memref<2x1x16xf32, #tpu.memory_space<vmem>>, vector<2x1x16xf32>
    %cst_9 = arith.constant 5.000000e-01 : f32
    %16 = vector.broadcast %cst_9 : f32 to vector<2x1x16xf32>
    %17 = arith.cmpf ogt, %15, %16 : vector<2x1x16xf32>
    %18 = vector.broadcast %14 : vector<1x16x16xi1> to vector<2x16x16xi1>
    %19 = vector.broadcast %17 : vector<2x1x16xi1> to vector<2x16x16xi1>
    %20 = arith.ori %18, %19 : vector<2x16x16xi1>
    %21 = vector.extract_strided_slice %10 {offsets = [0, 0], sizes = [32, 8], strides = [1, 1]} : vector<32x96xbf16> to vector<32x8xbf16>
    %22 = vector.shape_cast %21 : vector<32x8xbf16> to vector<2x16x8xbf16>
    %23 = vector.extract_strided_slice %10 {offsets = [0, 32], sizes = [32, 8], strides = [1, 1]} : vector<32x96xbf16> to vector<32x8xbf16>
    %24 = vector.shape_cast %23 : vector<32x8xbf16> to vector<2x16x8xbf16>
    %25 = vector.extract_strided_slice %10 {offsets = [0, 64], sizes = [32, 8], strides = [1, 1]} : vector<32x96xbf16> to vector<32x8xbf16>
    %26 = vector.shape_cast %25 : vector<32x8xbf16> to vector<2x16x8xbf16>
    "tpu.trace_start"() <{level = 10 : i32, message = "bqd,bkd->bqk"}> : () -> ()
    %cst_10 = arith.constant dense<0.000000e+00> : vector<2x16x16xf32>
    %27 = tpu.matmul %22, %24, %cst_10 {dimension_numbers = #tpu.dot_dimension_numbers<[2], [2], [1], [1], [0, 0, 0, 1, 1, 1], [0], [0]>} : vector<2x16x8xbf16>, vector<2x16x8xbf16>, vector<2x16x16xf32> -> vector<2x16x16xf32>
    "tpu.trace_stop"() : () -> ()
    %cst_11 = arith.constant 0.353553385 : f32
    %28 = vector.broadcast %cst_11 : f32 to vector<2x16x16xf32>
    %29 = arith.mulf %27, %28 : vector<2x16x16xf32>
    %cst_12 = arith.constant -1.000000e+30 : f32
    %30 = vector.broadcast %cst_12 : f32 to vector<2x16x16xf32>
    %31 = arith.select %20, %30, %29 : vector<2x16x16xi1>, vector<2x16x16xf32>
    %cst_13 = arith.constant dense<0xFF800000> : vector<2x16xf32>
    %32 = vector.multi_reduction <maximumf>, %31, %cst_13 [2] : vector<2x16x16xf32> to vector<2x16xf32>
    %33 = vector.shape_cast %32 : vector<2x16xf32> to vector<2x16x1xf32>
    %34 = vector.broadcast %33 : vector<2x16x1xf32> to vector<2x16x16xf32>
    %35 = arith.subf %31, %34 : vector<2x16x16xf32>
    %36 = math.exp %35 : vector<2x16x16xf32>
    %cst_14 = arith.constant dense<0.000000e+00> : vector<2x16xf32>
    %37 = vector.multi_reduction <add>, %36, %cst_14 [2] : vector<2x16x16xf32> to vector<2x16xf32>
    %38 = vector.shape_cast %37 : vector<2x16xf32> to vector<2x16x1xf32>
    %39 = tpu.reciprocal %38 {approx = true} : vector<2x16x1xf32> -> vector<2x16x1xf32>
    %40 = vector.broadcast %39 : vector<2x16x1xf32> to vector<2x16x16xf32>
    %41 = arith.mulf %36, %40 : vector<2x16x16xf32>
    %42 = arith.truncf %41 : vector<2x16x16xf32> to vector<2x16x16xbf16>
    "tpu.trace_start"() <{level = 10 : i32, message = "bqk,bkd->bqd"}> : () -> ()
    %cst_15 = arith.constant dense<0.000000e+00> : vector<2x16x8xf32>
    %43 = tpu.matmul %42, %26, %cst_15 {dimension_numbers = #tpu.dot_dimension_numbers<[2], [1], [1], [2], [0, 0, 0, 1, 1, 2], [0], [0]>} : vector<2x16x16xbf16>, vector<2x16x8xbf16>, vector<2x16x8xf32> -> vector<2x16x8xf32>
    "tpu.trace_stop"() : () -> ()
    %44 = vector.shape_cast %43 : vector<2x16x8xf32> to vector<32x8xf32>
    %45 = arith.truncf %44 : vector<32x8xf32> to vector<32x8xbf16>
    %c0_16 = arith.constant 0 : index
    %c0_17 = arith.constant 0 : index
    %c0_18 = arith.constant 0 : index
    %46 = vector.load %arg5[%c0_16, %c0_17, %c0_18] : memref<4x8x32xbf16, #tpu.memory_space<vmem>>, vector<1x8x32xbf16>
    %47 = vector.shape_cast %46 : vector<1x8x32xbf16> to vector<8x32xbf16>
    %cst_19 = arith.constant dense<0.000000e+00> : vector<32x32xf32>
    %48 = tpu.matmul %45, %47, %cst_19 {dimension_numbers = #tpu.dot_dimension_numbers<[1], [0], [0], [1], [0, 0, 1, 1], [], []>} : vector<32x8xbf16>, vector<8x32xbf16>, vector<32x32xf32> -> vector<32x32xf32>
    %49 = vector.extract_strided_slice %10 {offsets = [0, 8], sizes = [32, 8], strides = [1, 1]} : vector<32x96xbf16> to vector<32x8xbf16>
    %50 = vector.shape_cast %49 : vector<32x8xbf16> to vector<2x16x8xbf16>
    %51 = vector.extract_strided_slice %10 {offsets = [0, 40], sizes = [32, 8], strides = [1, 1]} : vector<32x96xbf16> to vector<32x8xbf16>
    %52 = vector.shape_cast %51 : vector<32x8xbf16> to vector<2x16x8xbf16>
    %53 = vector.extract_strided_slice %10 {offsets = [0, 72], sizes = [32, 8], strides = [1, 1]} : vector<32x96xbf16> to vector<32x8xbf16>
    %54 = vector.shape_cast %53 : vector<32x8xbf16> to vector<2x16x8xbf16>
    "tpu.trace_start"() <{level = 10 : i32, message = "bqd,bkd->bqk"}> : () -> ()
    %cst_20 = arith.constant dense<0.000000e+00> : vector<2x16x16xf32>
    %55 = tpu.matmul %50, %52, %cst_20 {dimension_numbers = #tpu.dot_dimension_numbers<[2], [2], [1], [1], [0, 0, 0, 1, 1, 1], [0], [0]>} : vector<2x16x8xbf16>, vector<2x16x8xbf16>, vector<2x16x16xf32> -> vector<2x16x16xf32>
    "tpu.trace_stop"() : () -> ()
    %cst_21 = arith.constant 0.353553385 : f32
    %56 = vector.broadcast %cst_21 : f32 to vector<2x16x16xf32>
    %57 = arith.mulf %55, %56 : vector<2x16x16xf32>
    %cst_22 = arith.constant -1.000000e+30 : f32
    %58 = vector.broadcast %cst_22 : f32 to vector<2x16x16xf32>
    %59 = arith.select %20, %58, %57 : vector<2x16x16xi1>, vector<2x16x16xf32>
    %cst_23 = arith.constant dense<0xFF800000> : vector<2x16xf32>
    %60 = vector.multi_reduction <maximumf>, %59, %cst_23 [2] : vector<2x16x16xf32> to vector<2x16xf32>
    %61 = vector.shape_cast %60 : vector<2x16xf32> to vector<2x16x1xf32>
    %62 = vector.broadcast %61 : vector<2x16x1xf32> to vector<2x16x16xf32>
    %63 = arith.subf %59, %62 : vector<2x16x16xf32>
    %64 = math.exp %63 : vector<2x16x16xf32>
    %cst_24 = arith.constant dense<0.000000e+00> : vector<2x16xf32>
    %65 = vector.multi_reduction <add>, %64, %cst_24 [2] : vector<2x16x16xf32> to vector<2x16xf32>
    %66 = vector.shape_cast %65 : vector<2x16xf32> to vector<2x16x1xf32>
    %67 = tpu.reciprocal %66 {approx = true} : vector<2x16x1xf32> -> vector<2x16x1xf32>
    %68 = vector.broadcast %67 : vector<2x16x1xf32> to vector<2x16x16xf32>
    %69 = arith.mulf %64, %68 : vector<2x16x16xf32>
    %70 = arith.truncf %69 : vector<2x16x16xf32> to vector<2x16x16xbf16>
    "tpu.trace_start"() <{level = 10 : i32, message = "bqk,bkd->bqd"}> : () -> ()
    %cst_25 = arith.constant dense<0.000000e+00> : vector<2x16x8xf32>
    %71 = tpu.matmul %70, %54, %cst_25 {dimension_numbers = #tpu.dot_dimension_numbers<[2], [1], [1], [2], [0, 0, 0, 1, 1, 2], [0], [0]>} : vector<2x16x16xbf16>, vector<2x16x8xbf16>, vector<2x16x8xf32> -> vector<2x16x8xf32>
    "tpu.trace_stop"() : () -> ()
    %72 = vector.shape_cast %71 : vector<2x16x8xf32> to vector<32x8xf32>
    %73 = arith.truncf %72 : vector<32x8xf32> to vector<32x8xbf16>
    %c1 = arith.constant 1 : index
    %c0_26 = arith.constant 0 : index
    %c0_27 = arith.constant 0 : index
    %74 = vector.load %arg5[%c1, %c0_26, %c0_27] : memref<4x8x32xbf16, #tpu.memory_space<vmem>>, vector<1x8x32xbf16>
    %75 = vector.shape_cast %74 : vector<1x8x32xbf16> to vector<8x32xbf16>
    %cst_28 = arith.constant dense<0.000000e+00> : vector<32x32xf32>
    %76 = tpu.matmul %73, %75, %cst_28 {dimension_numbers = #tpu.dot_dimension_numbers<[1], [0], [0], [1], [0, 0, 1, 1], [], []>} : vector<32x8xbf16>, vector<8x32xbf16>, vector<32x32xf32> -> vector<32x32xf32>
    %77 = arith.addf %48, %76 : vector<32x32xf32>
    %78 = vector.extract_strided_slice %10 {offsets = [0, 16], sizes = [32, 8], strides = [1, 1]} : vector<32x96xbf16> to vector<32x8xbf16>
    %79 = vector.shape_cast %78 : vector<32x8xbf16> to vector<2x16x8xbf16>
    %80 = vector.extract_strided_slice %10 {offsets = [0, 48], sizes = [32, 8], strides = [1, 1]} : vector<32x96xbf16> to vector<32x8xbf16>
    %81 = vector.shape_cast %80 : vector<32x8xbf16> to vector<2x16x8xbf16>
    %82 = vector.extract_strided_slice %10 {offsets = [0, 80], sizes = [32, 8], strides = [1, 1]} : vector<32x96xbf16> to vector<32x8xbf16>
    %83 = vector.shape_cast %82 : vector<32x8xbf16> to vector<2x16x8xbf16>
    "tpu.trace_start"() <{level = 10 : i32, message = "bqd,bkd->bqk"}> : () -> ()
    %cst_29 = arith.constant dense<0.000000e+00> : vector<2x16x16xf32>
    %84 = tpu.matmul %79, %81, %cst_29 {dimension_numbers = #tpu.dot_dimension_numbers<[2], [2], [1], [1], [0, 0, 0, 1, 1, 1], [0], [0]>} : vector<2x16x8xbf16>, vector<2x16x8xbf16>, vector<2x16x16xf32> -> vector<2x16x16xf32>
    "tpu.trace_stop"() : () -> ()
    %cst_30 = arith.constant 0.353553385 : f32
    %85 = vector.broadcast %cst_30 : f32 to vector<2x16x16xf32>
    %86 = arith.mulf %84, %85 : vector<2x16x16xf32>
    %cst_31 = arith.constant -1.000000e+30 : f32
    %87 = vector.broadcast %cst_31 : f32 to vector<2x16x16xf32>
    %88 = arith.select %20, %87, %86 : vector<2x16x16xi1>, vector<2x16x16xf32>
    %cst_32 = arith.constant dense<0xFF800000> : vector<2x16xf32>
    %89 = vector.multi_reduction <maximumf>, %88, %cst_32 [2] : vector<2x16x16xf32> to vector<2x16xf32>
    %90 = vector.shape_cast %89 : vector<2x16xf32> to vector<2x16x1xf32>
    %91 = vector.broadcast %90 : vector<2x16x1xf32> to vector<2x16x16xf32>
    %92 = arith.subf %88, %91 : vector<2x16x16xf32>
    %93 = math.exp %92 : vector<2x16x16xf32>
    %cst_33 = arith.constant dense<0.000000e+00> : vector<2x16xf32>
    %94 = vector.multi_reduction <add>, %93, %cst_33 [2] : vector<2x16x16xf32> to vector<2x16xf32>
    %95 = vector.shape_cast %94 : vector<2x16xf32> to vector<2x16x1xf32>
    %96 = tpu.reciprocal %95 {approx = true} : vector<2x16x1xf32> -> vector<2x16x1xf32>
    %97 = vector.broadcast %96 : vector<2x16x1xf32> to vector<2x16x16xf32>
    %98 = arith.mulf %93, %97 : vector<2x16x16xf32>
    %99 = arith.truncf %98 : vector<2x16x16xf32> to vector<2x16x16xbf16>
    "tpu.trace_start"() <{level = 10 : i32, message = "bqk,bkd->bqd"}> : () -> ()
    %cst_34 = arith.constant dense<0.000000e+00> : vector<2x16x8xf32>
    %100 = tpu.matmul %99, %83, %cst_34 {dimension_numbers = #tpu.dot_dimension_numbers<[2], [1], [1], [2], [0, 0, 0, 1, 1, 2], [0], [0]>} : vector<2x16x16xbf16>, vector<2x16x8xbf16>, vector<2x16x8xf32> -> vector<2x16x8xf32>
    "tpu.trace_stop"() : () -> ()
    %101 = vector.shape_cast %100 : vector<2x16x8xf32> to vector<32x8xf32>
    %102 = arith.truncf %101 : vector<32x8xf32> to vector<32x8xbf16>
    %c2 = arith.constant 2 : index
    %c0_35 = arith.constant 0 : index
    %c0_36 = arith.constant 0 : index
    %103 = vector.load %arg5[%c2, %c0_35, %c0_36] : memref<4x8x32xbf16, #tpu.memory_space<vmem>>, vector<1x8x32xbf16>
    %104 = vector.shape_cast %103 : vector<1x8x32xbf16> to vector<8x32xbf16>
    %cst_37 = arith.constant dense<0.000000e+00> : vector<32x32xf32>
    %105 = tpu.matmul %102, %104, %cst_37 {dimension_numbers = #tpu.dot_dimension_numbers<[1], [0], [0], [1], [0, 0, 1, 1], [], []>} : vector<32x8xbf16>, vector<8x32xbf16>, vector<32x32xf32> -> vector<32x32xf32>
    %106 = arith.addf %77, %105 : vector<32x32xf32>
    %107 = vector.extract_strided_slice %10 {offsets = [0, 24], sizes = [32, 8], strides = [1, 1]} : vector<32x96xbf16> to vector<32x8xbf16>
    %108 = vector.shape_cast %107 : vector<32x8xbf16> to vector<2x16x8xbf16>
    %109 = vector.extract_strided_slice %10 {offsets = [0, 56], sizes = [32, 8], strides = [1, 1]} : vector<32x96xbf16> to vector<32x8xbf16>
    %110 = vector.shape_cast %109 : vector<32x8xbf16> to vector<2x16x8xbf16>
    %111 = vector.extract_strided_slice %10 {offsets = [0, 88], sizes = [32, 8], strides = [1, 1]} : vector<32x96xbf16> to vector<32x8xbf16>
    %112 = vector.shape_cast %111 : vector<32x8xbf16> to vector<2x16x8xbf16>
    "tpu.trace_start"() <{level = 10 : i32, message = "bqd,bkd->bqk"}> : () -> ()
    %cst_38 = arith.constant dense<0.000000e+00> : vector<2x16x16xf32>
    %113 = tpu.matmul %108, %110, %cst_38 {dimension_numbers = #tpu.dot_dimension_numbers<[2], [2], [1], [1], [0, 0, 0, 1, 1, 1], [0], [0]>} : vector<2x16x8xbf16>, vector<2x16x8xbf16>, vector<2x16x16xf32> -> vector<2x16x16xf32>
    "tpu.trace_stop"() : () -> ()
    %cst_39 = arith.constant 0.353553385 : f32
    %114 = vector.broadcast %cst_39 : f32 to vector<2x16x16xf32>
    %115 = arith.mulf %113, %114 : vector<2x16x16xf32>
    %cst_40 = arith.constant -1.000000e+30 : f32
    %116 = vector.broadcast %cst_40 : f32 to vector<2x16x16xf32>
    %117 = arith.select %20, %116, %115 : vector<2x16x16xi1>, vector<2x16x16xf32>
    %cst_41 = arith.constant dense<0xFF800000> : vector<2x16xf32>
    %118 = vector.multi_reduction <maximumf>, %117, %cst_41 [2] : vector<2x16x16xf32> to vector<2x16xf32>
    %119 = vector.shape_cast %118 : vector<2x16xf32> to vector<2x16x1xf32>
    %120 = vector.broadcast %119 : vector<2x16x1xf32> to vector<2x16x16xf32>
    %121 = arith.subf %117, %120 : vector<2x16x16xf32>
    %122 = math.exp %121 : vector<2x16x16xf32>
    %cst_42 = arith.constant dense<0.000000e+00> : vector<2x16xf32>
    %123 = vector.multi_reduction <add>, %122, %cst_42 [2] : vector<2x16x16xf32> to vector<2x16xf32>
    %124 = vector.shape_cast %123 : vector<2x16xf32> to vector<2x16x1xf32>
    %125 = tpu.reciprocal %124 {approx = true} : vector<2x16x1xf32> -> vector<2x16x1xf32>
    %126 = vector.broadcast %125 : vector<2x16x1xf32> to vector<2x16x16xf32>
    %127 = arith.mulf %122, %126 : vector<2x16x16xf32>
    %128 = arith.truncf %127 : vector<2x16x16xf32> to vector<2x16x16xbf16>
    "tpu.trace_start"() <{level = 10 : i32, message = "bqk,bkd->bqd"}> : () -> ()
    %cst_43 = arith.constant dense<0.000000e+00> : vector<2x16x8xf32>
    %129 = tpu.matmul %128, %112, %cst_43 {dimension_numbers = #tpu.dot_dimension_numbers<[2], [1], [1], [2], [0, 0, 0, 1, 1, 2], [0], [0]>} : vector<2x16x16xbf16>, vector<2x16x8xbf16>, vector<2x16x8xf32> -> vector<2x16x8xf32>
    "tpu.trace_stop"() : () -> ()
    %130 = vector.shape_cast %129 : vector<2x16x8xf32> to vector<32x8xf32>
    %131 = arith.truncf %130 : vector<32x8xf32> to vector<32x8xbf16>
    %c3 = arith.constant 3 : index
    %c0_44 = arith.constant 0 : index
    %c0_45 = arith.constant 0 : index
    %132 = vector.load %arg5[%c3, %c0_44, %c0_45] : memref<4x8x32xbf16, #tpu.memory_space<vmem>>, vector<1x8x32xbf16>
    %133 = vector.shape_cast %132 : vector<1x8x32xbf16> to vector<8x32xbf16>
    %cst_46 = arith.constant dense<0.000000e+00> : vector<32x32xf32>
    %134 = tpu.matmul %131, %133, %cst_46 {dimension_numbers = #tpu.dot_dimension_numbers<[1], [0], [0], [1], [0, 0, 1, 1], [], []>} : vector<32x8xbf16>, vector<8x32xbf16>, vector<32x32xf32> -> vector<32x32xf32>
    %135 = arith.addf %106, %134 : vector<32x32xf32>
    %c0_47 = arith.constant 0 : index
    %c0_48 = arith.constant 0 : index
    %136 = vector.load %arg6[%c0_47, %c0_48] : memref<1x32xf32, #tpu.memory_space<vmem>>, vector<1x32xf32>
    %137 = vector.shape_cast %136 : vector<1x32xf32> to vector<32xf32>
    %138 = vector.shape_cast %137 : vector<32xf32> to vector<1x32xf32>
    %139 = vector.broadcast %138 : vector<1x32xf32> to vector<32x32xf32>
    %140 = arith.addf %135, %139 : vector<32x32xf32>
    %141 = arith.addf %2, %140 : vector<32x32xf32>
    %cst_49 = arith.constant dense<0.000000e+00> : vector<32xf32>
    %142 = vector.multi_reduction <add>, %141, %cst_49 [1] : vector<32x32xf32> to vector<32xf32>
    %143 = vector.shape_cast %142 : vector<32xf32> to vector<32x1xf32>
    %cst_50 = arith.constant 3.200000e+01 : f32
    %144 = vector.broadcast %cst_50 : f32 to vector<32x1xf32>
    %145 = arith.divf %143, %144 : vector<32x1xf32>
    %146 = vector.broadcast %145 : vector<32x1xf32> to vector<32x32xf32>
    %147 = arith.subf %141, %146 : vector<32x32xf32>
    %148 = arith.mulf %147, %147 : vector<32x32xf32>
    %cst_51 = arith.constant dense<0.000000e+00> : vector<32xf32>
    %149 = vector.multi_reduction <add>, %148, %cst_51 [1] : vector<32x32xf32> to vector<32xf32>
    %150 = vector.shape_cast %149 : vector<32xf32> to vector<32x1xf32>
    %cst_52 = arith.constant 3.200000e+01 : f32
    %151 = vector.broadcast %cst_52 : f32 to vector<32x1xf32>
    %152 = arith.divf %150, %151 : vector<32x1xf32>
    %153 = vector.broadcast %145 : vector<32x1xf32> to vector<32x32xf32>
    %154 = arith.subf %141, %153 : vector<32x32xf32>
    %cst_53 = arith.constant 9.99999974E-6 : f32
    %155 = vector.broadcast %cst_53 : f32 to vector<32x1xf32>
    %156 = arith.addf %152, %155 : vector<32x1xf32>
    %157 = math.rsqrt %156 : vector<32x1xf32>
    %158 = vector.broadcast %157 : vector<32x1xf32> to vector<32x32xf32>
    %159 = arith.mulf %154, %158 : vector<32x32xf32>
    %c0_54 = arith.constant 0 : index
    %c0_55 = arith.constant 0 : index
    %160 = vector.load %arg7[%c0_54, %c0_55] : memref<1x32xf32, #tpu.memory_space<vmem>>, vector<1x32xf32>
    %161 = vector.shape_cast %160 : vector<1x32xf32> to vector<32xf32>
    %162 = vector.shape_cast %161 : vector<32xf32> to vector<1x32xf32>
    %163 = vector.broadcast %162 : vector<1x32xf32> to vector<32x32xf32>
    %164 = arith.mulf %159, %163 : vector<32x32xf32>
    %c0_56 = arith.constant 0 : index
    %c0_57 = arith.constant 0 : index
    %165 = vector.load %arg8[%c0_56, %c0_57] : memref<1x32xf32, #tpu.memory_space<vmem>>, vector<1x32xf32>
    %166 = vector.shape_cast %165 : vector<1x32xf32> to vector<32xf32>
    %167 = vector.shape_cast %166 : vector<32xf32> to vector<1x32xf32>
    %168 = vector.broadcast %167 : vector<1x32xf32> to vector<32x32xf32>
    %169 = arith.addf %164, %168 : vector<32x32xf32>
    %170 = arith.truncf %169 : vector<32x32xf32> to vector<32x32xbf16>
    %c0_58 = arith.constant 0 : index
    %c0_59 = arith.constant 0 : index
    %171 = vector.load %arg9[%c0_58, %c0_59] : memref<32x64xbf16, #tpu.memory_space<vmem>>, vector<32x64xbf16>
    %cst_60 = arith.constant dense<0.000000e+00> : vector<32x64xf32>
    %172 = tpu.matmul %170, %171, %cst_60 {dimension_numbers = #tpu.dot_dimension_numbers<[1], [0], [0], [1], [0, 0, 1, 1], [], []>} : vector<32x32xbf16>, vector<32x64xbf16>, vector<32x64xf32> -> vector<32x64xf32>
    %c0_61 = arith.constant 0 : index
    %c0_62 = arith.constant 0 : index
    %173 = vector.load %arg10[%c0_61, %c0_62] : memref<1x64xf32, #tpu.memory_space<vmem>>, vector<1x64xf32>
    %174 = vector.shape_cast %173 : vector<1x64xf32> to vector<64xf32>
    %175 = vector.shape_cast %174 : vector<64xf32> to vector<1x64xf32>
    %176 = vector.broadcast %175 : vector<1x64xf32> to vector<32x64xf32>
    %177 = arith.addf %172, %176 : vector<32x64xf32>
    %cst_63 = arith.constant 0.000000e+00 : f32
    %178 = vector.broadcast %cst_63 : f32 to vector<32x64xf32>
    %179 = arith.maximumf %177, %178 : vector<32x64xf32>
    %180 = arith.truncf %179 : vector<32x64xf32> to vector<32x64xbf16>
    %c0_64 = arith.constant 0 : index
    %c0_65 = arith.constant 0 : index
    %181 = vector.load %arg11[%c0_64, %c0_65] : memref<64x32xbf16, #tpu.memory_space<vmem>>, vector<64x32xbf16>
    %cst_66 = arith.constant dense<0.000000e+00> : vector<32x32xf32>
    %182 = tpu.matmul %180, %181, %cst_66 {dimension_numbers = #tpu.dot_dimension_numbers<[1], [0], [0], [1], [0, 0, 1, 1], [], []>} : vector<32x64xbf16>, vector<64x32xbf16>, vector<32x32xf32> -> vector<32x32xf32>
    %c0_67 = arith.constant 0 : index
    %c0_68 = arith.constant 0 : index
    %183 = vector.load %arg12[%c0_67, %c0_68] : memref<1x32xf32, #tpu.memory_space<vmem>>, vector<1x32xf32>
    %184 = vector.shape_cast %183 : vector<1x32xf32> to vector<32xf32>
    %185 = vector.shape_cast %184 : vector<32xf32> to vector<1x32xf32>
    %186 = vector.broadcast %185 : vector<1x32xf32> to vector<32x32xf32>
    %187 = arith.addf %182, %186 : vector<32x32xf32>
    %188 = arith.addf %141, %187 : vector<32x32xf32>
    %189 = vector.shape_cast %188 : vector<32x32xf32> to vector<2x16x32xf32>
    %190 = arith.truncf %189 : vector<2x16x32xf32> to vector<2x16x32xbf16>
    %c0_69 = arith.constant 0 : index
    %c0_70 = arith.constant 0 : index
    %c0_71 = arith.constant 0 : index
    %191 = vector.load %arg13[%c0_69, %c0_70, %c0_71] : memref<2x16x32xbf16, #tpu.memory_space<vmem>>, vector<2x16x32xbf16>
    tpu.vector_store %arg13[%c0_69, %c0_70, %c0_71], %190 {strides = array<i32>} : memref<2x16x32xbf16, #tpu.memory_space<vmem>>, vector<2x16x32xbf16>,
    return
  }
  func.func @transform_0(%arg0: i32) -> (i32, i32, i32) {
    %c0_i32 = arith.constant 0 : i32
    %c0_i32_0 = arith.constant 0 : i32
    %c0_i32_1 = arith.constant 0 : i32
    return %arg0, %c0_i32, %c0_i32_0 : i32, i32, i32
  }
  func.func @transform_1(%arg0: i32) -> (i32, i32, i32) {
    %c0_i32 = arith.constant 0 : i32
    %c0_i32_0 = arith.constant 0 : i32
    %c0_i32_1 = arith.constant 0 : i32
    return %arg0, %c0_i32, %c0_i32_0 : i32, i32, i32
  }
  func.func @transform_2(%arg0: i32) -> (i32, i32) {
    %c0_i32 = arith.constant 0 : i32
    %c0_i32_0 = arith.constant 0 : i32
    %c0_i32_1 = arith.constant 0 : i32
    return %c0_i32, %c0_i32_0 : i32, i32
  }
  func.func @transform_3(%arg0: i32) -> (i32, i32) {
    %c0_i32 = arith.constant 0 : i32
    %c0_i32_0 = arith.constant 0 : i32
    %c0_i32_1 = arith.constant 0 : i32
    return %c0_i32, %c0_i32_0 : i32, i32
  }
  func.func @transform_4(%arg0: i32) -> (i32, i32, i32) {
    %c0_i32 = arith.constant 0 : i32
    %c0_i32_0 = arith.constant 0 : i32
    %c0_i32_1 = arith.constant 0 : i32
    %c0_i32_2 = arith.constant 0 : i32
    return %c0_i32, %c0_i32_0, %c0_i32_1 : i32, i32, i32
  }
  func.func @transform_5(%arg0: i32) -> (i32, i32) {
    %c0_i32 = arith.constant 0 : i32
    %c0_i32_0 = arith.constant 0 : i32
    %c0_i32_1 = arith.constant 0 : i32
    return %c0_i32, %c0_i32_0 : i32, i32
  }
  func.func @transform_6(%arg0: i32) -> (i32, i32) {
    %c0_i32 = arith.constant 0 : i32
    %c0_i32_0 = arith.constant 0 : i32
    %c0_i32_1 = arith.constant 0 : i32
    return %c0_i32, %c0_i32_0 : i32, i32
  }
  func.func @transform_7(%arg0: i32) -> (i32, i32) {
    %c0_i32 = arith.constant 0 : i32
    %c0_i32_0 = arith.constant 0 : i32
    %c0_i32_1 = arith.constant 0 : i32
    return %c0_i32, %c0_i32_0 : i32, i32
  }
  func.func @transform_8(%arg0: i32) -> (i32, i32) {
    %c0_i32 = arith.constant 0 : i32
    %c0_i32_0 = arith.constant 0 : i32
    %c0_i32_1 = arith.constant 0 : i32
    return %c0_i32, %c0_i32_0 : i32, i32
  }
  func.func @transform_9(%arg0: i32) -> (i32, i32) {
    %c0_i32 = arith.constant 0 : i32
    %c0_i32_0 = arith.constant 0 : i32
    %c0_i32_1 = arith.constant 0 : i32
    return %c0_i32, %c0_i32_0 : i32, i32
  }
  func.func @transform_10(%arg0: i32) -> (i32, i32) {
    %c0_i32 = arith.constant 0 : i32
    %c0_i32_0 = arith.constant 0 : i32
    %c0_i32_1 = arith.constant 0 : i32
    return %c0_i32, %c0_i32_0 : i32, i32
  }
  func.func @transform_11(%arg0: i32) -> (i32, i32) {
    %c0_i32 = arith.constant 0 : i32
    %c0_i32_0 = arith.constant 0 : i32
    %c0_i32_1 = arith.constant 0 : i32
    return %c0_i32, %c0_i32_0 : i32, i32
  }
  func.func @transform_12(%arg0: i32) -> (i32, i32, i32) {
    %c0_i32 = arith.constant 0 : i32
    %c0_i32_0 = arith.constant 0 : i32
    %c0_i32_1 = arith.constant 0 : i32
    return %arg0, %c0_i32, %c0_i32_0 : i32, i32, i32
  }
}

</mosaic_0001>

<llo_original>
// kernel: tpu_custom_call.1
$region0: #{tpu_custom_call.1}
  #allocation0 [shape = 'u32[]', space=smem, size = 0x4, offset = 0x4, fixed_abs, tag = 'smem constant byte address 0x4 - core index']
  #allocation1 [shape = 'u32[144,128]{1,0:T(1,128)}', space=vmem, size = 0x12000, scoped, tag = 'internal scratch']
  %s0 = inlined_call_operand.vmem [shape: bf16[2,16,32], index: 0, kind: input, shape index: {}]
  %s1 = inlined_call_operand.vmem [shape: f32[2,1,16], index: 1, kind: input, shape index: {}]
  %s2 = inlined_call_operand.vmem [shape: bf16[32,96], index: 2, kind: input, shape index: {}]
  %s3 = inlined_call_operand.vmem [shape: f32[1,96], index: 3, kind: input, shape index: {}]
  %s4 = inlined_call_operand.vmem [shape: bf16[4,8,32], index: 4, kind: input, shape index: {}]
  %s5 = inlined_call_operand.vmem [shape: f32[1,32], index: 5, kind: input, shape index: {}]
  %s6 = inlined_call_operand.vmem [shape: f32[1,32], index: 6, kind: input, shape index: {}]
  %s7 = inlined_call_operand.vmem [shape: f32[1,32], index: 7, kind: input, shape index: {}]
  %s8 = inlined_call_operand.hbm [shape: bf16[32,64], index: 8, kind: input, shape index: {}]
  %s9 = inlined_call_operand.vmem [shape: f32[1,64], index: 9, kind: input, shape index: {}]
  %s10 = inlined_call_operand.vmem [shape: bf16[64,32], index: 10, kind: input, shape index: {}]
  %s11 = inlined_call_operand.vmem [shape: f32[1,32], index: 11, kind: input, shape index: {}]
  %s12 = inlined_call_operand.hbm [shape: bf16[2,16,32], index: 12, kind: output, shape index: {}]
  %s13 = sld [smem:[#allocation0]]
  $region62: #{tpu_custom_call.1} parent=0
    _
  %s15 = ssub.s32 1, %s13
  %s16 = scalar_select 0, %s15, %s13
  $region1: #{tpu_custom_call.1} parent=0
    #allocation2 [shape = 'u8[8192]{0}', space=vmem, size = 0x2000, scoped, tag = 'input window, operand 8, single buffered']
    #allocation3 [shape = 's32[1]{0}', space=sflag, size = 0x4, scoped, tag = 'scoped memory for tpu_custom_call.1']
    #allocation4 [shape = 's32[1]{0}', space=sflag, size = 0x4, scoped, tag = 'scoped memory for tpu_custom_call.1']
    #allocation5 [shape = 'u8[8192]{0}', space=vmem, size = 0x2000, scoped, tag = 'output window, operand 0, single buffered']
    %17 = vsyncpa [#allocation3], 0
    %18 = vsyncpa [#allocation4], 0
    // Predicated region
    $region2: #{tpu_custom_call.1} parent=1 // pred_check
      _
    $region3: #{tpu_custom_call.1} parent=1 // pred_check_branch
      %20 = sbr.rel (0) target = $region5
    $region4: #{tpu_custom_call.1} parent=1 // pred_region
      _
    $region5: #{tpu_custom_call.1} parent=1 // pred_fallthru
      _
    // Predicated region
    $region6: #{tpu_custom_call.1} parent=1 // pred_check
      _
    $region7: #{tpu_custom_call.1} parent=1 // pred_check_branch
      %22 = sbr.rel (0) target = $region9
    $region8: #{tpu_custom_call.1} parent=1 // pred_region
      _
    $region9: #{tpu_custom_call.1} parent=1 // pred_fallthru
      _
    // Predicated region
    $region10: #{tpu_custom_call.1} parent=1 // pred_check
      _
    $region11: #{tpu_custom_call.1} parent=1 // pred_check_branch
      %24 = sbr.rel (0) target = $region13
    $region12: #{tpu_custom_call.1} parent=1 // pred_region
      _
    $region13: #{tpu_custom_call.1} parent=1 // pred_fallthru
      _
    // Predicated region
    $region14: #{tpu_custom_call.1} parent=1 // pred_check
      _
    $region15: #{tpu_custom_call.1} parent=1 // pred_check_branch
      %26 = sbr.rel (0) target = $region17
    $region16: #{tpu_custom_call.1} parent=1 // pred_region
      _
    $region17: #{tpu_custom_call.1} parent=1 // pred_fallthru
      _
    // Predicated region
    $region18: #{tpu_custom_call.1} parent=1 // pred_check
      _
    $region19: #{tpu_custom_call.1} parent=1 // pred_check_branch
      %28 = sbr.rel (0) target = $region21
    $region20: #{tpu_custom_call.1} parent=1 // pred_region
      _
    $region21: #{tpu_custom_call.1} parent=1 // pred_fallthru
      _
    // Predicated region
    $region22: #{tpu_custom_call.1} parent=1 // pred_check
      _
    $region23: #{tpu_custom_call.1} parent=1 // pred_check_branch
      %30 = sbr.rel (0) target = $region25
    $region24: #{tpu_custom_call.1} parent=1 // pred_region
      _
    $region25: #{tpu_custom_call.1} parent=1 // pred_fallthru
      _
    // Predicated region
    $region26: #{tpu_custom_call.1} parent=1 // pred_check
      _
    $region27: #{tpu_custom_call.1} parent=1 // pred_check_branch
      %32 = sbr.rel (0) target = $region29
    $region28: #{tpu_custom_call.1} parent=1 // pred_region
      _
    $region29: #{tpu_custom_call.1} parent=1 // pred_fallthru
      _
    // Predicated region
    $region30: #{tpu_custom_call.1} parent=1 // pred_check
      _
    $region31: #{tpu_custom_call.1} parent=1 // pred_check_branch
      %34 = sbr.rel (0) target = $region33
    $region32: #{tpu_custom_call.1} parent=1 // pred_region
      _
    $region33: #{tpu_custom_call.1} parent=1 // pred_fallthru
      _
    // Predicated region
    $region34: #{tpu_custom_call.1} parent=1 // pred_check
      _
    $region35: #{tpu_custom_call.1} parent=1 // pred_check_branch
      %36 = sbr.rel (0) target = $region37
    $region36: #{tpu_custom_call.1} parent=1 // pred_region
      %s38 = ssub.s32 256, 256
      %39 = vsyncadd [#allocation3], %s38
      %s40 = sshll.u32 [#allocation2], 4
      %s41 = int_to_ptr.vmem [resolvable:$true] %s40
      %46 = dma.hbm_to_vmem [thread:$0]  %s8, 256, %s41, [#allocation3], 64, 64, 4
    $region37: #{tpu_custom_call.1} parent=1 // pred_fallthru
      _
    // Predicated region
    $region38: #{tpu_custom_call.1} parent=1 // pred_check
      _
    $region39: #{tpu_custom_call.1} parent=1 // pred_check_branch
      %48 = sbr.rel (0) target = $region41
    $region40: #{tpu_custom_call.1} parent=1 // pred_region
      _
    $region41: #{tpu_custom_call.1} parent=1 // pred_fallthru
      _
    // Predicated region
    $region42: #{tpu_custom_call.1} parent=1 // pred_check
      _
    $region43: #{tpu_custom_call.1} parent=1 // pred_check_branch
      %50 = sbr.rel (0) target = $region45
    $region44: #{tpu_custom_call.1} parent=1 // pred_region
      _
    $region45: #{tpu_custom_call.1} parent=1 // pred_fallthru
      _
    // Predicated region
    $region46: #{tpu_custom_call.1} parent=1 // pred_check
      _
    $region47: #{tpu_custom_call.1} parent=1 // pred_check_branch
      %52 = sbr.rel (0) target = $region49
    $region48: #{tpu_custom_call.1} parent=1 // pred_region
      _
    $region49: #{tpu_custom_call.1} parent=1 // pred_fallthru
      _
    // Predicated region
    $region50: #{tpu_custom_call.1} parent=1 // pred_check
      _
    $region51: #{tpu_custom_call.1} parent=1 // pred_check_branch
      %54 = sbr.rel (0) target = $region53
    $region52: #{tpu_custom_call.1} parent=1 // pred_region
      %55 = dma.done [#allocation3], 256
    $region53: #{tpu_custom_call.1} parent=1 // pred_fallthru
      _
    %v57 = vld [vmem:[%s0] sm:$0xf]
    %v58 = vld [vmem:[%s0 + $0x4] sm:$0xf]
    %v59 = vld [vmem:[%s0 + $0x8] sm:$0xf]
    %v60 = vld [vmem:[%s0 + $0xc] sm:$0xf]
    %v61 = vunpack.c.l.bf16 %v57
    %v62 = vunpack.c.l.bf16 %v58
    %v63 = vunpack.c.l.bf16 %v59
    %v64 = vunpack.c.l.bf16 %v60
    %v65 = vld [vmem:[%s2] sm:$0xf]
    %v66 = vld [vmem:[%s2 + $0x4] sm:$0xf]
    %v67 = vld [vmem:[%s2 + $0x8] sm:$0xf]
    %v68 = vld [vmem:[%s2 + $0xc] sm:$0xf]
    %v69 = vld [vmem:[%s3] sm:$0x1]
    %v71 = vlaneseq
    %v72 = vshrl.u32 %v71, 7
    %v73 = vsub.s32 0, %v72
    %v74 = vrot.slane %v69, %v73
    %v80 = vunpack.c.l.b16 %v57
    %v81 = vunpack.c.l.b16 %v58
    %v82 = vunpack.c.l.b16 %v59
    %v83 = vunpack.c.l.b16 %v60
    %v84 = vpack.c.b16 %v81, %v80
    %v85 = vpack.c.b16 %v83, %v82
    %v90 = vunpack.c.l.b16 %v65
    %v91 = vunpack.c.l.b16 %v66
    %v92 = vunpack.c.l.b16 %v67
    %v93 = vunpack.c.l.b16 %v68
    %v94 = vpack.c.b16 %v91, %v90
    %v95 = vpack.c.b16 %v93, %v92
    %vm98 = vcmask 261120
    %v100 = vsel %vm98, %v84, 0
    %v103 = vsel %vm98, %v85, 0
    %105 = vmatprep.subr.bf16.mxu0 0
    %106 = vmatpush1.bf16.msra.mxu0 %v94
    %107 = vmatprep.subr.bf16.mxu0 0
    %108 = vmatpush1.bf16.msra.mxu0 %v95
    %109 = vmatprep.subr.bf16.mxu0 0
    %110 = vmatpush1.bf16.msra.mxu0 0
    %111 = vmatprep.subr.bf16.mxu0 0
    %112 = vmatpush1.bf16.msra.mxu0 0
    %113 = vmatprep.subr.bf16.mxu0 0
    %114 = vmatpush1.bf16.msra.mxu0 0
    %115 = vmatprep.subr.bf16.mxu0 0
    %116 = vmatpush1.bf16.msra.mxu0 0
    %117 = vmatprep.subr.bf16.mxu0 0
    %118 = vmatpush1.bf16.msra.mxu0 0
    %119 = vmatprep.subr.bf16.mxu0 0
    %120 = vmatpush1.bf16.msra.mxu0 0
    %121 = vmatprep.subr.bf16.mxu0 0
    %122 = vmatpush1.bf16.msra.mxu0 0
    %123 = vmatprep.subr.bf16.mxu0 0
    %124 = vmatpush1.bf16.msra.mxu0 0
    %125 = vmatprep.subr.bf16.mxu0 0
    %126 = vmatpush1.bf16.msra.mxu0 0
    %127 = vmatprep.subr.bf16.mxu0 0
    %128 = vmatpush1.bf16.msra.mxu0 0
    %129 = vmatprep.subr.bf16.mxu0 0
    %130 = vmatpush1.bf16.msra.mxu0 0
    %131 = vmatprep.subr.bf16.mxu0 0
    %132 = vmatpush1.bf16.msra.mxu0 0
    %133 = vmatprep.subr.bf16.mxu0 0
    %134 = vmatpush1.bf16.msra.mxu0 0
    %135 = vmatprep.subr.bf16.mxu0 0
    %136 = vmatpush1.bf16.msra.mxu0 0
    %137 = vmatprep.mubr.bf16.mxu0 0
    %138 = vmatmul.mubr.bf16.gmra.mrb[0].mxu0 %v100
    %v139 = vpop.f32.mrb[0].mxu0
    %v140 = vadd.f32 %v74, %v139
    %v141 = vpop.f32.mrb[0].mxu0
    %v142 = vpop.f32.mrb[0].mxu0
    %v143 = vadd.f32 %v74, %v142
    %v144 = vpop.f32.mrb[0].mxu0
    %145 = vmatprep.mubr.bf16.mxu0 0
    %146 = vmatmul.mubr.bf16.gmra.mrb[0].mxu0 %v103
    %v147 = vpop.f32.mrb[0].mxu0
    %v148 = vadd.f32 %v74, %v147
    %v149 = vpop.f32.mrb[0].mxu0
    %v150 = vpop.f32.mrb[0].mxu0
    %v151 = vadd.f32 %v74, %v150
    %v152 = vpop.f32.mrb[0].mxu0
    %153 = vdwg.mxu0
    %v154 = vpack.c.bf16 %v143, %v140
    %v155 = vpack.c.bf16 %v151, %v148
    %v156 = vlaneseq
    %v157 = vshrl.u32 %v156, 7
    %v158 = vadd.s32 %v157, 8
    %v159 = vlaneseq
    %v160 = vand.u32 %v159, 127
    %vm161 = vcmp.gt.s32.totalorder %v160, %v157
    %vm162 = vcmp.gt.s32.totalorder %v160, %v158
    %v163 = vld [vmem:[%s1] sm:$0x1]
    %v164 = vld [vmem:[%s1 + $0x1] sm:$0x1]
    %vm165 = vcmp.gt.f32.partialorder %v163, 0.5
    %vm166 = vcmp.gt.f32.partialorder %v164, 0.5
    %v167 = vsel %vm161, 1, 0
    %v168 = vsel %vm162, 1, 0
    %vm169 = vcmp.eq.s32.totalorder %v167, 1
    %vm170 = vcmp.eq.s32.totalorder %v168, 1
    %v171 = vsel %vm165, 1, 0
    %v172 = vsel %vm166, 1, 0
    %v173 = vlaneseq
    %v174 = vshrl.u32 %v173, 7
    %v175 = vsub.s32 0, %v174
    %v176 = vrot.slane %v171, %v175
    %v177 = vlaneseq
    %v178 = vshrl.u32 %v177, 7
    %v179 = vsub.s32 0, %v178
    %v180 = vrot.slane %v172, %v179
    %vm181 = vcmp.eq.s32.totalorder %v176, 1
    %vm182 = vcmp.eq.s32.totalorder %v180, 1
    %vm183 = vmor %vm169, %vm181
    %vm184 = vmor %vm170, %vm181
    %vm185 = vmor %vm169, %vm182
    %vm186 = vmor %vm170, %vm182
    %188 = vrot.lane.b32.xlu0 %v154, 96
    %v189 = vpop.permute.xlu0 %188
    %vm190 = vcmask 64512
    %v192 = vsel %vm190, %v154, 0
    %v195 = vsel %vm190, %v189, 0
    %197 = vmatprep.subr.bf16.mxu0 0
    %198 = vmatpush1.bf16.xpose.msra.mxu0 %v195
    %199 = vmatprep.subr.bf16.mxu0 0
    %200 = vmatpush1.bf16.xpose.msra.mxu0 0
    %201 = vmatprep.subr.bf16.mxu0 0
    %202 = vmatpush1.bf16.xpose.msra.mxu0 0
    %203 = vmatprep.subr.bf16.mxu0 0
    %204 = vmatpush1.bf16.xpose.msra.mxu0 0
    %205 = vmatprep.subr.bf16.mxu0 0
    %206 = vmatpush1.bf16.xpose.msra.mxu0 0
    %207 = vmatprep.subr.bf16.mxu0 0
    %208 = vmatpush1.bf16.xpose.msra.mxu0 0
    %209 = vmatprep.subr.bf16.mxu0 0
    %210 = vmatpush1.bf16.xpose.msra.mxu0 0
    %211 = vmatprep.subr.bf16.mxu0 0
    %212 = vmatpush1.bf16.xpose.msra.mxu0 0
    %213 = vmatprep.subr.bf16.mxu0 0
    %214 = vmatpush1.bf16.xpose.msra.mxu0 0
    %215 = vmatprep.subr.bf16.mxu0 0
    %216 = vmatpush1.bf16.xpose.msra.mxu0 0
    %217 = vmatprep.subr.bf16.mxu0 0
    %218 = vmatpush1.bf16.xpose.msra.mxu0 0
    %219 = vmatprep.subr.bf16.mxu0 0
    %220 = vmatpush1.bf16.xpose.msra.mxu0 0
    %221 = vmatprep.subr.bf16.mxu0 0
    %222 = vmatpush1.bf16.xpose.msra.mxu0 0
    %223 = vmatprep.subr.bf16.mxu0 0
    %224 = vmatpush1.bf16.xpose.msra.mxu0 0
    %225 = vmatprep.subr.bf16.mxu0 0
    %226 = vmatpush1.bf16.xpose.msra.mxu0 0
    %227 = vmatprep.subr.bf16.mxu0 0
    %228 = vmatpush1.bf16.xpose.msra.mxu0 0
    %229 = vmatprep.mubr.bf16.mxu0 0
    %230 = vmatmul.mubr.bf16.gmra.mrb[0].mxu0 %v192
    %v231 = vpop.f32.mrb[0].mxu0
    %v232 = vadd.f32 0.0, %v231
    %v233 = vpop.f32.mrb[0].mxu0
    %v234 = vpop.f32.mrb[0].mxu0
    %v235 = vadd.f32 0.0, %v234
    %v236 = vpop.f32.mrb[0].mxu0
    %237 = vdwg.mxu0
    %239 = vrot.lane.b32.xlu0 %v155, 96
    %v240 = vpop.permute.xlu0 %239
    %v242 = vsel %vm190, %v155, 0
    %v245 = vsel %vm190, %v240, 0
    %247 = vmatprep.subr.bf16.mxu0 0
    %248 = vmatpush1.bf16.xpose.msra.mxu0 %v245
    %249 = vmatprep.subr.bf16.mxu0 0
    %250 = vmatpush1.bf16.xpose.msra.mxu0 0
    %251 = vmatprep.subr.bf16.mxu0 0
    %252 = vmatpush1.bf16.xpose.msra.mxu0 0
    %253 = vmatprep.subr.bf16.mxu0 0
    %254 = vmatpush1.bf16.xpose.msra.mxu0 0
    %255 = vmatprep.subr.bf16.mxu0 0
    %256 = vmatpush1.bf16.xpose.msra.mxu0 0
    %257 = vmatprep.subr.bf16.mxu0 0
    %258 = vmatpush1.bf16.xpose.msra.mxu0 0
    %259 = vmatprep.subr.bf16.mxu0 0
    %260 = vmatpush1.bf16.xpose.msra.mxu0 0
    %261 = vmatprep.subr.bf16.mxu0 0
    %262 = vmatpush1.bf16.xpose.msra.mxu0 0
    %263 = vmatprep.subr.bf16.mxu0 0
    %264 = vmatpush1.bf16.xpose.msra.mxu0 0
    %265 = vmatprep.subr.bf16.mxu0 0
    %266 = vmatpush1.bf16.xpose.msra.mxu0 0
    %267 = vmatprep.subr.bf16.mxu0 0
    %268 = vmatpush1.bf16.xpose.msra.mxu0 0
    %269 = vmatprep.subr.bf16.mxu0 0
    %270 = vmatpush1.bf16.xpose.msra.mxu0 0
    %271 = vmatprep.subr.bf16.mxu0 0
    %272 = vmatpush1.bf16.xpose.msra.mxu0 0
    %273 = vmatprep.subr.bf16.mxu0 0
    %274 = vmatpush1.bf16.xpose.msra.mxu0 0
    %275 = vmatprep.subr.bf16.mxu0 0
    %276 = vmatpush1.bf16.xpose.msra.mxu0 0
    %277 = vmatprep.subr.bf16.mxu0 0
    %278 = vmatpush1.bf16.xpose.msra.mxu0 0
    %279 = vmatprep.mubr.bf16.mxu0 0
    %280 = vmatmul.mubr.bf16.gmra.mrb[0].mxu0 %v242
    %v281 = vpop.f32.mrb[0].mxu0
    %v282 = vadd.f32 0.0, %v281
    %v283 = vpop.f32.mrb[0].mxu0
    %v284 = vpop.f32.mrb[0].mxu0
    %v285 = vadd.f32 0.0, %v284
    %v286 = vpop.f32.mrb[0].mxu0
    %287 = vdwg.mxu0
    %v288 = vmul.f32 %v232, 0.35355338
    %v289 = vmul.f32 %v235, 0.35355338
    %v290 = vmul.f32 %v282, 0.35355338
    %v291 = vmul.f32 %v285, 0.35355338
    %v292 = vsel %vm183, -1e+30, %v288
    %v293 = vsel %vm184, -1e+30, %v289
    %v294 = vsel %vm185, -1e+30, %v290
    %v295 = vsel %vm186, -1e+30, %v291
    %vm296 = vcmask 130048
    %v297 = vsel %vm296, %v292, -inf
    %298 = vmax.xlane.f32.xlu0 %v297
    %v299 = vpop.xlane.xlu0 %298
    %v300 = vsel %vm296, %v293, -inf
    %301 = vmax.xlane.f32.xlu0 %v300
    %v302 = vpop.xlane.xlu0 %301
    %v303 = vsel %vm296, %v294, -inf
    %304 = vmax.xlane.f32.xlu0 %v303
    %v305 = vpop.xlane.xlu0 %304
    %v306 = vsel %vm296, %v295, -inf
    %307 = vmax.xlane.f32.xlu0 %v306
    %v308 = vpop.xlane.xlu0 %307
    %v309 = vsub.f32 %v292, %v299
    %v310 = vsub.f32 %v293, %v302
    %v311 = vsub.f32 %v294, %v305
    %v312 = vsub.f32 %v295, %v308
    %v313 = vmul.f32 %v309, 1.442695
    %v314 = vpow.pop %v313
    %v315 = vmul.f32 %v310, 1.442695
    %v316 = vpow.pop %v315
    %v317 = vmul.f32 %v311, 1.442695
    %v318 = vpow.pop %v317
    %v319 = vmul.f32 %v312, 1.442695
    %v320 = vpow.pop %v319
    %v321 = vsel %vm296, %v314, 0.0
    %322 = vadd.xlane.f32.xlu0 %v321
    %v323 = vpop.xlane.xlu0 %322
    %v324 = vsel %vm296, %v316, 0.0
    %325 = vadd.xlane.f32.xlu0 %v324
    %v326 = vpop.xlane.xlu0 %325
    %v327 = vsel %vm296, %v318, 0.0
    %328 = vadd.xlane.f32.xlu0 %v327
    %v329 = vpop.xlane.xlu0 %328
    %v330 = vsel %vm296, %v320, 0.0
    %331 = vadd.xlane.f32.xlu0 %v330
    %v332 = vpop.xlane.xlu0 %331
    %v333 = vrcp.pop %v323
    %v334 = vrcp.pop %v326
    %v335 = vrcp.pop %v329
    %v336 = vrcp.pop %v332
    %v337 = vmul.f32 %v314, %v333
    %v338 = vmul.f32 %v316, %v334
    %v339 = vmul.f32 %v318, %v335
    %v340 = vmul.f32 %v320, %v336
    %v341 = vpack.c.bf16 %v338, %v337
    %v342 = vpack.c.bf16 %v340, %v339
    %343 = vrot.lane.b32.xlu0 %v154, 64
    %v344 = vpop.permute.xlu0 %343
    %v347 = vsel %vm296, %v341, 0
    %349 = vmatprep.subr.bf16.mxu0 0
    %350 = vmatpush1.bf16.msra.mxu0 %v344
    %351 = vmatprep.subr.bf16.mxu0 0
    %352 = vmatpush1.bf16.msra.mxu0 0
    %353 = vmatprep.subr.bf16.mxu0 0
    %354 = vmatpush1.bf16.msra.mxu0 0
    %355 = vmatprep.subr.bf16.mxu0 0
    %356 = vmatpush1.bf16.msra.mxu0 0
    %357 = vmatprep.subr.bf16.mxu0 0
    %358 = vmatpush1.bf16.msra.mxu0 0
    %359 = vmatprep.subr.bf16.mxu0 0
    %360 = vmatpush1.bf16.msra.mxu0 0
    %361 = vmatprep.subr.bf16.mxu0 0
    %362 = vmatpush1.bf16.msra.mxu0 0
    %363 = vmatprep.subr.bf16.mxu0 0
    %364 = vmatpush1.bf16.msra.mxu0 0
    %365 = vmatprep.subr.bf16.mxu0 0
    %366 = vmatpush1.bf16.msra.mxu0 0
    %367 = vmatprep.subr.bf16.mxu0 0
    %368 = vmatpush1.bf16.msra.mxu0 0
    %369 = vmatprep.subr.bf16.mxu0 0
    %370 = vmatpush1.bf16.msra.mxu0 0
    %371 = vmatprep.subr.bf16.mxu0 0
    %372 = vmatpush1.bf16.msra.mxu0 0
    %373 = vmatprep.subr.bf16.mxu0 0
    %374 = vmatpush1.bf16.msra.mxu0 0
    %375 = vmatprep.subr.bf16.mxu0 0
    %376 = vmatpush1.bf16.msra.mxu0 0
    %377 = vmatprep.subr.bf16.mxu0 0
    %378 = vmatpush1.bf16.msra.mxu0 0
    %379 = vmatprep.subr.bf16.mxu0 0
    %380 = vmatpush1.bf16.msra.mxu0 0
    %381 = vmatprep.mubr.bf16.mxu0 0
    %382 = vmatmul.mubr.bf16.gmra.mrb[0].mxu0 %v347
    %v383 = vpop.f32.mrb[0].mxu0
    %v384 = vadd.f32 0.0, %v383
    %v385 = vpop.f32.mrb[0].mxu0
    %v386 = vpop.f32.mrb[0].mxu0
    %v387 = vadd.f32 0.0, %v386
    %v388 = vpop.f32.mrb[0].mxu0
    %389 = vdwg.mxu0
    %390 = vrot.lane.b32.xlu0 %v155, 64
    %v391 = vpop.permute.xlu0 %390
    %v394 = vsel %vm296, %v342, 0
    %396 = vmatprep.subr.bf16.mxu0 0
    %397 = vmatpush1.bf16.msra.mxu0 %v391
    %398 = vmatprep.subr.bf16.mxu0 0
    %399 = vmatpush1.bf16.msra.mxu0 0
    %400 = vmatprep.subr.bf16.mxu0 0
    %401 = vmatpush1.bf16.msra.mxu0 0
    %402 = vmatprep.subr.bf16.mxu0 0
    %403 = vmatpush1.bf16.msra.mxu0 0
    %404 = vmatprep.subr.bf16.mxu0 0
    %405 = vmatpush1.bf16.msra.mxu0 0
    %406 = vmatprep.subr.bf16.mxu0 0
    %407 = vmatpush1.bf16.msra.mxu0 0
    %408 = vmatprep.subr.bf16.mxu0 0
    %409 = vmatpush1.bf16.msra.mxu0 0
    %410 = vmatprep.subr.bf16.mxu0 0
    %411 = vmatpush1.bf16.msra.mxu0 0
    %412 = vmatprep.subr.bf16.mxu0 0
    %413 = vmatpush1.bf16.msra.mxu0 0
    %414 = vmatprep.subr.bf16.mxu0 0
    %415 = vmatpush1.bf16.msra.mxu0 0
    %416 = vmatprep.subr.bf16.mxu0 0
    %417 = vmatpush1.bf16.msra.mxu0 0
    %418 = vmatprep.subr.bf16.mxu0 0
    %419 = vmatpush1.bf16.msra.mxu0 0
    %420 = vmatprep.subr.bf16.mxu0 0
    %421 = vmatpush1.bf16.msra.mxu0 0
    %422 = vmatprep.subr.bf16.mxu0 0
    %423 = vmatpush1.bf16.msra.mxu0 0
    %424 = vmatprep.subr.bf16.mxu0 0
    %425 = vmatpush1.bf16.msra.mxu0 0
    %426 = vmatprep.subr.bf16.mxu0 0
    %427 = vmatpush1.bf16.msra.mxu0 0
    %428 = vmatprep.mubr.bf16.mxu0 0
    %429 = vmatmul.mubr.bf16.gmra.mrb[0].mxu0 %v394
    %v430 = vpop.f32.mrb[0].mxu0
    %v431 = vadd.f32 0.0, %v430
    %v432 = vpop.f32.mrb[0].mxu0
    %v433 = vpop.f32.mrb[0].mxu0
    %v434 = vadd.f32 0.0, %v433
    %v435 = vpop.f32.mrb[0].mxu0
    %436 = vdwg.mxu0
    %v437 = vpack.c.bf16 %v387, %v384
    %v438 = vpack.c.bf16 %v434, %v431
    %v439 = vld [vmem:[%s4] sm:$0xf]
    %440 = vrot.lane.b32.xlu0 %v154, 120
    %v441 = vpop.permute.xlu0 %440
    %442 = vrot.lane.b32.xlu0 %v154, 88
    %v443 = vpop.permute.xlu0 %442
    %v445 = vsel %vm190, %v441, 0
    %v448 = vsel %vm190, %v443, 0
    %450 = vmatprep.subr.bf16.mxu0 0
    %451 = vmatpush1.bf16.xpose.msra.mxu0 %v448
    %452 = vmatprep.subr.bf16.mxu0 0
    %453 = vmatpush1.bf16.xpose.msra.mxu0 0
    %454 = vmatprep.subr.bf16.mxu0 0
    %455 = vmatpush1.bf16.xpose.msra.mxu0 0
    %456 = vmatprep.subr.bf16.mxu0 0
    %457 = vmatpush1.bf16.xpose.msra.mxu0 0
    %458 = vmatprep.subr.bf16.mxu0 0
    %459 = vmatpush1.bf16.xpose.msra.mxu0 0
    %460 = vmatprep.subr.bf16.mxu0 0
    %461 = vmatpush1.bf16.xpose.msra.mxu0 0
    %462 = vmatprep.subr.bf16.mxu0 0
    %463 = vmatpush1.bf16.xpose.msra.mxu0 0
    %464 = vmatprep.subr.bf16.mxu0 0
    %465 = vmatpush1.bf16.xpose.msra.mxu0 0
    %466 = vmatprep.subr.bf16.mxu0 0
    %467 = vmatpush1.bf16.xpose.msra.mxu0 0
    %468 = vmatprep.subr.bf16.mxu0 0
    %469 = vmatpush1.bf16.xpose.msra.mxu0 0
    %470 = vmatprep.subr.bf16.mxu0 0
    %471 = vmatpush1.bf16.xpose.msra.mxu0 0
    %472 = vmatprep.subr.bf16.mxu0 0
    %473 = vmatpush1.bf16.xpose.msra.mxu0 0
    %474 = vmatprep.subr.bf16.mxu0 0
    %475 = vmatpush1.bf16.xpose.msra.mxu0 0
    %476 = vmatprep.subr.bf16.mxu0 0
    %477 = vmatpush1.bf16.xpose.msra.mxu0 0
    %478 = vmatprep.subr.bf16.mxu0 0
    %479 = vmatpush1.bf16.xpose.msra.mxu0 0
    %480 = vmatprep.subr.bf16.mxu0 0
    %481 = vmatpush1.bf16.xpose.msra.mxu0 0
    %482 = vmatprep.mubr.bf16.mxu0 0
    %483 = vmatmul.mubr.bf16.gmra.mrb[0].mxu0 %v445
    %v484 = vpop.f32.mrb[0].mxu0
    %v485 = vadd.f32 0.0, %v484
    %v486 = vpop.f32.mrb[0].mxu0
    %v487 = vpop.f32.mrb[0].mxu0
    %v488 = vadd.f32 0.0, %v487
    %v489 = vpop.f32.mrb[0].mxu0
    %490 = vdwg.mxu0
    %491 = vrot.lane.b32.xlu0 %v155, 120
    %v492 = vpop.permute.xlu0 %491
    %493 = vrot.lane.b32.xlu0 %v155, 88
    %v494 = vpop.permute.xlu0 %493
    %v496 = vsel %vm190, %v492, 0
    %v499 = vsel %vm190, %v494, 0
    %501 = vmatprep.subr.bf16.mxu0 0
    %502 = vmatpush1.bf16.xpose.msra.mxu0 %v499
    %503 = vmatprep.subr.bf16.mxu0 0
    %504 = vmatpush1.bf16.xpose.msra.mxu0 0
    %505 = vmatprep.subr.bf16.mxu0 0
    %506 = vmatpush1.bf16.xpose.msra.mxu0 0
    %507 = vmatprep.subr.bf16.mxu0 0
    %508 = vmatpush1.bf16.xpose.msra.mxu0 0
    %509 = vmatprep.subr.bf16.mxu0 0
    %510 = vmatpush1.bf16.xpose.msra.mxu0 0
    %511 = vmatprep.subr.bf16.mxu0 0
    %512 = vmatpush1.bf16.xpose.msra.mxu0 0
    %513 = vmatprep.subr.bf16.mxu0 0
    %514 = vmatpush1.bf16.xpose.msra.mxu0 0
    %515 = vmatprep.subr.bf16.mxu0 0
    %516 = vmatpush1.bf16.xpose.msra.mxu0 0
    %517 = vmatprep.subr.bf16.mxu0 0
    %518 = vmatpush1.bf16.xpose.msra.mxu0 0
    %519 = vmatprep.subr.bf16.mxu0 0
    %520 = vmatpush1.bf16.xpose.msra.mxu0 0
    %521 = vmatprep.subr.bf16.mxu0 0
    %522 = vmatpush1.bf16.xpose.msra.mxu0 0
    %523 = vmatprep.subr.bf16.mxu0 0
    %524 = vmatpush1.bf16.xpose.msra.mxu0 0
    %525 = vmatprep.subr.bf16.mxu0 0
    %526 = vmatpush1.bf16.xpose.msra.mxu0 0
    %527 = vmatprep.subr.bf16.mxu0 0
    %528 = vmatpush1.bf16.xpose.msra.mxu0 0
    %529 = vmatprep.subr.bf16.mxu0 0
    %530 = vmatpush1.bf16.xpose.msra.mxu0 0
    %531 = vmatprep.subr.bf16.mxu0 0
    %532 = vmatpush1.bf16.xpose.msra.mxu0 0
    %533 = vmatprep.mubr.bf16.mxu0 0
    %534 = vmatmul.mubr.bf16.gmra.mrb[0].mxu0 %v496
    %v535 = vpop.f32.mrb[0].mxu0
    %v536 = vadd.f32 0.0, %v535
    %v537 = vpop.f32.mrb[0].mxu0
    %v538 = vpop.f32.mrb[0].mxu0
    %v539 = vadd.f32 0.0, %v538
    %v540 = vpop.f32.mrb[0].mxu0
    %541 = vdwg.mxu0
    %v542 = vmul.f32 %v485, 0.35355338
    %v543 = vmul.f32 %v488, 0.35355338
    %v544 = vmul.f32 %v536, 0.35355338
    %v545 = vmul.f32 %v539, 0.35355338
    %v546 = vsel %vm183, -1e+30, %v542
    %v547 = vsel %vm184, -1e+30, %v543
    %v548 = vsel %vm185, -1e+30, %v544
    %v549 = vsel %vm186, -1e+30, %v545
    %v550 = vsel %vm296, %v546, -inf
    %551 = vmax.xlane.f32.xlu0 %v550
    %v552 = vpop.xlane.xlu0 %551
    %v553 = vsel %vm296, %v547, -inf
    %554 = vmax.xlane.f32.xlu0 %v553
    %v555 = vpop.xlane.xlu0 %554
    %v556 = vsel %vm296, %v548, -inf
    %557 = vmax.xlane.f32.xlu0 %v556
    %v558 = vpop.xlane.xlu0 %557
    %v559 = vsel %vm296, %v549, -inf
    %560 = vmax.xlane.f32.xlu0 %v559
    %v561 = vpop.xlane.xlu0 %560
    %v562 = vsub.f32 %v546, %v552
    %v563 = vsub.f32 %v547, %v555
    %v564 = vsub.f32 %v548, %v558
    %v565 = vsub.f32 %v549, %v561
    %v566 = vmul.f32 %v562, 1.442695
    %v567 = vpow.pop %v566
    %v568 = vmul.f32 %v563, 1.442695
    %v569 = vpow.pop %v568
    %v570 = vmul.f32 %v564, 1.442695
    %v571 = vpow.pop %v570
    %v572 = vmul.f32 %v565, 1.442695
    %v573 = vpow.pop %v572
    %v574 = vsel %vm296, %v567, 0.0
    %575 = vadd.xlane.f32.xlu0 %v574
    %v576 = vpop.xlane.xlu0 %575
    %v577 = vsel %vm296, %v569, 0.0
    %578 = vadd.xlane.f32.xlu0 %v577
    %v579 = vpop.xlane.xlu0 %578
    %v580 = vsel %vm296, %v571, 0.0
    %581 = vadd.xlane.f32.xlu0 %v580
    %v582 = vpop.xlane.xlu0 %581
    %v583 = vsel %vm296, %v573, 0.0
    %584 = vadd.xlane.f32.xlu0 %v583
    %v585 = vpop.xlane.xlu0 %584
    %v586 = vrcp.pop %v576
    %v587 = vrcp.pop %v579
    %v588 = vrcp.pop %v582
    %v589 = vrcp.pop %v585
    %v590 = vmul.f32 %v567, %v586
    %v591 = vmul.f32 %v569, %v587
    %v592 = vmul.f32 %v571, %v588
    %v593 = vmul.f32 %v573, %v589
    %v594 = vpack.c.bf16 %v591, %v590
    %v595 = vpack.c.bf16 %v593, %v592
    %596 = vrot.lane.b32.xlu0 %v154, 56
    %v597 = vpop.permute.xlu0 %596
    %v600 = vsel %vm296, %v594, 0
    %602 = vmatprep.subr.bf16.mxu0 0
    %603 = vmatpush1.bf16.msra.mxu0 %v597
    %604 = vmatprep.subr.bf16.mxu0 0
    %605 = vmatpush1.bf16.msra.mxu0 0
    %606 = vmatprep.subr.bf16.mxu0 0
    %607 = vmatpush1.bf16.msra.mxu0 0
    %608 = vmatprep.subr.bf16.mxu0 0
    %609 = vmatpush1.bf16.msra.mxu0 0
    %610 = vmatprep.subr.bf16.mxu0 0
    %611 = vmatpush1.bf16.msra.mxu0 0
    %612 = vmatprep.subr.bf16.mxu0 0
    %613 = vmatpush1.bf16.msra.mxu0 0
    %614 = vmatprep.subr.bf16.mxu0 0
    %615 = vmatpush1.bf16.msra.mxu0 0
    %616 = vmatprep.subr.bf16.mxu0 0
    %617 = vmatpush1.bf16.msra.mxu0 0
    %618 = vmatprep.subr.bf16.mxu0 0
    %619 = vmatpush1.bf16.msra.mxu0 0
    %620 = vmatprep.subr.bf16.mxu0 0
    %621 = vmatpush1.bf16.msra.mxu0 0
    %622 = vmatprep.subr.bf16.mxu0 0
    %623 = vmatpush1.bf16.msra.mxu0 0
    %624 = vmatprep.subr.bf16.mxu0 0
    %625 = vmatpush1.bf16.msra.mxu0 0
    %626 = vmatprep.subr.bf16.mxu0 0
    %627 = vmatpush1.bf16.msra.mxu0 0
    %628 = vmatprep.subr.bf16.mxu0 0
    %629 = vmatpush1.bf16.msra.mxu0 0
    %630 = vmatprep.subr.bf16.mxu0 0
    %631 = vmatpush1.bf16.msra.mxu0 0
    %632 = vmatprep.subr.bf16.mxu0 0
    %633 = vmatpush1.bf16.msra.mxu0 0
    %634 = vmatprep.mubr.bf16.mxu0 0
    %635 = vmatmul.mubr.bf16.gmra.mrb[0].mxu0 %v600
    %v636 = vpop.f32.mrb[0].mxu0
    %v637 = vadd.f32 0.0, %v636
    %v638 = vpop.f32.mrb[0].mxu0
    %v639 = vpop.f32.mrb[0].mxu0
    %v640 = vadd.f32 0.0, %v639
    %v641 = vpop.f32.mrb[0].mxu0
    %642 = vdwg.mxu0
    %643 = vrot.lane.b32.xlu0 %v155, 56
    %v644 = vpop.permute.xlu0 %643
    %v647 = vsel %vm296, %v595, 0
    %649 = vmatprep.subr.bf16.mxu0 0
    %650 = vmatpush1.bf16.msra.mxu0 %v644
    %651 = vmatprep.subr.bf16.mxu0 0
    %652 = vmatpush1.bf16.msra.mxu0 0
    %653 = vmatprep.subr.bf16.mxu0 0
    %654 = vmatpush1.bf16.msra.mxu0 0
    %655 = vmatprep.subr.bf16.mxu0 0
    %656 = vmatpush1.bf16.msra.mxu0 0
    %657 = vmatprep.subr.bf16.mxu0 0
    %658 = vmatpush1.bf16.msra.mxu0 0
    %659 = vmatprep.subr.bf16.mxu0 0
    %660 = vmatpush1.bf16.msra.mxu0 0
    %661 = vmatprep.subr.bf16.mxu0 0
    %662 = vmatpush1.bf16.msra.mxu0 0
    %663 = vmatprep.subr.bf16.mxu0 0
    %664 = vmatpush1.bf16.msra.mxu0 0
    %665 = vmatprep.subr.bf16.mxu0 0
    %666 = vmatpush1.bf16.msra.mxu0 0
    %667 = vmatprep.subr.bf16.mxu0 0
    %668 = vmatpush1.bf16.msra.mxu0 0
    %669 = vmatprep.subr.bf16.mxu0 0
    %670 = vmatpush1.bf16.msra.mxu0 0
    %671 = vmatprep.subr.bf16.mxu0 0
    %672 = vmatpush1.bf16.msra.mxu0 0
    %673 = vmatprep.subr.bf16.mxu0 0
    %674 = vmatpush1.bf16.msra.mxu0 0
    %675 = vmatprep.subr.bf16.mxu0 0
    %676 = vmatpush1.bf16.msra.mxu0 0
    %677 = vmatprep.subr.bf16.mxu0 0
    %678 = vmatpush1.bf16.msra.mxu0 0
    %679 = vmatprep.subr.bf16.mxu0 0
    %680 = vmatpush1.bf16.msra.mxu0 0
    %681 = vmatprep.mubr.bf16.mxu0 0
    %682 = vmatmul.mubr.bf16.gmra.mrb[0].mxu0 %v647
    %v683 = vpop.f32.mrb[0].mxu0
    %v684 = vadd.f32 0.0, %v683
    %v685 = vpop.f32.mrb[0].mxu0
    %v686 = vpop.f32.mrb[0].mxu0
    %v687 = vadd.f32 0.0, %v686
    %v688 = vpop.f32.mrb[0].mxu0
    %689 = vdwg.mxu0
    %v690 = vpack.c.bf16 %v640, %v637
    %v691 = vpack.c.bf16 %v687, %v684
    %s692 = scalar_lea.vmem %s4, 4
    %v693 = vld [vmem:[%s692] sm:$0xf]
    %v695 = vsel %vm190, %v690, 0
    %v698 = vsel %vm190, %v691, 0
    %vm700 = vcmask 1043456
    %v702 = vsel %vm700, %v693, 0
    %704 = vmatprep.subr.bf16.mxu0 0
    %705 = vmatpush1.bf16.msra.mxu0 %v702
    %706 = vmatprep.subr.bf16.mxu0 0
    %707 = vmatpush1.bf16.msra.mxu0 0
    %708 = vmatprep.subr.bf16.mxu0 0
    %709 = vmatpush1.bf16.msra.mxu0 0
    %710 = vmatprep.subr.bf16.mxu0 0
    %711 = vmatpush1.bf16.msra.mxu0 0
    %712 = vmatprep.subr.bf16.mxu0 0
    %713 = vmatpush1.bf16.msra.mxu0 0
    %714 = vmatprep.subr.bf16.mxu0 0
    %715 = vmatpush1.bf16.msra.mxu0 0
    %716 = vmatprep.subr.bf16.mxu0 0
    %717 = vmatpush1.bf16.msra.mxu0 0
    %718 = vmatprep.subr.bf16.mxu0 0
    %719 = vmatpush1.bf16.msra.mxu0 0
    %720 = vmatprep.subr.bf16.mxu0 0
    %721 = vmatpush1.bf16.msra.mxu0 0
    %722 = vmatprep.subr.bf16.mxu0 0
    %723 = vmatpush1.bf16.msra.mxu0 0
    %724 = vmatprep.subr.bf16.mxu0 0
    %725 = vmatpush1.bf16.msra.mxu0 0
    %726 = vmatprep.subr.bf16.mxu0 0
    %727 = vmatpush1.bf16.msra.mxu0 0
    %728 = vmatprep.subr.bf16.mxu0 0
    %729 = vmatpush1.bf16.msra.mxu0 0
    %730 = vmatprep.subr.bf16.mxu0 0
    %731 = vmatpush1.bf16.msra.mxu0 0
    %732 = vmatprep.subr.bf16.mxu0 0
    %733 = vmatpush1.bf16.msra.mxu0 0
    %734 = vmatprep.subr.bf16.mxu0 0
    %735 = vmatpush1.bf16.msra.mxu0 0
    %736 = vmatprep.mubr.bf16.mxu0 0
    %737 = vmatmul.mubr.bf16.gmra.mrb[0].mxu0 %v695
    %v738 = vpop.f32.mrb[0].mxu0
    %v739 = vadd.f32 0.0, %v738
    %v740 = vpop.f32.mrb[0].mxu0
    %v741 = vpop.f32.mrb[0].mxu0
    %v742 = vadd.f32 0.0, %v741
    %v743 = vpop.f32.mrb[0].mxu0
    %744 = vmatprep.mubr.bf16.mxu0 0
    %745 = vmatmul.mubr.bf16.gmra.mrb[0].mxu0 %v698
    %v746 = vpop.f32.mrb[0].mxu0
    %v747 = vadd.f32 0.0, %v746
    %v748 = vpop.f32.mrb[0].mxu0
    %v749 = vpop.f32.mrb[0].mxu0
    %v750 = vadd.f32 0.0, %v749
    %v751 = vpop.f32.mrb[0].mxu0
    %752 = vdwg.mxu0
    %v754 = vsel %vm190, %v437, 0
    %v757 = vsel %vm190, %v438, 0
    %v760 = vsel %vm700, %v439, 0
    %762 = vmatprep.subr.bf16.mxu0 0
    %763 = vmatpush1.bf16.msra.mxu0 %v760
    %764 = vmatprep.subr.bf16.mxu0 0
    %765 = vmatpush1.bf16.msra.mxu0 0
    %766 = vmatprep.subr.bf16.mxu0 0
    %767 = vmatpush1.bf16.msra.mxu0 0
    %768 = vmatprep.subr.bf16.mxu0 0
    %769 = vmatpush1.bf16.msra.mxu0 0
    %770 = vmatprep.subr.bf16.mxu0 0
    %771 = vmatpush1.bf16.msra.mxu0 0
    %772 = vmatprep.subr.bf16.mxu0 0
    %773 = vmatpush1.bf16.msra.mxu0 0
    %774 = vmatprep.subr.bf16.mxu0 0
    %775 = vmatpush1.bf16.msra.mxu0 0
    %776 = vmatprep.subr.bf16.mxu0 0
    %777 = vmatpush1.bf16.msra.mxu0 0
    %778 = vmatprep.subr.bf16.mxu0 0
    %779 = vmatpush1.bf16.msra.mxu0 0
    %780 = vmatprep.subr.bf16.mxu0 0
    %781 = vmatpush1.bf16.msra.mxu0 0
    %782 = vmatprep.subr.bf16.mxu0 0
    %783 = vmatpush1.bf16.msra.mxu0 0
    %784 = vmatprep.subr.bf16.mxu0 0
    %785 = vmatpush1.bf16.msra.mxu0 0
    %786 = vmatprep.subr.bf16.mxu0 0
    %787 = vmatpush1.bf16.msra.mxu0 0
    %788 = vmatprep.subr.bf16.mxu0 0
    %789 = vmatpush1.bf16.msra.mxu0 0
    %790 = vmatprep.subr.bf16.mxu0 0
    %791 = vmatpush1.bf16.msra.mxu0 0
    %792 = vmatprep.subr.bf16.mxu0 0
    %793 = vmatpush1.bf16.msra.mxu0 0
    %794 = vmatprep.mubr.bf16.mxu0 0
    %795 = vmatmul.mubr.bf16.gmra.mrb[0].mxu0 %v754
    %v796 = vpop.f32.mrb[0].mxu0
    %v797 = vadd.f32 %v739, %v796
    %v798 = vpop.f32.mrb[0].mxu0
    %v799 = vpop.f32.mrb[0].mxu0
    %v800 = vadd.f32 %v742, %v799
    %v801 = vpop.f32.mrb[0].mxu0
    %802 = vmatprep.mubr.bf16.mxu0 0
    %803 = vmatmul.mubr.bf16.gmra.mrb[0].mxu0 %v757
    %v804 = vpop.f32.mrb[0].mxu0
    %v805 = vadd.f32 %v747, %v804
    %v806 = vpop.f32.mrb[0].mxu0
    %v807 = vpop.f32.mrb[0].mxu0
    %v808 = vadd.f32 %v750, %v807
    %v809 = vpop.f32.mrb[0].mxu0
    %810 = vdwg.mxu0
    %811 = vrot.lane.b32.xlu0 %v154, 112
    %v812 = vpop.permute.xlu0 %811
    %813 = vrot.lane.b32.xlu0 %v154, 80
    %v814 = vpop.permute.xlu0 %813
    %v816 = vsel %vm190, %v812, 0
    %v819 = vsel %vm190, %v814, 0
    %821 = vmatprep.subr.bf16.mxu0 0
    %822 = vmatpush1.bf16.xpose.msra.mxu0 %v819
    %823 = vmatprep.subr.bf16.mxu0 0
    %824 = vmatpush1.bf16.xpose.msra.mxu0 0
    %825 = vmatprep.subr.bf16.mxu0 0
    %826 = vmatpush1.bf16.xpose.msra.mxu0 0
    %827 = vmatprep.subr.bf16.mxu0 0
    %828 = vmatpush1.bf16.xpose.msra.mxu0 0
    %829 = vmatprep.subr.bf16.mxu0 0
    %830 = vmatpush1.bf16.xpose.msra.mxu0 0
    %831 = vmatprep.subr.bf16.mxu0 0
    %832 = vmatpush1.bf16.xpose.msra.mxu0 0
    %833 = vmatprep.subr.bf16.mxu0 0
    %834 = vmatpush1.bf16.xpose.msra.mxu0 0
    %835 = vmatprep.subr.bf16.mxu0 0
    %836 = vmatpush1.bf16.xpose.msra.mxu0 0
    %837 = vmatprep.subr.bf16.mxu0 0
    %838 = vmatpush1.bf16.xpose.msra.mxu0 0
    %839 = vmatprep.subr.bf16.mxu0 0
    %840 = vmatpush1.bf16.xpose.msra.mxu0 0
    %841 = vmatprep.subr.bf16.mxu0 0
    %842 = vmatpush1.bf16.xpose.msra.mxu0 0
    %843 = vmatprep.subr.bf16.mxu0 0
    %844 = vmatpush1.bf16.xpose.msra.mxu0 0
    %845 = vmatprep.subr.bf16.mxu0 0
    %846 = vmatpush1.bf16.xpose.msra.mxu0 0
    %847 = vmatprep.subr.bf16.mxu0 0
    %848 = vmatpush1.bf16.xpose.msra.mxu0 0
    %849 = vmatprep.subr.bf16.mxu0 0
    %850 = vmatpush1.bf16.xpose.msra.mxu0 0
    %851 = vmatprep.subr.bf16.mxu0 0
    %852 = vmatpush1.bf16.xpose.msra.mxu0 0
    %853 = vmatprep.mubr.bf16.mxu0 0
    %854 = vmatmul.mubr.bf16.gmra.mrb[0].mxu0 %v816
    %v855 = vpop.f32.mrb[0].mxu0
    %v856 = vadd.f32 0.0, %v855
    %v857 = vpop.f32.mrb[0].mxu0
    %v858 = vpop.f32.mrb[0].mxu0
    %v859 = vadd.f32 0.0, %v858
    %v860 = vpop.f32.mrb[0].mxu0
    %861 = vdwg.mxu0
    %862 = vrot.lane.b32.xlu0 %v155, 112
    %v863 = vpop.permute.xlu0 %862
    %864 = vrot.lane.b32.xlu0 %v155, 80
    %v865 = vpop.permute.xlu0 %864
    %v867 = vsel %vm190, %v863, 0
    %v870 = vsel %vm190, %v865, 0
    %872 = vmatprep.subr.bf16.mxu0 0
    %873 = vmatpush1.bf16.xpose.msra.mxu0 %v870
    %874 = vmatprep.subr.bf16.mxu0 0
    %875 = vmatpush1.bf16.xpose.msra.mxu0 0
    %876 = vmatprep.subr.bf16.mxu0 0
    %877 = vmatpush1.bf16.xpose.msra.mxu0 0
    %878 = vmatprep.subr.bf16.mxu0 0
    %879 = vmatpush1.bf16.xpose.msra.mxu0 0
    %880 = vmatprep.subr.bf16.mxu0 0
    %881 = vmatpush1.bf16.xpose.msra.mxu0 0
    %882 = vmatprep.subr.bf16.mxu0 0
    %883 = vmatpush1.bf16.xpose.msra.mxu0 0
    %884 = vmatprep.subr.bf16.mxu0 0
    %885 = vmatpush1.bf16.xpose.msra.mxu0 0
    %886 = vmatprep.subr.bf16.mxu0 0
    %887 = vmatpush1.bf16.xpose.msra.mxu0 0
    %888 = vmatprep.subr.bf16.mxu0 0
    %889 = vmatpush1.bf16.xpose.msra.mxu0 0
    %890 = vmatprep.subr.bf16.mxu0 0
    %891 = vmatpush1.bf16.xpose.msra.mxu0 0
    %892 = vmatprep.subr.bf16.mxu0 0
    %893 = vmatpush1.bf16.xpose.msra.mxu0 0
    %894 = vmatprep.subr.bf16.mxu0 0
    %895 = vmatpush1.bf16.xpose.msra.mxu0 0
    %896 = vmatprep.subr.bf16.mxu0 0
    %897 = vmatpush1.bf16.xpose.msra.mxu0 0
    %898 = vmatprep.subr.bf16.mxu0 0
    %899 = vmatpush1.bf16.xpose.msra.mxu0 0
    %900 = vmatprep.subr.bf16.mxu0 0
    %901 = vmatpush1.bf16.xpose.msra.mxu0 0
    %902 = vmatprep.subr.bf16.mxu0 0
    %903 = vmatpush1.bf16.xpose.msra.mxu0 0
    %904 = vmatprep.mubr.bf16.mxu0 0
    %905 = vmatmul.mubr.bf16.gmra.mrb[0].mxu0 %v867
    %v906 = vpop.f32.mrb[0].mxu0
    %v907 = vadd.f32 0.0, %v906
    %v908 = vpop.f32.mrb[0].mxu0
    %v909 = vpop.f32.mrb[0].mxu0
    %v910 = vadd.f32 0.0, %v909
    %v911 = vpop.f32.mrb[0].mxu0
    %912 = vdwg.mxu0
    %v913 = vmul.f32 %v856, 0.35355338
    %v914 = vmul.f32 %v859, 0.35355338
    %v915 = vmul.f32 %v907, 0.35355338
    %v916 = vmul.f32 %v910, 0.35355338
    %v917 = vsel %vm183, -1e+30, %v913
    %v918 = vsel %vm184, -1e+30, %v914
    %v919 = vsel %vm185, -1e+30, %v915
    %v920 = vsel %vm186, -1e+30, %v916
    %v921 = vsel %vm296, %v917, -inf
    %922 = vmax.xlane.f32.xlu0 %v921
    %v923 = vpop.xlane.xlu0 %922
    %v924 = vsel %vm296, %v918, -inf
    %925 = vmax.xlane.f32.xlu0 %v924
    %v926 = vpop.xlane.xlu0 %925
    %v927 = vsel %vm296, %v919, -inf
    %928 = vmax.xlane.f32.xlu0 %v927
    %v929 = vpop.xlane.xlu0 %928
    %v930 = vsel %vm296, %v920, -inf
    %931 = vmax.xlane.f32.xlu0 %v930
    %v932 = vpop.xlane.xlu0 %931
    %v933 = vsub.f32 %v917, %v923
    %v934 = vsub.f32 %v918, %v926
    %v935 = vsub.f32 %v919, %v929
    %v936 = vsub.f32 %v920, %v932
    %v937 = vmul.f32 %v933, 1.442695
    %v938 = vpow.pop %v937
    %v939 = vmul.f32 %v934, 1.442695
    %v940 = vpow.pop %v939
    %v941 = vmul.f32 %v935, 1.442695
    %v942 = vpow.pop %v941
    %v943 = vmul.f32 %v936, 1.442695
    %v944 = vpow.pop %v943
    %v945 = vsel %vm296, %v938, 0.0
    %946 = vadd.xlane.f32.xlu0 %v945
    %v947 = vpop.xlane.xlu0 %946
    %v948 = vsel %vm296, %v940, 0.0
    %949 = vadd.xlane.f32.xlu0 %v948
    %v950 = vpop.xlane.xlu0 %949
    %v951 = vsel %vm296, %v942, 0.0
    %952 = vadd.xlane.f32.xlu0 %v951
    %v953 = vpop.xlane.xlu0 %952
    %v954 = vsel %vm296, %v944, 0.0
    %955 = vadd.xlane.f32.xlu0 %v954
    %v956 = vpop.xlane.xlu0 %955
    %v957 = vrcp.pop %v947
    %v958 = vrcp.pop %v950
    %v959 = vrcp.pop %v953
    %v960 = vrcp.pop %v956
    %v961 = vmul.f32 %v938, %v957
    %v962 = vmul.f32 %v940, %v958
    %v963 = vmul.f32 %v942, %v959
    %v964 = vmul.f32 %v944, %v960
    %v965 = vpack.c.bf16 %v962, %v961
    %v966 = vpack.c.bf16 %v964, %v963
    %967 = vrot.lane.b32.xlu0 %v154, 48
    %v968 = vpop.permute.xlu0 %967
    %v971 = vsel %vm296, %v965, 0
    %973 = vmatprep.subr.bf16.mxu0 0
    %974 = vmatpush1.bf16.msra.mxu0 %v968
    %975 = vmatprep.subr.bf16.mxu0 0
    %976 = vmatpush1.bf16.msra.mxu0 0
    %977 = vmatprep.subr.bf16.mxu0 0
    %978 = vmatpush1.bf16.msra.mxu0 0
    %979 = vmatprep.subr.bf16.mxu0 0
    %980 = vmatpush1.bf16.msra.mxu0 0
    %981 = vmatprep.subr.bf16.mxu0 0
    %982 = vmatpush1.bf16.msra.mxu0 0
    %983 = vmatprep.subr.bf16.mxu0 0
    %984 = vmatpush1.bf16.msra.mxu0 0
    %985 = vmatprep.subr.bf16.mxu0 0
    %986 = vmatpush1.bf16.msra.mxu0 0
    %987 = vmatprep.subr.bf16.mxu0 0
    %988 = vmatpush1.bf16.msra.mxu0 0
    %989 = vmatprep.subr.bf16.mxu0 0
    %990 = vmatpush1.bf16.msra.mxu0 0
    %991 = vmatprep.subr.bf16.mxu0 0
    %992 = vmatpush1.bf16.msra.mxu0 0
    %993 = vmatprep.subr.bf16.mxu0 0
    %994 = vmatpush1.bf16.msra.mxu0 0
    %995 = vmatprep.subr.bf16.mxu0 0
    %996 = vmatpush1.bf16.msra.mxu0 0
    %997 = vmatprep.subr.bf16.mxu0 0
    %998 = vmatpush1.bf16.msra.mxu0 0
    %999 = vmatprep.subr.bf16.mxu0 0
    %1000 = vmatpush1.bf16.msra.mxu0 0
    %1001 = vmatprep.subr.bf16.mxu0 0
    %1002 = vmatpush1.bf16.msra.mxu0 0
    %1003 = vmatprep.subr.bf16.mxu0 0
    %1004 = vmatpush1.bf16.msra.mxu0 0
    %1005 = vmatprep.mubr.bf16.mxu0 0
    %1006 = vmatmul.mubr.bf16.gmra.mrb[0].mxu0 %v971
    %v1007 = vpop.f32.mrb[0].mxu0
    %v1008 = vadd.f32 0.0, %v1007
    %v1009 = vpop.f32.mrb[0].mxu0
    %v1010 = vpop.f32.mrb[0].mxu0
    %v1011 = vadd.f32 0.0, %v1010
    %v1012 = vpop.f32.mrb[0].mxu0
    %1013 = vdwg.mxu0
    %1014 = vrot.lane.b32.xlu0 %v155, 48
    %v1015 = vpop.permute.xlu0 %1014
    %v1018 = vsel %vm296, %v966, 0
    %1020 = vmatprep.subr.bf16.mxu0 0
    %1021 = vmatpush1.bf16.msra.mxu0 %v1015
    %1022 = vmatprep.subr.bf16.mxu0 0
    %1023 = vmatpush1.bf16.msra.mxu0 0
    %1024 = vmatprep.subr.bf16.mxu0 0
    %1025 = vmatpush1.bf16.msra.mxu0 0
    %1026 = vmatprep.subr.bf16.mxu0 0
    %1027 = vmatpush1.bf16.msra.mxu0 0
    %1028 = vmatprep.subr.bf16.mxu0 0
    %1029 = vmatpush1.bf16.msra.mxu0 0
    %1030 = vmatprep.subr.bf16.mxu0 0
    %1031 = vmatpush1.bf16.msra.mxu0 0
    %1032 = vmatprep.subr.bf16.mxu0 0
    %1033 = vmatpush1.bf16.msra.mxu0 0
    %1034 = vmatprep.subr.bf16.mxu0 0
    %1035 = vmatpush1.bf16.msra.mxu0 0
    %1036 = vmatprep.subr.bf16.mxu0 0
    %1037 = vmatpush1.bf16.msra.mxu0 0
    %1038 = vmatprep.subr.bf16.mxu0 0
    %1039 = vmatpush1.bf16.msra.mxu0 0
    %1040 = vmatprep.subr.bf16.mxu0 0
    %1041 = vmatpush1.bf16.msra.mxu0 0
    %1042 = vmatprep.subr.bf16.mxu0 0
    %1043 = vmatpush1.bf16.msra.mxu0 0
    %1044 = vmatprep.subr.bf16.mxu0 0
    %1045 = vmatpush1.bf16.msra.mxu0 0
    %1046 = vmatprep.subr.bf16.mxu0 0
    %1047 = vmatpush1.bf16.msra.mxu0 0
    %1048 = vmatprep.subr.bf16.mxu0 0
    %1049 = vmatpush1.bf16.msra.mxu0 0
    %1050 = vmatprep.subr.bf16.mxu0 0
    %1051 = vmatpush1.bf16.msra.mxu0 0
    %1052 = vmatprep.mubr.bf16.mxu0 0
    %1053 = vmatmul.mubr.bf16.gmra.mrb[0].mxu0 %v1018
    %v1054 = vpop.f32.mrb[0].mxu0
    %v1055 = vadd.f32 0.0, %v1054
    %v1056 = vpop.f32.mrb[0].mxu0
    %v1057 = vpop.f32.mrb[0].mxu0
    %v1058 = vadd.f32 0.0, %v1057
    %v1059 = vpop.f32.mrb[0].mxu0
    %1060 = vdwg.mxu0
    %v1061 = vpack.c.bf16 %v1011, %v1008
    %v1062 = vpack.c.bf16 %v1058, %v1055
    %s1063 = scalar_lea.vmem %s4, 8
    %v1064 = vld [vmem:[%s1063] sm:$0xf]
    %v1066 = vsel %vm190, %v1061, 0
    %v1069 = vsel %vm190, %v1062, 0
    %v1072 = vsel %vm700, %v1064, 0
    %1074 = vmatprep.subr.bf16.mxu0 0
    %1075 = vmatpush1.bf16.msra.mxu0 %v1072
    %1076 = vmatprep.subr.bf16.mxu0 0
    %1077 = vmatpush1.bf16.msra.mxu0 0
    %1078 = vmatprep.subr.bf16.mxu0 0
    %1079 = vmatpush1.bf16.msra.mxu0 0
    %1080 = vmatprep.subr.bf16.mxu0 0
    %1081 = vmatpush1.bf16.msra.mxu0 0
    %1082 = vmatprep.subr.bf16.mxu0 0
    %1083 = vmatpush1.bf16.msra.mxu0 0
    %1084 = vmatprep.subr.bf16.mxu0 0
    %1085 = vmatpush1.bf16.msra.mxu0 0
    %1086 = vmatprep.subr.bf16.mxu0 0
    %1087 = vmatpush1.bf16.msra.mxu0 0
    %1088 = vmatprep.subr.bf16.mxu0 0
    %1089 = vmatpush1.bf16.msra.mxu0 0
    %1090 = vmatprep.subr.bf16.mxu0 0
    %1091 = vmatpush1.bf16.msra.mxu0 0
    %1092 = vmatprep.subr.bf16.mxu0 0
    %1093 = vmatpush1.bf16.msra.mxu0 0
    %1094 = vmatprep.subr.bf16.mxu0 0
    %1095 = vmatpush1.bf16.msra.mxu0 0
    %1096 = vmatprep.subr.bf16.mxu0 0
    %1097 = vmatpush1.bf16.msra.mxu0 0
    %1098 = vmatprep.subr.bf16.mxu0 0
    %1099 = vmatpush1.bf16.msra.mxu0 0
    %1100 = vmatprep.subr.bf16.mxu0 0
    %1101 = vmatpush1.bf16.msra.mxu0 0
    %1102 = vmatprep.subr.bf16.mxu0 0
    %1103 = vmatpush1.bf16.msra.mxu0 0
    %1104 = vmatprep.subr.bf16.mxu0 0
    %1105 = vmatpush1.bf16.msra.mxu0 0
    %1106 = vmatprep.mubr.bf16.mxu0 0
    %1107 = vmatmul.mubr.bf16.gmra.mrb[0].mxu0 %v1066
    %v1108 = vpop.f32.mrb[0].mxu0
    %v1109 = vadd.f32 0.0, %v1108
    %v1110 = vpop.f32.mrb[0].mxu0
    %v1111 = vpop.f32.mrb[0].mxu0
    %v1112 = vadd.f32 0.0, %v1111
    %v1113 = vpop.f32.mrb[0].mxu0
    %1114 = vmatprep.mubr.bf16.mxu0 0
    %1115 = vmatmul.mubr.bf16.gmra.mrb[0].mxu0 %v1069
    %v1116 = vpop.f32.mrb[0].mxu0
    %v1117 = vadd.f32 0.0, %v1116
    %v1118 = vpop.f32.mrb[0].mxu0
    %v1119 = vpop.f32.mrb[0].mxu0
    %v1120 = vadd.f32 0.0, %v1119
    %v1121 = vpop.f32.mrb[0].mxu0
    %1122 = vdwg.mxu0
    %v1123 = vadd.f32 %v797, %v1109
    %v1124 = vadd.f32 %v800, %v1112
    %v1125 = vadd.f32 %v805, %v1117
    %v1126 = vadd.f32 %v808, %v1120
    %1127 = vrot.lane.b32.xlu0 %v154, 104
    %v1128 = vpop.permute.xlu0 %1127
    %1129 = vrot.lane.b32.xlu0 %v154, 72
    %v1130 = vpop.permute.xlu0 %1129
    %v1132 = vsel %vm190, %v1128, 0
    %v1135 = vsel %vm190, %v1130, 0
    %1137 = vmatprep.subr.bf16.mxu0 0
    %1138 = vmatpush1.bf16.xpose.msra.mxu0 %v1135
    %1139 = vmatprep.subr.bf16.mxu0 0
    %1140 = vmatpush1.bf16.xpose.msra.mxu0 0
    %1141 = vmatprep.subr.bf16.mxu0 0
    %1142 = vmatpush1.bf16.xpose.msra.mxu0 0
    %1143 = vmatprep.subr.bf16.mxu0 0
    %1144 = vmatpush1.bf16.xpose.msra.mxu0 0
    %1145 = vmatprep.subr.bf16.mxu0 0
    %1146 = vmatpush1.bf16.xpose.msra.mxu0 0
    %1147 = vmatprep.subr.bf16.mxu0 0
    %1148 = vmatpush1.bf16.xpose.msra.mxu0 0
    %1149 = vmatprep.subr.bf16.mxu0 0
    %1150 = vmatpush1.bf16.xpose.msra.mxu0 0
    %1151 = vmatprep.subr.bf16.mxu0 0
    %1152 = vmatpush1.bf16.xpose.msra.mxu0 0
    %1153 = vmatprep.subr.bf16.mxu0 0
    %1154 = vmatpush1.bf16.xpose.msra.mxu0 0
    %1155 = vmatprep.subr.bf16.mxu0 0
    %1156 = vmatpush1.bf16.xpose.msra.mxu0 0
    %1157 = vmatprep.subr.bf16.mxu0 0
    %1158 = vmatpush1.bf16.xpose.msra.mxu0 0
    %1159 = vmatprep.subr.bf16.mxu0 0
    %1160 = vmatpush1.bf16.xpose.msra.mxu0 0
    %1161 = vmatprep.subr.bf16.mxu0 0
    %1162 = vmatpush1.bf16.xpose.msra.mxu0 0
    %1163 = vmatprep.subr.bf16.mxu0 0
    %1164 = vmatpush1.bf16.xpose.msra.mxu0 0
    %1165 = vmatprep.subr.bf16.mxu0 0
    %1166 = vmatpush1.bf16.xpose.msra.mxu0 0
    %1167 = vmatprep.subr.bf16.mxu0 0
    %1168 = vmatpush1.bf16.xpose.msra.mxu0 0
    %1169 = vmatprep.mubr.bf16.mxu0 0
    %1170 = vmatmul.mubr.bf16.gmra.mrb[0].mxu0 %v1132
    %v1171 = vpop.f32.mrb[0].mxu0
    %v1172 = vadd.f32 0.0, %v1171
    %v1173 = vpop.f32.mrb[0].mxu0
    %v1174 = vpop.f32.mrb[0].mxu0
    %v1175 = vadd.f32 0.0, %v1174
    %v1176 = vpop.f32.mrb[0].mxu0
    %1177 = vdwg.mxu0
    %1178 = vrot.lane.b32.xlu0 %v155, 104
    %v1179 = vpop.permute.xlu0 %1178
    %1180 = vrot.lane.b32.xlu0 %v155, 72
    %v1181 = vpop.permute.xlu0 %1180
    %v1183 = vsel %vm190, %v1179, 0
    %v1186 = vsel %vm190, %v1181, 0
    %1188 = vmatprep.subr.bf16.mxu0 0
    %1189 = vmatpush1.bf16.xpose.msra.mxu0 %v1186
    %1190 = vmatprep.subr.bf16.mxu0 0
    %1191 = vmatpush1.bf16.xpose.msra.mxu0 0
    %1192 = vmatprep.subr.bf16.mxu0 0
    %1193 = vmatpush1.bf16.xpose.msra.mxu0 0
    %1194 = vmatprep.subr.bf16.mxu0 0
    %1195 = vmatpush1.bf16.xpose.msra.mxu0 0
    %1196 = vmatprep.subr.bf16.mxu0 0
    %1197 = vmatpush1.bf16.xpose.msra.mxu0 0
    %1198 = vmatprep.subr.bf16.mxu0 0
    %1199 = vmatpush1.bf16.xpose.msra.mxu0 0
    %1200 = vmatprep.subr.bf16.mxu0 0
    %1201 = vmatpush1.bf16.xpose.msra.mxu0 0
    %1202 = vmatprep.subr.bf16.mxu0 0
    %1203 = vmatpush1.bf16.xpose.msra.mxu0 0
    %1204 = vmatprep.subr.bf16.mxu0 0
    %1205 = vmatpush1.bf16.xpose.msra.mxu0 0
    %1206 = vmatprep.subr.bf16.mxu0 0
    %1207 = vmatpush1.bf16.xpose.msra.mxu0 0
    %1208 = vmatprep.subr.bf16.mxu0 0
    %1209 = vmatpush1.bf16.xpose.msra.mxu0 0
    %1210 = vmatprep.subr.bf16.mxu0 0
    %1211 = vmatpush1.bf16.xpose.msra.mxu0 0
    %1212 = vmatprep.subr.bf16.mxu0 0
    %1213 = vmatpush1.bf16.xpose.msra.mxu0 0
    %1214 = vmatprep.subr.bf16.mxu0 0
    %1215 = vmatpush1.bf16.xpose.msra.mxu0 0
    %1216 = vmatprep.subr.bf16.mxu0 0
    %1217 = vmatpush1.bf16.xpose.msra.mxu0 0
    %1218 = vmatprep.subr.bf16.mxu0 0
    %1219 = vmatpush1.bf16.xpose.msra.mxu0 0
    %1220 = vmatprep.mubr.bf16.mxu0 0
    %1221 = vmatmul.mubr.bf16.gmra.mrb[0].mxu0 %v1183
    %v1222 = vpop.f32.mrb[0].mxu0
    %v1223 = vadd.f32 0.0, %v1222
    %v1224 = vpop.f32.mrb[0].mxu0
    %v1225 = vpop.f32.mrb[0].mxu0
    %v1226 = vadd.f32 0.0, %v1225
    %v1227 = vpop.f32.mrb[0].mxu0
    %1228 = vdwg.mxu0
    %v1229 = vmul.f32 %v1172, 0.35355338
    %v1230 = vmul.f32 %v1175, 0.35355338
    %v1231 = vmul.f32 %v1223, 0.35355338
    %v1232 = vmul.f32 %v1226, 0.35355338
    %v1233 = vsel %vm183, -1e+30, %v1229
    %v1234 = vsel %vm184, -1e+30, %v1230
    %v1235 = vsel %vm185, -1e+30, %v1231
    %v1236 = vsel %vm186, -1e+30, %v1232
    %v1237 = vsel %vm296, %v1233, -inf
    %1238 = vmax.xlane.f32.xlu0 %v1237
    %v1239 = vpop.xlane.xlu0 %1238
    %v1240 = vsel %vm296, %v1234, -inf
    %1241 = vmax.xlane.f32.xlu0 %v1240
    %v1242 = vpop.xlane.xlu0 %1241
    %v1243 = vsel %vm296, %v1235, -inf
    %1244 = vmax.xlane.f32.xlu0 %v1243
    %v1245 = vpop.xlane.xlu0 %1244
    %v1246 = vsel %vm296, %v1236, -inf
    %1247 = vmax.xlane.f32.xlu0 %v1246
    %v1248 = vpop.xlane.xlu0 %1247
    %v1249 = vsub.f32 %v1233, %v1239
    %v1250 = vsub.f32 %v1234, %v1242
    %v1251 = vsub.f32 %v1235, %v1245
    %v1252 = vsub.f32 %v1236, %v1248
    %v1253 = vmul.f32 %v1249, 1.442695
    %v1254 = vpow.pop %v1253
    %v1255 = vmul.f32 %v1250, 1.442695
    %v1256 = vpow.pop %v1255
    %v1257 = vmul.f32 %v1251, 1.442695
    %v1258 = vpow.pop %v1257
    %v1259 = vmul.f32 %v1252, 1.442695
    %v1260 = vpow.pop %v1259
    %v1261 = vsel %vm296, %v1254, 0.0
    %1262 = vadd.xlane.f32.xlu0 %v1261
    %v1263 = vpop.xlane.xlu0 %1262
    %v1264 = vsel %vm296, %v1256, 0.0
    %1265 = vadd.xlane.f32.xlu0 %v1264
    %v1266 = vpop.xlane.xlu0 %1265
    %v1267 = vsel %vm296, %v1258, 0.0
    %1268 = vadd.xlane.f32.xlu0 %v1267
    %v1269 = vpop.xlane.xlu0 %1268
    %v1270 = vsel %vm296, %v1260, 0.0
    %1271 = vadd.xlane.f32.xlu0 %v1270
    %v1272 = vpop.xlane.xlu0 %1271
    %v1273 = vrcp.pop %v1263
    %v1274 = vrcp.pop %v1266
    %v1275 = vrcp.pop %v1269
    %v1276 = vrcp.pop %v1272
    %v1277 = vmul.f32 %v1254, %v1273
    %v1278 = vmul.f32 %v1256, %v1274
    %v1279 = vmul.f32 %v1258, %v1275
    %v1280 = vmul.f32 %v1260, %v1276
    %v1281 = vpack.c.bf16 %v1278, %v1277
    %v1282 = vpack.c.bf16 %v1280, %v1279
    %1283 = vrot.lane.b32.xlu0 %v154, 40
    %v1284 = vpop.permute.xlu0 %1283
    %v1287 = vsel %vm296, %v1281, 0
    %1289 = vmatprep.subr.bf16.mxu0 0
    %1290 = vmatpush1.bf16.msra.mxu0 %v1284
    %1291 = vmatprep.subr.bf16.mxu0 0
    %1292 = vmatpush1.bf16.msra.mxu0 0
    %1293 = vmatprep.subr.bf16.mxu0 0
    %1294 = vmatpush1.bf16.msra.mxu0 0
    %1295 = vmatprep.subr.bf16.mxu0 0
    %1296 = vmatpush1.bf16.msra.mxu0 0
    %1297 = vmatprep.subr.bf16.mxu0 0
    %1298 = vmatpush1.bf16.msra.mxu0 0
    %1299 = vmatprep.subr.bf16.mxu0 0
    %1300 = vmatpush1.bf16.msra.mxu0 0
    %1301 = vmatprep.subr.bf16.mxu0 0
    %1302 = vmatpush1.bf16.msra.mxu0 0
    %1303 = vmatprep.subr.bf16.mxu0 0
    %1304 = vmatpush1.bf16.msra.mxu0 0
    %1305 = vmatprep.subr.bf16.mxu0 0
    %1306 = vmatpush1.bf16.msra.mxu0 0
    %1307 = vmatprep.subr.bf16.mxu0 0
    %1308 = vmatpush1.bf16.msra.mxu0 0
    %1309 = vmatprep.subr.bf16.mxu0 0
    %1310 = vmatpush1.bf16.msra.mxu0 0
    %1311 = vmatprep.subr.bf16.mxu0 0
    %1312 = vmatpush1.bf16.msra.mxu0 0
    %1313 = vmatprep.subr.bf16.mxu0 0
    %1314 = vmatpush1.bf16.msra.mxu0 0
    %1315 = vmatprep.subr.bf16.mxu0 0
    %1316 = vmatpush1.bf16.msra.mxu0 0
    %1317 = vmatprep.subr.bf16.mxu0 0
    %1318 = vmatpush1.bf16.msra.mxu0 0
    %1319 = vmatprep.subr.bf16.mxu0 0
    %1320 = vmatpush1.bf16.msra.mxu0 0
    %1321 = vmatprep.mubr.bf16.mxu0 0
    %1322 = vmatmul.mubr.bf16.gmra.mrb[0].mxu0 %v1287
    %v1323 = vpop.f32.mrb[0].mxu0
    %v1324 = vadd.f32 0.0, %v1323
    %v1325 = vpop.f32.mrb[0].mxu0
    %v1326 = vpop.f32.mrb[0].mxu0
    %v1327 = vadd.f32 0.0, %v1326
    %v1328 = vpop.f32.mrb[0].mxu0
    %1329 = vdwg.mxu0
    %1330 = vrot.lane.b32.xlu0 %v155, 40
    %v1331 = vpop.permute.xlu0 %1330
    %v1334 = vsel %vm296, %v1282, 0
    %1336 = vmatprep.subr.bf16.mxu0 0
    %1337 = vmatpush1.bf16.msra.mxu0 %v1331
    %1338 = vmatprep.subr.bf16.mxu0 0
    %1339 = vmatpush1.bf16.msra.mxu0 0
    %1340 = vmatprep.subr.bf16.mxu0 0
    %1341 = vmatpush1.bf16.msra.mxu0 0
    %1342 = vmatprep.subr.bf16.mxu0 0
    %1343 = vmatpush1.bf16.msra.mxu0 0
    %1344 = vmatprep.subr.bf16.mxu0 0
    %1345 = vmatpush1.bf16.msra.mxu0 0
    %1346 = vmatprep.subr.bf16.mxu0 0
    %1347 = vmatpush1.bf16.msra.mxu0 0
    %1348 = vmatprep.subr.bf16.mxu0 0
    %1349 = vmatpush1.bf16.msra.mxu0 0
    %1350 = vmatprep.subr.bf16.mxu0 0
    %1351 = vmatpush1.bf16.msra.mxu0 0
    %1352 = vmatprep.subr.bf16.mxu0 0
    %1353 = vmatpush1.bf16.msra.mxu0 0
    %1354 = vmatprep.subr.bf16.mxu0 0
    %1355 = vmatpush1.bf16.msra.mxu0 0
    %1356 = vmatprep.subr.bf16.mxu0 0
    %1357 = vmatpush1.bf16.msra.mxu0 0
    %1358 = vmatprep.subr.bf16.mxu0 0
    %1359 = vmatpush1.bf16.msra.mxu0 0
    %1360 = vmatprep.subr.bf16.mxu0 0
    %1361 = vmatpush1.bf16.msra.mxu0 0
    %1362 = vmatprep.subr.bf16.mxu0 0
    %1363 = vmatpush1.bf16.msra.mxu0 0
    %1364 = vmatprep.subr.bf16.mxu0 0
    %1365 = vmatpush1.bf16.msra.mxu0 0
    %1366 = vmatprep.subr.bf16.mxu0 0
    %1367 = vmatpush1.bf16.msra.mxu0 0
    %1368 = vmatprep.mubr.bf16.mxu0 0
    %1369 = vmatmul.mubr.bf16.gmra.mrb[0].mxu0 %v1334
    %v1370 = vpop.f32.mrb[0].mxu0
    %v1371 = vadd.f32 0.0, %v1370
    %v1372 = vpop.f32.mrb[0].mxu0
    %v1373 = vpop.f32.mrb[0].mxu0
    %v1374 = vadd.f32 0.0, %v1373
    %v1375 = vpop.f32.mrb[0].mxu0
    %1376 = vdwg.mxu0
    %v1377 = vpack.c.bf16 %v1327, %v1324
    %v1378 = vpack.c.bf16 %v1374, %v1371
    %s1379 = scalar_lea.vmem %s4, 12
    %v1380 = vld [vmem:[%s1379] sm:$0xf]
    %v1382 = vsel %vm190, %v1377, 0
    %v1385 = vsel %vm190, %v1378, 0
    %v1388 = vsel %vm700, %v1380, 0
    %1390 = vmatprep.subr.bf16.mxu0 0
    %1391 = vmatpush1.bf16.msra.mxu0 %v1388
    %1392 = vmatprep.subr.bf16.mxu0 0
    %1393 = vmatpush1.bf16.msra.mxu0 0
    %1394 = vmatprep.subr.bf16.mxu0 0
    %1395 = vmatpush1.bf16.msra.mxu0 0
    %1396 = vmatprep.subr.bf16.mxu0 0
    %1397 = vmatpush1.bf16.msra.mxu0 0
    %1398 = vmatprep.subr.bf16.mxu0 0
    %1399 = vmatpush1.bf16.msra.mxu0 0
    %1400 = vmatprep.subr.bf16.mxu0 0
    %1401 = vmatpush1.bf16.msra.mxu0 0
    %1402 = vmatprep.subr.bf16.mxu0 0
    %1403 = vmatpush1.bf16.msra.mxu0 0
    %1404 = vmatprep.subr.bf16.mxu0 0
    %1405 = vmatpush1.bf16.msra.mxu0 0
    %1406 = vmatprep.subr.bf16.mxu0 0
    %1407 = vmatpush1.bf16.msra.mxu0 0
    %1408 = vmatprep.subr.bf16.mxu0 0
    %1409 = vmatpush1.bf16.msra.mxu0 0
    %1410 = vmatprep.subr.bf16.mxu0 0
    %1411 = vmatpush1.bf16.msra.mxu0 0
    %1412 = vmatprep.subr.bf16.mxu0 0
    %1413 = vmatpush1.bf16.msra.mxu0 0
    %1414 = vmatprep.subr.bf16.mxu0 0
    %1415 = vmatpush1.bf16.msra.mxu0 0
    %1416 = vmatprep.subr.bf16.mxu0 0
    %1417 = vmatpush1.bf16.msra.mxu0 0
    %1418 = vmatprep.subr.bf16.mxu0 0
    %1419 = vmatpush1.bf16.msra.mxu0 0
    %1420 = vmatprep.subr.bf16.mxu0 0
    %1421 = vmatpush1.bf16.msra.mxu0 0
    %1422 = vmatprep.mubr.bf16.mxu0 0
    %1423 = vmatmul.mubr.bf16.gmra.mrb[0].mxu0 %v1382
    %v1424 = vpop.f32.mrb[0].mxu0
    %v1425 = vadd.f32 0.0, %v1424
    %v1426 = vpop.f32.mrb[0].mxu0
    %v1427 = vpop.f32.mrb[0].mxu0
    %v1428 = vadd.f32 0.0, %v1427
    %v1429 = vpop.f32.mrb[0].mxu0
    %1430 = vmatprep.mubr.bf16.mxu0 0
    %1431 = vmatmul.mubr.bf16.gmra.mrb[0].mxu0 %v1385
    %v1432 = vpop.f32.mrb[0].mxu0
    %v1433 = vadd.f32 0.0, %v1432
    %v1434 = vpop.f32.mrb[0].mxu0
    %v1435 = vpop.f32.mrb[0].mxu0
    %v1436 = vadd.f32 0.0, %v1435
    %v1437 = vpop.f32.mrb[0].mxu0
    %1438 = vdwg.mxu0
    %v1439 = vadd.f32 %v1123, %v1425
    %v1440 = vadd.f32 %v1124, %v1428
    %v1441 = vadd.f32 %v1125, %v1433
    %v1442 = vadd.f32 %v1126, %v1436
    %v1443 = vld [vmem:[%s5] sm:$0x1]
    %v1445 = vlaneseq
    %v1446 = vshrl.u32 %v1445, 7
    %v1447 = vsub.s32 0, %v1446
    %v1448 = vrot.slane %v1443, %v1447
    %v1450 = vadd.f32 %v1439, %v1448
    %v1451 = vadd.f32 %v1440, %v1448
    %v1452 = vadd.f32 %v1441, %v1448
    %v1453 = vadd.f32 %v1442, %v1448
    %v1454 = vadd.f32 %v61, %v1450
    %v1455 = vadd.f32 %v62, %v1451
    %v1456 = vadd.f32 %v63, %v1452
    %v1457 = vadd.f32 %v64, %v1453
    %v1458 = vsel %vm98, %v1454, 0.0
    %1459 = vadd.xlane.f32.xlu0 %v1458
    %v1460 = vpop.xlane.xlu0 %1459
    %v1461 = vsel %vm98, %v1455, 0.0
    %1462 = vadd.xlane.f32.xlu0 %v1461
    %v1463 = vpop.xlane.xlu0 %1462
    %v1464 = vsel %vm98, %v1456, 0.0
    %1465 = vadd.xlane.f32.xlu0 %v1464
    %v1466 = vpop.xlane.xlu0 %1465
    %v1467 = vsel %vm98, %v1457, 0.0
    %1468 = vadd.xlane.f32.xlu0 %v1467
    %v1469 = vpop.xlane.xlu0 %1468
    %v1470 = vrcp.pop 32.0
    %v1471 = vmul.f32 %v1460, %v1470
    %v1472 = vmul.f32 %v1463, %v1470
    %v1473 = vmul.f32 %v1466, %v1470
    %v1474 = vmul.f32 %v1469, %v1470
    %v1475 = vsub.f32 %v1454, %v1471
    %v1476 = vsub.f32 %v1455, %v1472
    %v1477 = vsub.f32 %v1456, %v1473
    %v1478 = vsub.f32 %v1457, %v1474
    %v1479 = vmul.f32 %v1475, %v1475
    %v1480 = vmul.f32 %v1476, %v1476
    %v1481 = vmul.f32 %v1477, %v1477
    %v1482 = vmul.f32 %v1478, %v1478
    %v1483 = vsel %vm98, %v1479, 0.0
    %1484 = vadd.xlane.f32.xlu0 %v1483
    %v1485 = vpop.xlane.xlu0 %1484
    %v1486 = vsel %vm98, %v1480, 0.0
    %1487 = vadd.xlane.f32.xlu0 %v1486
    %v1488 = vpop.xlane.xlu0 %1487
    %v1489 = vsel %vm98, %v1481, 0.0
    %1490 = vadd.xlane.f32.xlu0 %v1489
    %v1491 = vpop.xlane.xlu0 %1490
    %v1492 = vsel %vm98, %v1482, 0.0
    %1493 = vadd.xlane.f32.xlu0 %v1492
    %v1494 = vpop.xlane.xlu0 %1493
    %v1495 = vmul.f32 %v1485, %v1470
    %v1496 = vmul.f32 %v1488, %v1470
    %v1497 = vmul.f32 %v1491, %v1470
    %v1498 = vmul.f32 %v1494, %v1470
    %v1499 = vadd.f32 %v1495, 1e-05
    %v1500 = vadd.f32 %v1496, 1e-05
    %v1501 = vadd.f32 %v1497, 1e-05
    %v1502 = vadd.f32 %v1498, 1e-05
    %v1503 = vrsqrt.pop %v1499
    %v1504 = vrsqrt.pop %v1500
    %v1505 = vrsqrt.pop %v1501
    %v1506 = vrsqrt.pop %v1502
    %v1507 = vmul.f32 %v1475, %v1503
    %v1508 = vmul.f32 %v1476, %v1504
    %v1509 = vmul.f32 %v1477, %v1505
    %v1510 = vmul.f32 %v1478, %v1506
    %v1511 = vld [vmem:[%s6] sm:$0x1]
    %v1513 = vlaneseq
    %v1514 = vshrl.u32 %v1513, 7
    %v1515 = vsub.s32 0, %v1514
    %v1516 = vrot.slane %v1511, %v1515
    %v1518 = vmul.f32 %v1507, %v1516
    %v1519 = vmul.f32 %v1508, %v1516
    %v1520 = vmul.f32 %v1509, %v1516
    %v1521 = vmul.f32 %v1510, %v1516
    %v1522 = vld [vmem:[%s7] sm:$0x1]
    %v1524 = vlaneseq
    %v1525 = vshrl.u32 %v1524, 7
    %v1526 = vsub.s32 0, %v1525
    %v1527 = vrot.slane %v1522, %v1526
    %v1529 = vadd.f32 %v1518, %v1527
    %v1530 = vadd.f32 %v1519, %v1527
    %v1531 = vadd.f32 %v1520, %v1527
    %v1532 = vadd.f32 %v1521, %v1527
    %v1533 = vpack.c.bf16 %v1530, %v1529
    %v1534 = vpack.c.bf16 %v1532, %v1531
    %v1535 = vld [vmem:[#allocation2] sm:$0xf]
    %v1536 = vld [vmem:[#allocation2 + $0x4] sm:$0xf]
    %v1537 = vld [vmem:[#allocation2 + $0x8] sm:$0xf]
    %v1538 = vld [vmem:[#allocation2 + $0xc] sm:$0xf]
    %v1539 = vld [vmem:[%s9] sm:$0x1]
    %v1541 = vlaneseq
    %v1542 = vshrl.u32 %v1541, 7
    %v1543 = vsub.s32 0, %v1542
    %v1544 = vrot.slane %v1539, %v1543
    %v1550 = vunpack.c.l.b16 %v1535
    %v1551 = vunpack.c.l.b16 %v1536
    %v1552 = vunpack.c.l.b16 %v1537
    %v1553 = vunpack.c.l.b16 %v1538
    %v1554 = vpack.c.b16 %v1551, %v1550
    %v1555 = vpack.c.b16 %v1553, %v1552
    %v1559 = vsel %vm98, %v1533, 0
    %v1562 = vsel %vm98, %v1534, 0
    %1564 = vmatprep.subr.bf16.mxu0 0
    %1565 = vmatpush1.bf16.msra.mxu0 %v1554
    %1566 = vmatprep.subr.bf16.mxu0 0
    %1567 = vmatpush1.bf16.msra.mxu0 %v1555
    %1568 = vmatprep.subr.bf16.mxu0 0
    %1569 = vmatpush1.bf16.msra.mxu0 0
    %1570 = vmatprep.subr.bf16.mxu0 0
    %1571 = vmatpush1.bf16.msra.mxu0 0
    %1572 = vmatprep.subr.bf16.mxu0 0
    %1573 = vmatpush1.bf16.msra.mxu0 0
    %1574 = vmatprep.subr.bf16.mxu0 0
    %1575 = vmatpush1.bf16.msra.mxu0 0
    %1576 = vmatprep.subr.bf16.mxu0 0
    %1577 = vmatpush1.bf16.msra.mxu0 0
    %1578 = vmatprep.subr.bf16.mxu0 0
    %1579 = vmatpush1.bf16.msra.mxu0 0
    %1580 = vmatprep.subr.bf16.mxu0 0
    %1581 = vmatpush1.bf16.msra.mxu0 0
    %1582 = vmatprep.subr.bf16.mxu0 0
    %1583 = vmatpush1.bf16.msra.mxu0 0
    %1584 = vmatprep.subr.bf16.mxu0 0
    %1585 = vmatpush1.bf16.msra.mxu0 0
    %1586 = vmatprep.subr.bf16.mxu0 0
    %1587 = vmatpush1.bf16.msra.mxu0 0
    %1588 = vmatprep.subr.bf16.mxu0 0
    %1589 = vmatpush1.bf16.msra.mxu0 0
    %1590 = vmatprep.subr.bf16.mxu0 0
    %1591 = vmatpush1.bf16.msra.mxu0 0
    %1592 = vmatprep.subr.bf16.mxu0 0
    %1593 = vmatpush1.bf16.msra.mxu0 0
    %1594 = vmatprep.subr.bf16.mxu0 0
    %1595 = vmatpush1.bf16.msra.mxu0 0
    %1596 = vmatprep.mubr.bf16.mxu0 0
    %1597 = vmatmul.mubr.bf16.gmra.mrb[0].mxu0 %v1559
    %v1598 = vpop.f32.mrb[0].mxu0
    %v1599 = vadd.f32 %v1544, %v1598
    %v1600 = vpop.f32.mrb[0].mxu0
    %v1601 = vpop.f32.mrb[0].mxu0
    %v1602 = vadd.f32 %v1544, %v1601
    %v1603 = vpop.f32.mrb[0].mxu0
    %1604 = vmatprep.mubr.bf16.mxu0 0
    %1605 = vmatmul.mubr.bf16.gmra.mrb[0].mxu0 %v1562
    %v1606 = vpop.f32.mrb[0].mxu0
    %v1607 = vadd.f32 %v1544, %v1606
    %v1608 = vpop.f32.mrb[0].mxu0
    %v1609 = vpop.f32.mrb[0].mxu0
    %v1610 = vadd.f32 %v1544, %v1609
    %v1611 = vpop.f32.mrb[0].mxu0
    %1612 = vdwg.mxu0
    %v1613 = vmax.f32 %v1599, 0.0
    %v1614 = vmax.f32 %v1602, 0.0
    %v1615 = vmax.f32 %v1607, 0.0
    %v1616 = vmax.f32 %v1610, 0.0
    %v1617 = vpack.c.bf16 %v1614, %v1613
    %v1618 = vpack.c.bf16 %v1616, %v1615
    %v1619 = vld [vmem:[%s10] sm:$0xf]
    %v1620 = vld [vmem:[%s10 + $0x4] sm:$0xf]
    %v1621 = vld [vmem:[%s10 + $0x8] sm:$0xf]
    %v1622 = vld [vmem:[%s10 + $0xc] sm:$0xf]
    %v1623 = vld [vmem:[%s10 + $0x10] sm:$0xf]
    %v1624 = vld [vmem:[%s10 + $0x14] sm:$0xf]
    %v1625 = vld [vmem:[%s10 + $0x18] sm:$0xf]
    %v1626 = vld [vmem:[%s10 + $0x1c] sm:$0xf]
    %v1627 = vld [vmem:[%s11] sm:$0x1]
    %v1629 = vlaneseq
    %v1630 = vshrl.u32 %v1629, 7
    %v1631 = vsub.s32 0, %v1630
    %v1632 = vrot.slane %v1627, %v1631
    %v1642 = vunpack.c.l.b16 %v1619
    %v1643 = vunpack.c.l.b16 %v1620
    %v1644 = vunpack.c.l.b16 %v1621
    %v1645 = vunpack.c.l.b16 %v1622
    %v1646 = vunpack.c.l.b16 %v1623
    %v1647 = vunpack.c.l.b16 %v1624
    %v1648 = vunpack.c.l.b16 %v1625
    %v1649 = vunpack.c.l.b16 %v1626
    %v1650 = vpack.c.b16 %v1643, %v1642
    %v1651 = vpack.c.b16 %v1645, %v1644
    %v1652 = vpack.c.b16 %v1647, %v1646
    %v1653 = vpack.c.b16 %v1649, %v1648
    %vm1658 = vcmask 523264
    %v1660 = vsel %vm1658, %v1617, 0
    %v1663 = vsel %vm1658, %v1618, 0
    %1665 = vmatprep.subr.bf16.mxu0 0
    %1666 = vmatpush1.bf16.msra.mxu0 %v1650
    %1667 = vmatprep.subr.bf16.mxu0 0
    %1668 = vmatpush1.bf16.msra.mxu0 %v1651
    %1669 = vmatprep.subr.bf16.mxu0 0
    %1670 = vmatpush1.bf16.msra.mxu0 %v1652
    %1671 = vmatprep.subr.bf16.mxu0 0
    %1672 = vmatpush1.bf16.msra.mxu0 %v1653
    %1673 = vmatprep.subr.bf16.mxu0 0
    %1674 = vmatpush1.bf16.msra.mxu0 0
    %1675 = vmatprep.subr.bf16.mxu0 0
    %1676 = vmatpush1.bf16.msra.mxu0 0
    %1677 = vmatprep.subr.bf16.mxu0 0
    %1678 = vmatpush1.bf16.msra.mxu0 0
    %1679 = vmatprep.subr.bf16.mxu0 0
    %1680 = vmatpush1.bf16.msra.mxu0 0
    %1681 = vmatprep.subr.bf16.mxu0 0
    %1682 = vmatpush1.bf16.msra.mxu0 0
    %1683 = vmatprep.subr.bf16.mxu0 0
    %1684 = vmatpush1.bf16.msra.mxu0 0
    %1685 = vmatprep.subr.bf16.mxu0 0
    %1686 = vmatpush1.bf16.msra.mxu0 0
    %1687 = vmatprep.subr.bf16.mxu0 0
    %1688 = vmatpush1.bf16.msra.mxu0 0
    %1689 = vmatprep.subr.bf16.mxu0 0
    %1690 = vmatpush1.bf16.msra.mxu0 0
    %1691 = vmatprep.subr.bf16.mxu0 0
    %1692 = vmatpush1.bf16.msra.mxu0 0
    %1693 = vmatprep.subr.bf16.mxu0 0
    %1694 = vmatpush1.bf16.msra.mxu0 0
    %1695 = vmatprep.subr.bf16.mxu0 0
    %1696 = vmatpush1.bf16.msra.mxu0 0
    %1697 = vmatprep.mubr.bf16.mxu0 0
    %1698 = vmatmul.mubr.bf16.gmra.mrb[0].mxu0 %v1660
    %v1699 = vpop.f32.mrb[0].mxu0
    %v1700 = vadd.f32 %v1632, %v1699
    %v1701 = vpop.f32.mrb[0].mxu0
    %v1702 = vpop.f32.mrb[0].mxu0
    %v1703 = vadd.f32 %v1632, %v1702
    %v1704 = vpop.f32.mrb[0].mxu0
    %1705 = vmatprep.mubr.bf16.mxu0 0
    %1706 = vmatmul.mubr.bf16.gmra.mrb[0].mxu0 %v1663
    %v1707 = vpop.f32.mrb[0].mxu0
    %v1708 = vadd.f32 %v1632, %v1707
    %v1709 = vpop.f32.mrb[0].mxu0
    %v1710 = vpop.f32.mrb[0].mxu0
    %v1711 = vadd.f32 %v1632, %v1710
    %v1712 = vpop.f32.mrb[0].mxu0
    %1713 = vdwg.mxu0
    %v1714 = vadd.f32 %v1454, %v1700
    %v1715 = vadd.f32 %v1455, %v1703
    %v1716 = vadd.f32 %v1456, %v1708
    %v1717 = vadd.f32 %v1457, %v1711
    %v1718 = vpack.c.bf16 %v1715, %v1714
    %v1719 = vpack.c.bf16 %v1717, %v1716
    %v1722 = vunpack.c.l.b16 %v1718
    %v1723 = vunpack.c.h.b16 %v1718
    %v1724 = vunpack.c.l.b16 %v1719
    %v1725 = vunpack.c.h.b16 %v1719
    %v1726 = vpack.c.b16 %v1722, %v1722
    %v1727 = vpack.c.b16 %v1723, %v1723
    %v1728 = vpack.c.b16 %v1724, %v1724
    %v1729 = vpack.c.b16 %v1725, %v1725
    %vm1734 = vcmask 257024
    %1735 = vst.msk [vmem:[#allocation5] sm:$0xf] %vm1734, %v1726
    %1736 = vst.msk [vmem:[#allocation5 + $0x4] sm:$0xf] %vm1734, %v1727
    %1737 = vst.msk [vmem:[#allocation5 + $0x8] sm:$0xf] %vm1734, %v1728
    %1738 = vst.msk [vmem:[#allocation5 + $0xc] sm:$0xf] %vm1734, %v1729
    // Predicated region
    $region54: #{tpu_custom_call.1} parent=1 // pred_check
      _
    $region55: #{tpu_custom_call.1} parent=1 // pred_check_branch
      %1740 = sbr.rel (0) target = $region57
    $region56: #{tpu_custom_call.1} parent=1 // pred_region
      %s1742 = ssub.s32 256, 256
      %1743 = vsyncadd [#allocation4], %s1742
      %s1744 = sshll.u32 [#allocation5], 4
      %s1745 = int_to_ptr.vmem [resolvable:$true] %s1744
      %1750 = dma.vmem_to_hbm [thread:$0]  %s1745, 256, %s12, [#allocation4], 64, 64, 4
    $region57: #{tpu_custom_call.1} parent=1 // pred_fallthru
      _
    // Predicated region
    $region58: #{tpu_custom_call.1} parent=1 // pred_check
      _
    $region59: #{tpu_custom_call.1} parent=1 // pred_check_branch
      %1752 = sbr.rel (0) target = $region61
    $region60: #{tpu_custom_call.1} parent=1 // pred_region
      %1753 = dma.done [#allocation4], 256
    $region61: #{tpu_custom_call.1} parent=1 // pred_fallthru
      _
    %1754 = vsyncpa [#allocation3], 1
    %1755 = vsyncpa [#allocation4], 1

// kernel: tpu_custom_call.1
$region0: #{tpu_custom_call.1}
  #allocation0 [shape = 'u32[]', space=smem, size = 0x4, offset = 0x4, fixed_abs, tag = 'smem constant byte address 0x4 - core index']
  #allocation1 [shape = 'u32[144,128]{1,0:T(1,128)}', space=vmem, size = 0x12000, scoped, tag = 'internal scratch']
  %s0 = inlined_call_operand.vmem [shape: bf16[2,16,32], index: 0, kind: input, shape index: {}]
  %s1 = inlined_call_operand.vmem [shape: f32[2,1,16], index: 1, kind: input, shape index: {}]
  %s2 = inlined_call_operand.vmem [shape: bf16[32,96], index: 2, kind: input, shape index: {}]
  %s3 = inlined_call_operand.vmem [shape: f32[1,96], index: 3, kind: input, shape index: {}]
  %s4 = inlined_call_operand.vmem [shape: bf16[4,8,32], index: 4, kind: input, shape index: {}]
  %s5 = inlined_call_operand.vmem [shape: f32[1,32], index: 5, kind: input, shape index: {}]
  %s6 = inlined_call_operand.vmem [shape: f32[1,32], index: 6, kind: input, shape index: {}]
  %s7 = inlined_call_operand.vmem [shape: f32[1,32], index: 7, kind: input, shape index: {}]
  %s8 = inlined_call_operand.hbm [shape: bf16[32,64], index: 8, kind: input, shape index: {}]
  %s9 = inlined_call_operand.vmem [shape: f32[1,64], index: 9, kind: input, shape index: {}]
  %s10 = inlined_call_operand.vmem [shape: bf16[64,32], index: 10, kind: input, shape index: {}]
  %s11 = inlined_call_operand.vmem [shape: f32[1,32], index: 11, kind: input, shape index: {}]
  %s12 = inlined_call_operand.hbm [shape: bf16[2,16,32], index: 12, kind: output, shape index: {}]
  %s13 = sld [smem:[#allocation0]]
  $region62: #{tpu_custom_call.1} parent=0
    _
  %s15 = ssub.s32 1, %s13
  %s16 = scalar_select 0, %s15, %s13
  $region1: #{tpu_custom_call.1} parent=0
    #allocation2 [shape = 'u8[8192]{0}', space=vmem, size = 0x2000, scoped, tag = 'input window, operand 8, single buffered']
    #allocation3 [shape = 's32[1]{0}', space=sflag, size = 0x4, scoped, tag = 'scoped memory for tpu_custom_call.1']
    #allocation4 [shape = 's32[1]{0}', space=sflag, size = 0x4, scoped, tag = 'scoped memory for tpu_custom_call.1']
    #allocation5 [shape = 'u8[8192]{0}', space=vmem, size = 0x2000, scoped, tag = 'output window, operand 0, single buffered']
    %17 = vsyncpa [#allocation3], 0
    %18 = vsyncpa [#allocation4], 0
    // Predicated region
    $region2: #{tpu_custom_call.1} parent=1 // pred_check
      _
    $region3: #{tpu_custom_call.1} parent=1 // pred_check_branch
      %20 = sbr.rel (0) target = $region5
    $region4: #{tpu_custom_call.1} parent=1 // pred_region
      _
    $region5: #{tpu_custom_call.1} parent=1 // pred_fallthru
      _
    // Predicated region
    $region6: #{tpu_custom_call.1} parent=1 // pred_check
      _
    $region7: #{tpu_custom_call.1} parent=1 // pred_check_branch
      %22 = sbr.rel (0) target = $region9
    $region8: #{tpu_custom_call.1} parent=1 // pred_region
      _
    $region9: #{tpu_custom_call.1} parent=1 // pred_fallthru
      _
    // Predicated region
    $region10: #{tpu_custom_call.1} parent=1 // pred_check
      _
    $region11: #{tpu_custom_call.1} parent=1 // pred_check_branch
      %24 = sbr.rel (0) target = $region13
    $region12: #{tpu_custom_call.1} parent=1 // pred_region
      _
    $region13: #{tpu_custom_call.1} parent=1 // pred_fallthru
      _
    // Predicated region
    $region14: #{tpu_custom_call.1} parent=1 // pred_check
      _
    $region15: #{tpu_custom_call.1} parent=1 // pred_check_branch
      %26 = sbr.rel (0) target = $region17
    $region16: #{tpu_custom_call.1} parent=1 // pred_region
      _
    $region17: #{tpu_custom_call.1} parent=1 // pred_fallthru
      _
    // Predicated region
    $region18: #{tpu_custom_call.1} parent=1 // pred_check
      _
    $region19: #{tpu_custom_call.1} parent=1 // pred_check_branch
      %28 = sbr.rel (0) target = $region21
    $region20: #{tpu_custom_call.1} parent=1 // pred_region
      _
    $region21: #{tpu_custom_call.1} parent=1 // pred_fallthru
      _
    // Predicated region
    $region22: #{tpu_custom_call.1} parent=1 // pred_check
      _
    $region23: #{tpu_custom_call.1} parent=1 // pred_check_branch
      %30 = sbr.rel (0) target = $region25
    $region24: #{tpu_custom_call.1} parent=1 // pred_region
      _
    $region25: #{tpu_custom_call.1} parent=1 // pred_fallthru
      _
    // Predicated region
    $region26: #{tpu_custom_call.1} parent=1 // pred_check
      _
    $region27: #{tpu_custom_call.1} parent=1 // pred_check_branch
      %32 = sbr.rel (0) target = $region29
    $region28: #{tpu_custom_call.1} parent=1 // pred_region
      _
    $region29: #{tpu_custom_call.1} parent=1 // pred_fallthru
      _
    // Predicated region
    $region30: #{tpu_custom_call.1} parent=1 // pred_check
      _
    $region31: #{tpu_custom_call.1} parent=1 // pred_check_branch
      %34 = sbr.rel (0) target = $region33
    $region32: #{tpu_custom_call.1} parent=1 // pred_region
      _
    $region33: #{tpu_custom_call.1} parent=1 // pred_fallthru
      _
    // Predicated region
    $region34: #{tpu_custom_call.1} parent=1 // pred_check
      _
    $region35: #{tpu_custom_call.1} parent=1 // pred_check_branch
      %36 = sbr.rel (0) target = $region37
    $region36: #{tpu_custom_call.1} parent=1 // pred_region
      %s38 = ssub.s32 256, 256
      %39 = vsyncadd [#allocation3], %s38
      %s40 = sshll.u32 [#allocation2], 4
      %s41 = int_to_ptr.vmem [resolvable:$true] %s40
      %46 = dma.hbm_to_vmem [thread:$0]  %s8, 256, %s41, [#allocation3], 64, 64, 4
    $region37: #{tpu_custom_call.1} parent=1 // pred_fallthru
      _
    // Predicated region
    $region38: #{tpu_custom_call.1} parent=1 // pred_check
      _
    $region39: #{tpu_custom_call.1} parent=1 // pred_check_branch
      %48 = sbr.rel (0) target = $region41
    $region40: #{tpu_custom_call.1} parent=1 // pred_region
      _
    $region41: #{tpu_custom_call.1} parent=1 // pred_fallthru
      _
    // Predicated region
    $region42: #{tpu_custom_call.1} parent=1 // pred_check
      _
    $region43: #{tpu_custom_call.1} parent=1 // pred_check_branch
      %50 = sbr.rel (0) target = $region45
    $region44: #{tpu_custom_call.1} parent=1 // pred_region
      _
    $region45: #{tpu_custom_call.1} parent=1 // pred_fallthru
      _
    // Predicated region
    $region46: #{tpu_custom_call.1} parent=1 // pred_check
      _
    $region47: #{tpu_custom_call.1} parent=1 // pred_check_branch
      %52 = sbr.rel (0) target = $region49
    $region48: #{tpu_custom_call.1} parent=1 // pred_region
      _
    $region49: #{tpu_custom_call.1} parent=1 // pred_fallthru
      _
    // Predicated region
    $region50: #{tpu_custom_call.1} parent=1 // pred_check
      _
    $region51: #{tpu_custom_call.1} parent=1 // pred_check_branch
      %54 = sbr.rel (0) target = $region53
    $region52: #{tpu_custom_call.1} parent=1 // pred_region
      %55 = dma.done [#allocation3], 256
    $region53: #{tpu_custom_call.1} parent=1 // pred_fallthru
      _
    %v57 = vld [vmem:[%s0] sm:$0xf]
    %v58 = vld [vmem:[%s0 + $0x4] sm:$0xf]
    %v59 = vld [vmem:[%s0 + $0x8] sm:$0xf]
    %v60 = vld [vmem:[%s0 + $0xc] sm:$0xf]
    %v61 = vunpack.c.l.bf16 %v57
    %v62 = vunpack.c.l.bf16 %v58
    %v63 = vunpack.c.l.bf16 %v59
    %v64 = vunpack.c.l.bf16 %v60
    %v65 = vld [vmem:[%s2] sm:$0xf]
    %v66 = vld [vmem:[%s2 + $0x4] sm:$0xf]
    %v67 = vld [vmem:[%s2 + $0x8] sm:$0xf]
    %v68 = vld [vmem:[%s2 + $0xc] sm:$0xf]
    %v69 = vld [vmem:[%s3] sm:$0x1]
    %v71 = vlaneseq
    %v72 = vshrl.u32 %v71, 7
    %v73 = vsub.s32 0, %v72
    %v74 = vrot.slane %v69, %v73
    %v80 = vunpack.c.l.b16 %v57
    %v81 = vunpack.c.l.b16 %v58
    %v82 = vunpack.c.l.b16 %v59
    %v83 = vunpack.c.l.b16 %v60
    %v84 = vpack.c.b16 %v81, %v80
    %v85 = vpack.c.b16 %v83, %v82
    %v90 = vunpack.c.l.b16 %v65
    %v91 = vunpack.c.l.b16 %v66
    %v92 = vunpack.c.l.b16 %v67
    %v93 = vunpack.c.l.b16 %v68
    %v94 = vpack.c.b16 %v91, %v90
    %v95 = vpack.c.b16 %v93, %v92
    %vm98 = vcmask 261120
    %v100 = vsel %vm98, %v84, 0
    %v103 = vsel %vm98, %v85, 0
    %105 = vmatprep.subr.bf16.mxu0 0
    %106 = vmatpush1.bf16.msra.mxu0 %v94
    %107 = vmatprep.subr.bf16.mxu0 0
    %108 = vmatpush1.bf16.msra.mxu0 %v95
    %109 = vmatprep.subr.bf16.mxu0 0
    %110 = vmatpush1.bf16.msra.mxu0 0
    %111 = vmatprep.subr.bf16.mxu0 0
    %112 = vmatpush1.bf16.msra.mxu0 0
    %113 = vmatprep.subr.bf16.mxu0 0
    %114 = vmatpush1.bf16.msra.mxu0 0
    %115 = vmatprep.subr.bf16.mxu0 0
    %116 = vmatpush1.bf16.msra.mxu0 0
    %117 = vmatprep.subr.bf16.mxu0 0
    %118 = vmatpush1.bf16.msra.mxu0 0
    %119 = vmatprep.subr.bf16.mxu0 0
    %120 = vmatpush1.bf16.msra.mxu0 0
    %121 = vmatprep.subr.bf16.mxu0 0
    %122 = vmatpush1.bf16.msra.mxu0 0
    %123 = vmatprep.subr.bf16.mxu0 0
    %124 = vmatpush1.bf16.msra.mxu0 0
    %125 = vmatprep.subr.bf16.mxu0 0
    %126 = vmatpush1.bf16.msra.mxu0 0
    %127 = vmatprep.subr.bf16.mxu0 0
    %128 = vmatpush1.bf16.msra.mxu0 0
    %129 = vmatprep.subr.bf16.mxu0 0
    %130 = vmatpush1.bf16.msra.mxu0 0
    %131 = vmatprep.subr.bf16.mxu0 0
    %132 = vmatpush1.bf16.msra.mxu0 0
    %133 = vmatprep.subr.bf16.mxu0 0
    %134 = vmatpush1.bf16.msra.mxu0 0
    %135 = vmatprep.subr.bf16.mxu0 0
    %136 = vmatpush1.bf16.msra.mxu0 0
    %137 = vmatprep.mubr.bf16.mxu0 0
    %138 = vmatmul.mubr.bf16.gmra.mrb[0].mxu0 %v100
    %v139 = vpop.f32.mrb[0].mxu0
    %v140 = vadd.f32 %v74, %v139
    %v141 = vpop.f32.mrb[0].mxu0
    %v142 = vpop.f32.mrb[0].mxu0
    %v143 = vadd.f32 %v74, %v142
    %v144 = vpop.f32.mrb[0].mxu0
    %145 = vmatprep.mubr.bf16.mxu0 0
    %146 = vmatmul.mubr.bf16.gmra.mrb[0].mxu0 %v103
    %v147 = vpop.f32.mrb[0].mxu0
    %v148 = vadd.f32 %v74, %v147
    %v149 = vpop.f32.mrb[0].mxu0
    %v150 = vpop.f32.mrb[0].mxu0
    %v151 = vadd.f32 %v74, %v150
    %v152 = vpop.f32.mrb[0].mxu0
    %153 = vdwg.mxu0
    %v154 = vpack.c.bf16 %v143, %v140
    %v155 = vpack.c.bf16 %v151, %v148
    %v156 = vlaneseq
    %v157 = vshrl.u32 %v156, 7
    %v158 = vadd.s32 %v157, 8
    %v159 = vlaneseq
    %v160 = vand.u32 %v159, 127
    %vm161 = vcmp.gt.s32.totalorder %v160, %v157
    %vm162 = vcmp.gt.s32.totalorder %v160, %v158
    %v163 = vld [vmem:[%s1] sm:$0x1]
    %v164 = vld [vmem:[%s1 + $0x1] sm:$0x1]
    %vm165 = vcmp.gt.f32.partialorder %v163, 0.5
    %vm166 = vcmp.gt.f32.partialorder %v164, 0.5
    %v167 = vsel %vm161, 1, 0
    %v168 = vsel %vm162, 1, 0
    %vm169 = vcmp.eq.s32.totalorder %v167, 1
    %vm170 = vcmp.eq.s32.totalorder %v168, 1
    %v171 = vsel %vm165, 1, 0
    %v172 = vsel %vm166, 1, 0
    %v173 = vlaneseq
    %v174 = vshrl.u32 %v173, 7
    %v175 = vsub.s32 0, %v174
    %v176 = vrot.slane %v171, %v175
    %v177 = vlaneseq
    %v178 = vshrl.u32 %v177, 7
    %v179 = vsub.s32 0, %v178
    %v180 = vrot.slane %v172, %v179
    %vm181 = vcmp.eq.s32.totalorder %v176, 1
    %vm182 = vcmp.eq.s32.totalorder %v180, 1
    %vm183 = vmor %vm169, %vm181
    %vm184 = vmor %vm170, %vm181
    %vm185 = vmor %vm169, %vm182
    %vm186 = vmor %vm170, %vm182
    %188 = vrot.lane.b32.xlu0 %v154, 96
    %v189 = vpop.permute.xlu0 %188
    %vm190 = vcmask 64512
    %v192 = vsel %vm190, %v154, 0
    %v195 = vsel %vm190, %v189, 0
    %197 = vmatprep.subr.bf16.mxu0 0
    %198 = vmatpush1.bf16.xpose.msra.mxu0 %v195
    %199 = vmatprep.subr.bf16.mxu0 0
    %200 = vmatpush1.bf16.xpose.msra.mxu0 0
    %201 = vmatprep.subr.bf16.mxu0 0
    %202 = vmatpush1.bf16.xpose.msra.mxu0 0
    %203 = vmatprep.subr.bf16.mxu0 0
    %204 = vmatpush1.bf16.xpose.msra.mxu0 0
    %205 = vmatprep.subr.bf16.mxu0 0
    %206 = vmatpush1.bf16.xpose.msra.mxu0 0
    %207 = vmatprep.subr.bf16.mxu0 0
    %208 = vmatpush1.bf16.xpose.msra.mxu0 0
    %209 = vmatprep.subr.bf16.mxu0 0
    %210 = vmatpush1.bf16.xpose.msra.mxu0 0
    %211 = vmatprep.subr.bf16.mxu0 0
    %212 = vmatpush1.bf16.xpose.msra.mxu0 0
    %213 = vmatprep.subr.bf16.mxu0 0
    %214 = vmatpush1.bf16.xpose.msra.mxu0 0
    %215 = vmatprep.subr.bf16.mxu0 0
    %216 = vmatpush1.bf16.xpose.msra.mxu0 0
    %217 = vmatprep.subr.bf16.mxu0 0
    %218 = vmatpush1.bf16.xpose.msra.mxu0 0
    %219 = vmatprep.subr.bf16.mxu0 0
    %220 = vmatpush1.bf16.xpose.msra.mxu0 0
    %221 = vmatprep.subr.bf16.mxu0 0
    %222 = vmatpush1.bf16.xpose.msra.mxu0 0
    %223 = vmatprep.subr.bf16.mxu0 0
    %224 = vmatpush1.bf16.xpose.msra.mxu0 0
    %225 = vmatprep.subr.bf16.mxu0 0
    %226 = vmatpush1.bf16.xpose.msra.mxu0 0
    %227 = vmatprep.subr.bf16.mxu0 0
    %228 = vmatpush1.bf16.xpose.msra.mxu0 0
    %229 = vmatprep.mubr.bf16.mxu0 0
    %230 = vmatmul.mubr.bf16.gmra.mrb[0].mxu0 %v192
    %v231 = vpop.f32.mrb[0].mxu0
    %v232 = vadd.f32 0.0, %v231
    %v233 = vpop.f32.mrb[0].mxu0
    %v234 = vpop.f32.mrb[0].mxu0
    %v235 = vadd.f32 0.0, %v234
    %v236 = vpop.f32.mrb[0].mxu0
    %237 = vdwg.mxu0
    %239 = vrot.lane.b32.xlu0 %v155, 96
    %v240 = vpop.permute.xlu0 %239
    %v242 = vsel %vm190, %v155, 0
    %v245 = vsel %vm190, %v240, 0
    %247 = vmatprep.subr.bf16.mxu0 0
    %248 = vmatpush1.bf16.xpose.msra.mxu0 %v245
    %249 = vmatprep.subr.bf16.mxu0 0
    %250 = vmatpush1.bf16.xpose.msra.mxu0 0
    %251 = vmatprep.subr.bf16.mxu0 0
    %252 = vmatpush1.bf16.xpose.msra.mxu0 0
    %253 = vmatprep.subr.bf16.mxu0 0
    %254 = vmatpush1.bf16.xpose.msra.mxu0 0
    %255 = vmatprep.subr.bf16.mxu0 0
    %256 = vmatpush1.bf16.xpose.msra.mxu0 0
    %257 = vmatprep.subr.bf16.mxu0 0
    %258 = vmatpush1.bf16.xpose.msra.mxu0 0
    %259 = vmatprep.subr.bf16.mxu0 0
    %260 = vmatpush1.bf16.xpose.msra.mxu0 0
    %261 = vmatprep.subr.bf16.mxu0 0
    %262 = vmatpush1.bf16.xpose.msra.mxu0 0
    %263 = vmatprep.subr.bf16.mxu0 0
    %264 = vmatpush1.bf16.xpose.msra.mxu0 0
    %265 = vmatprep.subr.bf16.mxu0 0
    %266 = vmatpush1.bf16.xpose.msra.mxu0 0
    %267 = vmatprep.subr.bf16.mxu0 0
    %268 = vmatpush1.bf16.xpose.msra.mxu0 0
    %269 = vmatprep.subr.bf16.mxu0 0
    %270 = vmatpush1.bf16.xpose.msra.mxu0 0
    %271 = vmatprep.subr.bf16.mxu0 0
    %272 = vmatpush1.bf16.xpose.msra.mxu0 0
    %273 = vmatprep.subr.bf16.mxu0 0
    %274 = vmatpush1.bf16.xpose.msra.mxu0 0
    %275 = vmatprep.subr.bf16.mxu0 0
    %276 = vmatpush1.bf16.xpose.msra.mxu0 0
    %277 = vmatprep.subr.bf16.mxu0 0
    %278 = vmatpush1.bf16.xpose.msra.mxu0 0
    %279 = vmatprep.mubr.bf16.mxu0 0
    %280 = vmatmul.mubr.bf16.gmra.mrb[0].mxu0 %v242
    %v281 = vpop.f32.mrb[0].mxu0
    %v282 = vadd.f32 0.0, %v281
    %v283 = vpop.f32.mrb[0].mxu0
    %v284 = vpop.f32.mrb[0].mxu0
    %v285 = vadd.f32 0.0, %v284
    %v286 = vpop.f32.mrb[0].mxu0
    %287 = vdwg.mxu0
    %v288 = vmul.f32 %v232, 0.35355338
    %v289 = vmul.f32 %v235, 0.35355338
    %v290 = vmul.f32 %v282, 0.35355338
    %v291 = vmul.f32 %v285, 0.35355338
    %v292 = vsel %vm183, -1e+30, %v288
    %v293 = vsel %vm184, -1e+30, %v289
    %v294 = vsel %vm185, -1e+30, %v290
    %v295 = vsel %vm186, -1e+30, %v291
    %vm296 = vcmask 130048
    %v297 = vsel %vm296, %v292, -inf
    %298 = vmax.xlane.f32.xlu0 %v297
    %v299 = vpop.xlane.xlu0 %298
    %v300 = vsel %vm296, %v293, -inf
    %301 = vmax.xlane.f32.xlu0 %v300
    %v302 = vpop.xlane.xlu0 %301
    %v303 = vsel %vm296, %v294, -inf
    %304 = vmax.xlane.f32.xlu0 %v303
    %v305 = vpop.xlane.xlu0 %304
    %v306 = vsel %vm296, %v295, -inf
    %307 = vmax.xlane.f32.xlu0 %v306
    %v308 = vpop.xlane.xlu0 %307
    %v309 = vsub.f32 %v292, %v299
    %v310 = vsub.f32 %v293, %v302
    %v311 = vsub.f32 %v294, %v305
    %v312 = vsub.f32 %v295, %v308
    %v313 = vmul.f32 %v309, 1.442695
    %v314 = vpow.pop %v313
    %v315 = vmul.f32 %v310, 1.442695
    %v316 = vpow.pop %v315
    %v317 = vmul.f32 %v311, 1.442695
    %v318 = vpow.pop %v317
    %v319 = vmul.f32 %v312, 1.442695
    %v320 = vpow.pop %v319
    %v321 = vsel %vm296, %v314, 0.0
    %322 = vadd.xlane.f32.xlu0 %v321
    %v323 = vpop.xlane.xlu0 %322
    %v324 = vsel %vm296, %v316, 0.0
    %325 = vadd.xlane.f32.xlu0 %v324
    %v326 = vpop.xlane.xlu0 %325
    %v327 = vsel %vm296, %v318, 0.0
    %328 = vadd.xlane.f32.xlu0 %v327
    %v329 = vpop.xlane.xlu0 %328
    %v330 = vsel %vm296, %v320, 0.0
    %331 = vadd.xlane.f32.xlu0 %v330
    %v332 = vpop.xlane.xlu0 %331
    %v333 = vrcp.pop %v323
    %v334 = vrcp.pop %v326
    %v335 = vrcp.pop %v329
    %v336 = vrcp.pop %v332
    %v337 = vmul.f32 %v314, %v333
    %v338 = vmul.f32 %v316, %v334
    %v339 = vmul.f32 %v318, %v335
    %v340 = vmul.f32 %v320, %v336
    %v341 = vpack.c.bf16 %v338, %v337
    %v342 = vpack.c.bf16 %v340, %v339
    %343 = vrot.lane.b32.xlu0 %v154, 64
    %v344 = vpop.permute.xlu0 %343
    %v347 = vsel %vm296, %v341, 0
    %349 = vmatprep.subr.bf16.mxu0 0
    %350 = vmatpush1.bf16.msra.mxu0 %v344
    %351 = vmatprep.subr.bf16.mxu0 0
    %352 = vmatpush1.bf16.msra.mxu0 0
    %353 = vmatprep.subr.bf16.mxu0 0
    %354 = vmatpush1.bf16.msra.mxu0 0
    %355 = vmatprep.subr.bf16.mxu0 0
    %356 = vmatpush1.bf16.msra.mxu0 0
    %357 = vmatprep.subr.bf16.mxu0 0
    %358 = vmatpush1.bf16.msra.mxu0 0
    %359 = vmatprep.subr.bf16.mxu0 0
    %360 = vmatpush1.bf16.msra.mxu0 0
    %361 = vmatprep.subr.bf16.mxu0 0
    %362 = vmatpush1.bf16.msra.mxu0 0
    %363 = vmatprep.subr.bf16.mxu0 0
    %364 = vmatpush1.bf16.msra.mxu0 0
    %365 = vmatprep.subr.bf16.mxu0 0
    %366 = vmatpush1.bf16.msra.mxu0 0
    %367 = vmatprep.subr.bf16.mxu0 0
    %368 = vmatpush1.bf16.msra.mxu0 0
    %369 = vmatprep.subr.bf16.mxu0 0
    %370 = vmatpush1.bf16.msra.mxu0 0
    %371 = vmatprep.subr.bf16.mxu0 0
    %372 = vmatpush1.bf16.msra.mxu0 0
    %373 = vmatprep.subr.bf16.mxu0 0
    %374 = vmatpush1.bf16.msra.mxu0 0
    %375 = vmatprep.subr.bf16.mxu0 0
    %376 = vmatpush1.bf16.msra.mxu0 0
    %377 = vmatprep.subr.bf16.mxu0 0
    %378 = vmatpush1.bf16.msra.mxu0 0
    %379 = vmatprep.subr.bf16.mxu0 0
    %380 = vmatpush1.bf16.msra.mxu0 0
    %381 = vmatprep.mubr.bf16.mxu0 0
    %382 = vmatmul.mubr.bf16.gmra.mrb[0].mxu0 %v347
    %v383 = vpop.f32.mrb[0].mxu0
    %v384 = vadd.f32 0.0, %v383
    %v385 = vpop.f32.mrb[0].mxu0
    %v386 = vpop.f32.mrb[0].mxu0
    %v387 = vadd.f32 0.0, %v386
    %v388 = vpop.f32.mrb[0].mxu0
    %389 = vdwg.mxu0
    %390 = vrot.lane.b32.xlu0 %v155, 64
    %v391 = vpop.permute.xlu0 %390
    %v394 = vsel %vm296, %v342, 0
    %396 = vmatprep.subr.bf16.mxu0 0
    %397 = vmatpush1.bf16.msra.mxu0 %v391
    %398 = vmatprep.subr.bf16.mxu0 0
    %399 = vmatpush1.bf16.msra.mxu0 0
    %400 = vmatprep.subr.bf16.mxu0 0
    %401 = vmatpush1.bf16.msra.mxu0 0
    %402 = vmatprep.subr.bf16.mxu0 0
    %403 = vmatpush1.bf16.msra.mxu0 0
    %404 = vmatprep.subr.bf16.mxu0 0
    %405 = vmatpush1.bf16.msra.mxu0 0
    %406 = vmatprep.subr.bf16.mxu0 0
    %407 = vmatpush1.bf16.msra.mxu0 0
    %408 = vmatprep.subr.bf16.mxu0 0
    %409 = vmatpush1.bf16.msra.mxu0 0
    %410 = vmatprep.subr.bf16.mxu0 0
    %411 = vmatpush1.bf16.msra.mxu0 0
    %412 = vmatprep.subr.bf16.mxu0 0
    %413 = vmatpush1.bf16.msra.mxu0 0
    %414 = vmatprep.subr.bf16.mxu0 0
    %415 = vmatpush1.bf16.msra.mxu0 0
    %416 = vmatprep.subr.bf16.mxu0 0
    %417 = vmatpush1.bf16.msra.mxu0 0
    %418 = vmatprep.subr.bf16.mxu0 0
    %419 = vmatpush1.bf16.msra.mxu0 0
    %420 = vmatprep.subr.bf16.mxu0 0
    %421 = vmatpush1.bf16.msra.mxu0 0
    %422 = vmatprep.subr.bf16.mxu0 0
    %423 = vmatpush1.bf16.msra.mxu0 0
    %424 = vmatprep.subr.bf16.mxu0 0
    %425 = vmatpush1.bf16.msra.mxu0 0
    %426 = vmatprep.subr.bf16.mxu0 0
    %427 = vmatpush1.bf16.msra.mxu0 0
    %428 = vmatprep.mubr.bf16.mxu0 0
    %429 = vmatmul.mubr.bf16.gmra.mrb[0].mxu0 %v394
    %v430 = vpop.f32.mrb[0].mxu0
    %v431 = vadd.f32 0.0, %v430
    %v432 = vpop.f32.mrb[0].mxu0
    %v433 = vpop.f32.mrb[0].mxu0
    %v434 = vadd.f32 0.0, %v433
    %v435 = vpop.f32.mrb[0].mxu0
    %436 = vdwg.mxu0
    %v437 = vpack.c.bf16 %v387, %v384
    %v438 = vpack.c.bf16 %v434, %v431
    %v439 = vld [vmem:[%s4] sm:$0xf]
    %440 = vrot.lane.b32.xlu0 %v154, 120
    %v441 = vpop.permute.xlu0 %440
    %442 = vrot.lane.b32.xlu0 %v154, 88
    %v443 = vpop.permute.xlu0 %442
    %v445 = vsel %vm190, %v441, 0
    %v448 = vsel %vm190, %v443, 0
    %450 = vmatprep.subr.bf16.mxu0 0
    %451 = vmatpush1.bf16.xpose.msra.mxu0 %v448
    %452 = vmatprep.subr.bf16.mxu0 0
    %453 = vmatpush1.bf16.xpose.msra.mxu0 0
    %454 = vmatprep.subr.bf16.mxu0 0
    %455 = vmatpush1.bf16.xpose.msra.mxu0 0
    %456 = vmatprep.subr.bf16.mxu0 0
    %457 = vmatpush1.bf16.xpose.msra.mxu0 0
    %458 = vmatprep.subr.bf16.mxu0 0
    %459 = vmatpush1.bf16.xpose.msra.mxu0 0
    %460 = vmatprep.subr.bf16.mxu0 0
    %461 = vmatpush1.bf16.xpose.msra.mxu0 0
    %462 = vmatprep.subr.bf16.mxu0 0
    %463 = vmatpush1.bf16.xpose.msra.mxu0 0
    %464 = vmatprep.subr.bf16.mxu0 0
    %465 = vmatpush1.bf16.xpose.msra.mxu0 0
    %466 = vmatprep.subr.bf16.mxu0 0
    %467 = vmatpush1.bf16.xpose.msra.mxu0 0
    %468 = vmatprep.subr.bf16.mxu0 0
    %469 = vmatpush1.bf16.xpose.msra.mxu0 0
    %470 = vmatprep.subr.bf16.mxu0 0
    %471 = vmatpush1.bf16.xpose.msra.mxu0 0
    %472 = vmatprep.subr.bf16.mxu0 0
    %473 = vmatpush1.bf16.xpose.msra.mxu0 0
    %474 = vmatprep.subr.bf16.mxu0 0
    %475 = vmatpush1.bf16.xpose.msra.mxu0 0
    %476 = vmatprep.subr.bf16.mxu0 0
    %477 = vmatpush1.bf16.xpose.msra.mxu0 0
    %478 = vmatprep.subr.bf16.mxu0 0
    %479 = vmatpush1.bf16.xpose.msra.mxu0 0
    %480 = vmatprep.subr.bf16.mxu0 0
    %481 = vmatpush1.bf16.xpose.msra.mxu0 0
    %482 = vmatprep.mubr.bf16.mxu0 0
    %483 = vmatmul.mubr.bf16.gmra.mrb[0].mxu0 %v445
    %v484 = vpop.f32.mrb[0].mxu0
    %v485 = vadd.f32 0.0, %v484
    %v486 = vpop.f32.mrb[0].mxu0
    %v487 = vpop.f32.mrb[0].mxu0
    %v488 = vadd.f32 0.0, %v487
    %v489 = vpop.f32.mrb[0].mxu0
    %490 = vdwg.mxu0
    %491 = vrot.lane.b32.xlu0 %v155, 120
    %v492 = vpop.permute.xlu0 %491
    %493 = vrot.lane.b32.xlu0 %v155, 88
    %v494 = vpop.permute.xlu0 %493
    %v496 = vsel %vm190, %v492, 0
    %v499 = vsel %vm190, %v494, 0
    %501 = vmatprep.subr.bf16.mxu0 0
    %502 = vmatpush1.bf16.xpose.msra.mxu0 %v499
    %503 = vmatprep.subr.bf16.mxu0 0
    %504 = vmatpush1.bf16.xpose.msra.mxu0 0
    %505 = vmatprep.subr.bf16.mxu0 0
    %506 = vmatpush1.bf16.xpose.msra.mxu0 0
    %507 = vmatprep.subr.bf16.mxu0 0
    %508 = vmatpush1.bf16.xpose.msra.mxu0 0
    %509 = vmatprep.subr.bf16.mxu0 0
    %510 = vmatpush1.bf16.xpose.msra.mxu0 0
    %511 = vmatprep.subr.bf16.mxu0 0
    %512 = vmatpush1.bf16.xpose.msra.mxu0 0
    %513 = vmatprep.subr.bf16.mxu0 0
    %514 = vmatpush1.bf16.xpose.msra.mxu0 0
    %515 = vmatprep.subr.bf16.mxu0 0
    %516 = vmatpush1.bf16.xpose.msra.mxu0 0
    %517 = vmatprep.subr.bf16.mxu0 0
    %518 = vmatpush1.bf16.xpose.msra.mxu0 0
    %519 = vmatprep.subr.bf16.mxu0 0
    %520 = vmatpush1.bf16.xpose.msra.mxu0 0
    %521 = vmatprep.subr.bf16.mxu0 0
    %522 = vmatpush1.bf16.xpose.msra.mxu0 0
    %523 = vmatprep.subr.bf16.mxu0 0
    %524 = vmatpush1.bf16.xpose.msra.mxu0 0
    %525 = vmatprep.subr.bf16.mxu0 0
    %526 = vmatpush1.bf16.xpose.msra.mxu0 0
    %527 = vmatprep.subr.bf16.mxu0 0
    %528 = vmatpush1.bf16.xpose.msra.mxu0 0
    %529 = vmatprep.subr.bf16.mxu0 0
    %530 = vmatpush1.bf16.xpose.msra.mxu0 0
    %531 = vmatprep.subr.bf16.mxu0 0
    %532 = vmatpush1.bf16.xpose.msra.mxu0 0
    %533 = vmatprep.mubr.bf16.mxu0 0
    %534 = vmatmul.mubr.bf16.gmra.mrb[0].mxu0 %v496
    %v535 = vpop.f32.mrb[0].mxu0
    %v536 = vadd.f32 0.0, %v535
    %v537 = vpop.f32.mrb[0].mxu0
    %v538 = vpop.f32.mrb[0].mxu0
    %v539 = vadd.f32 0.0, %v538
    %v540 = vpop.f32.mrb[0].mxu0
    %541 = vdwg.mxu0
    %v542 = vmul.f32 %v485, 0.35355338
    %v543 = vmul.f32 %v488, 0.35355338
    %v544 = vmul.f32 %v536, 0.35355338
    %v545 = vmul.f32 %v539, 0.35355338
    %v546 = vsel %vm183, -1e+30, %v542
    %v547 = vsel %vm184, -1e+30, %v543
    %v548 = vsel %vm185, -1e+30, %v544
    %v549 = vsel %vm186, -1e+30, %v545
    %v550 = vsel %vm296, %v546, -inf
    %551 = vmax.xlane.f32.xlu0 %v550
    %v552 = vpop.xlane.xlu0 %551
    %v553 = vsel %vm296, %v547, -inf
    %554 = vmax.xlane.f32.xlu0 %v553
    %v555 = vpop.xlane.xlu0 %554
    %v556 = vsel %vm296, %v548, -inf
    %557 = vmax.xlane.f32.xlu0 %v556
    %v558 = vpop.xlane.xlu0 %557
    %v559 = vsel %vm296, %v549, -inf
    %560 = vmax.xlane.f32.xlu0 %v559
    %v561 = vpop.xlane.xlu0 %560
    %v562 = vsub.f32 %v546, %v552
    %v563 = vsub.f32 %v547, %v555
    %v564 = vsub.f32 %v548, %v558
    %v565 = vsub.f32 %v549, %v561
    %v566 = vmul.f32 %v562, 1.442695
    %v567 = vpow.pop %v566
    %v568 = vmul.f32 %v563, 1.442695
    %v569 = vpow.pop %v568
    %v570 = vmul.f32 %v564, 1.442695
    %v571 = vpow.pop %v570
    %v572 = vmul.f32 %v565, 1.442695
    %v573 = vpow.pop %v572
    %v574 = vsel %vm296, %v567, 0.0
    %575 = vadd.xlane.f32.xlu0 %v574
    %v576 = vpop.xlane.xlu0 %575
    %v577 = vsel %vm296, %v569, 0.0
    %578 = vadd.xlane.f32.xlu0 %v577
    %v579 = vpop.xlane.xlu0 %578
    %v580 = vsel %vm296, %v571, 0.0
    %581 = vadd.xlane.f32.xlu0 %v580
    %v582 = vpop.xlane.xlu0 %581
    %v583 = vsel %vm296, %v573, 0.0
    %584 = vadd.xlane.f32.xlu0 %v583
    %v585 = vpop.xlane.xlu0 %584
    %v586 = vrcp.pop %v576
    %v587 = vrcp.pop %v579
    %v588 = vrcp.pop %v582
    %v589 = vrcp.pop %v585
    %v590 = vmul.f32 %v567, %v586
    %v591 = vmul.f32 %v569, %v587
    %v592 = vmul.f32 %v571, %v588
    %v593 = vmul.f32 %v573, %v589
    %v594 = vpack.c.bf16 %v591, %v590
    %v595 = vpack.c.bf16 %v593, %v592
    %596 = vrot.lane.b32.xlu0 %v154, 56
    %v597 = vpop.permute.xlu0 %596
    %v600 = vsel %vm296, %v594, 0
    %602 = vmatprep.subr.bf16.mxu0 0
    %603 = vmatpush1.bf16.msra.mxu0 %v597
    %604 = vmatprep.subr.bf16.mxu0 0
    %605 = vmatpush1.bf16.msra.mxu0 0
    %606 = vmatprep.subr.bf16.mxu0 0
    %607 = vmatpush1.bf16.msra.mxu0 0
    %608 = vmatprep.subr.bf16.mxu0 0
    %609 = vmatpush1.bf16.msra.mxu0 0
    %610 = vmatprep.subr.bf16.mxu0 0
    %611 = vmatpush1.bf16.msra.mxu0 0
    %612 = vmatprep.subr.bf16.mxu0 0
    %613 = vmatpush1.bf16.msra.mxu0 0
    %614 = vmatprep.subr.bf16.mxu0 0
    %615 = vmatpush1.bf16.msra.mxu0 0
    %616 = vmatprep.subr.bf16.mxu0 0
    %617 = vmatpush1.bf16.msra.mxu0 0
    %618 = vmatprep.subr.bf16.mxu0 0
    %619 = vmatpush1.bf16.msra.mxu0 0
    %620 = vmatprep.subr.bf16.mxu0 0
    %621 = vmatpush1.bf16.msra.mxu0 0
    %622 = vmatprep.subr.bf16.mxu0 0
    %623 = vmatpush1.bf16.msra.mxu0 0
    %624 = vmatprep.subr.bf16.mxu0 0
    %625 = vmatpush1.bf16.msra.mxu0 0
    %626 = vmatprep.subr.bf16.mxu0 0
    %627 = vmatpush1.bf16.msra.mxu0 0
    %628 = vmatprep.subr.bf16.mxu0 0
    %629 = vmatpush1.bf16.msra.mxu0 0
    %630 = vmatprep.subr.bf16.mxu0 0
    %631 = vmatpush1.bf16.msra.mxu0 0
    %632 = vmatprep.subr.bf16.mxu0 0
    %633 = vmatpush1.bf16.msra.mxu0 0
    %634 = vmatprep.mubr.bf16.mxu0 0
    %635 = vmatmul.mubr.bf16.gmra.mrb[0].mxu0 %v600
    %v636 = vpop.f32.mrb[0].mxu0
    %v637 = vadd.f32 0.0, %v636
    %v638 = vpop.f32.mrb[0].mxu0
    %v639 = vpop.f32.mrb[0].mxu0
    %v640 = vadd.f32 0.0, %v639
    %v641 = vpop.f32.mrb[0].mxu0
    %642 = vdwg.mxu0
    %643 = vrot.lane.b32.xlu0 %v155, 56
    %v644 = vpop.permute.xlu0 %643
    %v647 = vsel %vm296, %v595, 0
    %649 = vmatprep.subr.bf16.mxu0 0
    %650 = vmatpush1.bf16.msra.mxu0 %v644
    %651 = vmatprep.subr.bf16.mxu0 0
    %652 = vmatpush1.bf16.msra.mxu0 0
    %653 = vmatprep.subr.bf16.mxu0 0
    %654 = vmatpush1.bf16.msra.mxu0 0
    %655 = vmatprep.subr.bf16.mxu0 0
    %656 = vmatpush1.bf16.msra.mxu0 0
    %657 = vmatprep.subr.bf16.mxu0 0
    %658 = vmatpush1.bf16.msra.mxu0 0
    %659 = vmatprep.subr.bf16.mxu0 0
    %660 = vmatpush1.bf16.msra.mxu0 0
    %661 = vmatprep.subr.bf16.mxu0 0
    %662 = vmatpush1.bf16.msra.mxu0 0
    %663 = vmatprep.subr.bf16.mxu0 0
    %664 = vmatpush1.bf16.msra.mxu0 0
    %665 = vmatprep.subr.bf16.mxu0 0
    %666 = vmatpush1.bf16.msra.mxu0 0
    %667 = vmatprep.subr.bf16.mxu0 0
    %668 = vmatpush1.bf16.msra.mxu0 0
    %669 = vmatprep.subr.bf16.mxu0 0
    %670 = vmatpush1.bf16.msra.mxu0 0
    %671 = vmatprep.subr.bf16.mxu0 0
    %672 = vmatpush1.bf16.msra.mxu0 0
    %673 = vmatprep.subr.bf16.mxu0 0
    %674 = vmatpush1.bf16.msra.mxu0 0
    %675 = vmatprep.subr.bf16.mxu0 0
    %676 = vmatpush1.bf16.msra.mxu0 0
    %677 = vmatprep.subr.bf16.mxu0 0
    %678 = vmatpush1.bf16.msra.mxu0 0
    %679 = vmatprep.subr.bf16.mxu0 0
    %680 = vmatpush1.bf16.msra.mxu0 0
    %681 = vmatprep.mubr.bf16.mxu0 0
    %682 = vmatmul.mubr.bf16.gmra.mrb[0].mxu0 %v647
    %v683 = vpop.f32.mrb[0].mxu0
    %v684 = vadd.f32 0.0, %v683
    %v685 = vpop.f32.mrb[0].mxu0
    %v686 = vpop.f32.mrb[0].mxu0
    %v687 = vadd.f32 0.0, %v686
    %v688 = vpop.f32.mrb[0].mxu0
    %689 = vdwg.mxu0
    %v690 = vpack.c.bf16 %v640, %v637
    %v691 = vpack.c.bf16 %v687, %v684
    %s692 = scalar_lea.vmem %s4, 4
    %v693 = vld [vmem:[%s692] sm:$0xf]
    %v695 = vsel %vm190, %v690, 0
    %v698 = vsel %vm190, %v691, 0
    %vm700 = vcmask 1043456
    %v702 = vsel %vm700, %v693, 0
    %704 = vmatprep.subr.bf16.mxu0 0
    %705 = vmatpush1.bf16.msra.mxu0 %v702
    %706 = vmatprep.subr.bf16.mxu0 0
    %707 = vmatpush1.bf16.msra.mxu0 0
    %708 = vmatprep.subr.bf16.mxu0 0
    %709 = vmatpush1.bf16.msra.mxu0 0
    %710 = vmatprep.subr.bf16.mxu0 0
    %711 = vmatpush1.bf16.msra.mxu0 0
    %712 = vmatprep.subr.bf16.mxu0 0
    %713 = vmatpush1.bf16.msra.mxu0 0
    %714 = vmatprep.subr.bf16.mxu0 0
    %715 = vmatpush1.bf16.msra.mxu0 0
    %716 = vmatprep.subr.bf16.mxu0 0
    %717 = vmatpush1.bf16.msra.mxu0 0
    %718 = vmatprep.subr.bf16.mxu0 0
    %719 = vmatpush1.bf16.msra.mxu0 0
    %720 = vmatprep.subr.bf16.mxu0 0
    %721 = vmatpush1.bf16.msra.mxu0 0
    %722 = vmatprep.subr.bf16.mxu0 0
    %723 = vmatpush1.bf16.msra.mxu0 0
    %724 = vmatprep.subr.bf16.mxu0 0
    %725 = vmatpush1.bf16.msra.mxu0 0
    %726 = vmatprep.subr.bf16.mxu0 0
    %727 = vmatpush1.bf16.msra.mxu0 0
    %728 = vmatprep.subr.bf16.mxu0 0
    %729 = vmatpush1.bf16.msra.mxu0 0
    %730 = vmatprep.subr.bf16.mxu0 0
    %731 = vmatpush1.bf16.msra.mxu0 0
    %732 = vmatprep.subr.bf16.mxu0 0
    %733 = vmatpush1.bf16.msra.mxu0 0
    %734 = vmatprep.subr.bf16.mxu0 0
    %735 = vmatpush1.bf16.msra.mxu0 0
    %736 = vmatprep.mubr.bf16.mxu0 0
    %737 = vmatmul.mubr.bf16.gmra.mrb[0].mxu0 %v695
    %v738 = vpop.f32.mrb[0].mxu0
    %v739 = vadd.f32 0.0, %v738
    %v740 = vpop.f32.mrb[0].mxu0
    %v741 = vpop.f32.mrb[0].mxu0
    %v742 = vadd.f32 0.0, %v741
    %v743 = vpop.f32.mrb[0].mxu0
    %744 = vmatprep.mubr.bf16.mxu0 0
    %745 = vmatmul.mubr.bf16.gmra.mrb[0].mxu0 %v698
    %v746 = vpop.f32.mrb[0].mxu0
    %v747 = vadd.f32 0.0, %v746
    %v748 = vpop.f32.mrb[0].mxu0
    %v749 = vpop.f32.mrb[0].mxu0
    %v750 = vadd.f32 0.0, %v749
    %v751 = vpop.f32.mrb[0].mxu0
    %752 = vdwg.mxu0
    %v754 = vsel %vm190, %v437, 0
    %v757 = vsel %vm190, %v438, 0
    %v760 = vsel %vm700, %v439, 0
    %762 = vmatprep.subr.bf16.mxu0 0
    %763 = vmatpush1.bf16.msra.mxu0 %v760
    %764 = vmatprep.subr.bf16.mxu0 0
    %765 = vmatpush1.bf16.msra.mxu0 0
    %766 = vmatprep.subr.bf16.mxu0 0
    %767 = vmatpush1.bf16.msra.mxu0 0
    %768 = vmatprep.subr.bf16.mxu0 0
    %769 = vmatpush1.bf16.msra.mxu0 0
    %770 = vmatprep.subr.bf16.mxu0 0
    %771 = vmatpush1.bf16.msra.mxu0 0
    %772 = vmatprep.subr.bf16.mxu0 0
    %773 = vmatpush1.bf16.msra.mxu0 0
    %774 = vmatprep.subr.bf16.mxu0 0
    %775 = vmatpush1.bf16.msra.mxu0 0
    %776 = vmatprep.subr.bf16.mxu0 0
    %777 = vmatpush1.bf16.msra.mxu0 0
    %778 = vmatprep.subr.bf16.mxu0 0
    %779 = vmatpush1.bf16.msra.mxu0 0
    %780 = vmatprep.subr.bf16.mxu0 0
    %781 = vmatpush1.bf16.msra.mxu0 0
    %782 = vmatprep.subr.bf16.mxu0 0
    %783 = vmatpush1.bf16.msra.mxu0 0
    %784 = vmatprep.subr.bf16.mxu0 0
    %785 = vmatpush1.bf16.msra.mxu0 0
    %786 = vmatprep.subr.bf16.mxu0 0
    %787 = vmatpush1.bf16.msra.mxu0 0
    %788 = vmatprep.subr.bf16.mxu0 0
    %789 = vmatpush1.bf16.msra.mxu0 0
    %790 = vmatprep.subr.bf16.mxu0 0
    %791 = vmatpush1.bf16.msra.mxu0 0
    %792 = vmatprep.subr.bf16.mxu0 0
    %793 = vmatpush1.bf16.msra.mxu0 0
    %794 = vmatprep.mubr.bf16.mxu0 0
    %795 = vmatmul.mubr.bf16.gmra.mrb[0].mxu0 %v754
    %v796 = vpop.f32.mrb[0].mxu0
    %v797 = vadd.f32 %v739, %v796
    %v798 = vpop.f32.mrb[0].mxu0
    %v799 = vpop.f32.mrb[0].mxu0
    %v800 = vadd.f32 %v742, %v799
    %v801 = vpop.f32.mrb[0].mxu0
    %802 = vmatprep.mubr.bf16.mxu0 0
    %803 = vmatmul.mubr.bf16.gmra.mrb[0].mxu0 %v757
    %v804 = vpop.f32.mrb[0].mxu0
    %v805 = vadd.f32 %v747, %v804
    %v806 = vpop.f32.mrb[0].mxu0
    %v807 = vpop.f32.mrb[0].mxu0
    %v808 = vadd.f32 %v750, %v807
    %v809 = vpop.f32.mrb[0].mxu0
    %810 = vdwg.mxu0
    %811 = vrot.lane.b32.xlu0 %v154, 112
    %v812 = vpop.permute.xlu0 %811
    %813 = vrot.lane.b32.xlu0 %v154, 80
    %v814 = vpop.permute.xlu0 %813
    %v816 = vsel %vm190, %v812, 0
    %v819 = vsel %vm190, %v814, 0
    %821 = vmatprep.subr.bf16.mxu0 0
    %822 = vmatpush1.bf16.xpose.msra.mxu0 %v819
    %823 = vmatprep.subr.bf16.mxu0 0
    %824 = vmatpush1.bf16.xpose.msra.mxu0 0
    %825 = vmatprep.subr.bf16.mxu0 0
    %826 = vmatpush1.bf16.xpose.msra.mxu0 0
    %827 = vmatprep.subr.bf16.mxu0 0
    %828 = vmatpush1.bf16.xpose.msra.mxu0 0
    %829 = vmatprep.subr.bf16.mxu0 0
    %830 = vmatpush1.bf16.xpose.msra.mxu0 0
    %831 = vmatprep.subr.bf16.mxu0 0
    %832 = vmatpush1.bf16.xpose.msra.mxu0 0
    %833 = vmatprep.subr.bf16.mxu0 0
    %834 = vmatpush1.bf16.xpose.msra.mxu0 0
    %835 = vmatprep.subr.bf16.mxu0 0
    %836 = vmatpush1.bf16.xpose.msra.mxu0 0
    %837 = vmatprep.subr.bf16.mxu0 0
    %838 = vmatpush1.bf16.xpose.msra.mxu0 0
    %839 = vmatprep.subr.bf16.mxu0 0
    %840 = vmatpush1.bf16.xpose.msra.mxu0 0
    %841 = vmatprep.subr.bf16.mxu0 0
    %842 = vmatpush1.bf16.xpose.msra.mxu0 0
    %843 = vmatprep.subr.bf16.mxu0 0
    %844 = vmatpush1.bf16.xpose.msra.mxu0 0
    %845 = vmatprep.subr.bf16.mxu0 0
    %846 = vmatpush1.bf16.xpose.msra.mxu0 0
    %847 = vmatprep.subr.bf16.mxu0 0
    %848 = vmatpush1.bf16.xpose.msra.mxu0 0
    %849 = vmatprep.subr.bf16.mxu0 0
    %850 = vmatpush1.bf16.xpose.msra.mxu0 0
    %851 = vmatprep.subr.bf16.mxu0 0
    %852 = vmatpush1.bf16.xpose.msra.mxu0 0
    %853 = vmatprep.mubr.bf16.mxu0 0
    %854 = vmatmul.mubr.bf16.gmra.mrb[0].mxu0 %v816
    %v855 = vpop.f32.mrb[0].mxu0
    %v856 = vadd.f32 0.0, %v855
    %v857 = vpop.f32.mrb[0].mxu0
    %v858 = vpop.f32.mrb[0].mxu0
    %v859 = vadd.f32 0.0, %v858
    %v860 = vpop.f32.mrb[0].mxu0
    %861 = vdwg.mxu0
    %862 = vrot.lane.b32.xlu0 %v155, 112
    %v863 = vpop.permute.xlu0 %862
    %864 = vrot.lane.b32.xlu0 %v155, 80
    %v865 = vpop.permute.xlu0 %864
    %v867 = vsel %vm190, %v863, 0
    %v870 = vsel %vm190, %v865, 0
    %872 = vmatprep.subr.bf16.mxu0 0
    %873 = vmatpush1.bf16.xpose.msra.mxu0 %v870
    %874 = vmatprep.subr.bf16.mxu0 0
    %875 = vmatpush1.bf16.xpose.msra.mxu0 0
    %876 = vmatprep.subr.bf16.mxu0 0
    %877 = vmatpush1.bf16.xpose.msra.mxu0 0
    %878 = vmatprep.subr.bf16.mxu0 0
    %879 = vmatpush1.bf16.xpose.msra.mxu0 0
    %880 = vmatprep.subr.bf16.mxu0 0
    %881 = vmatpush1.bf16.xpose.msra.mxu0 0
    %882 = vmatprep.subr.bf16.mxu0 0
    %883 = vmatpush1.bf16.xpose.msra.mxu0 0
    %884 = vmatprep.subr.bf16.mxu0 0
    %885 = vmatpush1.bf16.xpose.msra.mxu0 0
    %886 = vmatprep.subr.bf16.mxu0 0
    %887 = vmatpush1.bf16.xpose.msra.mxu0 0
    %888 = vmatprep.subr.bf16.mxu0 0
    %889 = vmatpush1.bf16.xpose.msra.mxu0 0
    %890 = vmatprep.subr.bf16.mxu0 0
    %891 = vmatpush1.bf16.xpose.msra.mxu0 0
    %892 = vmatprep.subr.bf16.mxu0 0
    %893 = vmatpush1.bf16.xpose.msra.mxu0 0
    %894 = vmatprep.subr.bf16.mxu0 0
    %895 = vmatpush1.bf16.xpose.msra.mxu0 0
    %896 = vmatprep.subr.bf16.mxu0 0
    %897 = vmatpush1.bf16.xpose.msra.mxu0 0
    %898 = vmatprep.subr.bf16.mxu0 0
    %899 = vmatpush1.bf16.xpose.msra.mxu0 0
    %900 = vmatprep.subr.bf16.mxu0 0
    %901 = vmatpush1.bf16.xpose.msra.mxu0 0
    %902 = vmatprep.subr.bf16.mxu0 0
    %903 = vmatpush1.bf16.xpose.msra.mxu0 0
    %904 = vmatprep.mubr.bf16.mxu0 0
    %905 = vmatmul.mubr.bf16.gmra.mrb[0].mxu0 %v867
    %v906 = vpop.f32.mrb[0].mxu0
    %v907 = vadd.f32 0.0, %v906
    %v908 = vpop.f32.mrb[0].mxu0
    %v909 = vpop.f32.mrb[0].mxu0
    %v910 = vadd.f32 0.0, %v909
    %v911 = vpop.f32.mrb[0].mxu0
    %912 = vdwg.mxu0
    %v913 = vmul.f32 %v856, 0.35355338
    %v914 = vmul.f32 %v859, 0.35355338
    %v915 = vmul.f32 %v907, 0.35355338
    %v916 = vmul.f32 %v910, 0.35355338
    %v917 = vsel %vm183, -1e+30, %v913
    %v918 = vsel %vm184, -1e+30, %v914
    %v919 = vsel %vm185, -1e+30, %v915
    %v920 = vsel %vm186, -1e+30, %v916
    %v921 = vsel %vm296, %v917, -inf
    %922 = vmax.xlane.f32.xlu0 %v921
    %v923 = vpop.xlane.xlu0 %922
    %v924 = vsel %vm296, %v918, -inf
    %925 = vmax.xlane.f32.xlu0 %v924
    %v926 = vpop.xlane.xlu0 %925
    %v927 = vsel %vm296, %v919, -inf
    %928 = vmax.xlane.f32.xlu0 %v927
    %v929 = vpop.xlane.xlu0 %928
    %v930 = vsel %vm296, %v920, -inf
    %931 = vmax.xlane.f32.xlu0 %v930
    %v932 = vpop.xlane.xlu0 %931
    %v933 = vsub.f32 %v917, %v923
    %v934 = vsub.f32 %v918, %v926
    %v935 = vsub.f32 %v919, %v929
    %v936 = vsub.f32 %v920, %v932
    %v937 = vmul.f32 %v933, 1.442695
    %v938 = vpow.pop %v937
    %v939 = vmul.f32 %v934, 1.442695
    %v940 = vpow.pop %v939
    %v941 = vmul.f32 %v935, 1.442695
    %v942 = vpow.pop %v941
    %v943 = vmul.f32 %v936, 1.442695
    %v944 = vpow.pop %v943
    %v945 = vsel %vm296, %v938, 0.0
    %946 = vadd.xlane.f32.xlu0 %v945
    %v947 = vpop.xlane.xlu0 %946
    %v948 = vsel %vm296, %v940, 0.0
    %949 = vadd.xlane.f32.xlu0 %v948
    %v950 = vpop.xlane.xlu0 %949
    %v951 = vsel %vm296, %v942, 0.0
    %952 = vadd.xlane.f32.xlu0 %v951
    %v953 = vpop.xlane.xlu0 %952
    %v954 = vsel %vm296, %v944, 0.0
    %955 = vadd.xlane.f32.xlu0 %v954
    %v956 = vpop.xlane.xlu0 %955
    %v957 = vrcp.pop %v947
    %v958 = vrcp.pop %v950
    %v959 = vrcp.pop %v953
    %v960 = vrcp.pop %v956
    %v961 = vmul.f32 %v938, %v957
    %v962 = vmul.f32 %v940, %v958
    %v963 = vmul.f32 %v942, %v959
    %v964 = vmul.f32 %v944, %v960
    %v965 = vpack.c.bf16 %v962, %v961
    %v966 = vpack.c.bf16 %v964, %v963
    %967 = vrot.lane.b32.xlu0 %v154, 48
    %v968 = vpop.permute.xlu0 %967
    %v971 = vsel %vm296, %v965, 0
    %973 = vmatprep.subr.bf16.mxu0 0
    %974 = vmatpush1.bf16.msra.mxu0 %v968
    %975 = vmatprep.subr.bf16.mxu0 0
    %976 = vmatpush1.bf16.msra.mxu0 0
    %977 = vmatprep.subr.bf16.mxu0 0
    %978 = vmatpush1.bf16.msra.mxu0 0
    %979 = vmatprep.subr.bf16.mxu0 0
    %980 = vmatpush1.bf16.msra.mxu0 0
    %981 = vmatprep.subr.bf16.mxu0 0
    %982 = vmatpush1.bf16.msra.mxu0 0
    %983 = vmatprep.subr.bf16.mxu0 0
    %984 = vmatpush1.bf16.msra.mxu0 0
    %985 = vmatprep.subr.bf16.mxu0 0
    %986 = vmatpush1.bf16.msra.mxu0 0
    %987 = vmatprep.subr.bf16.mxu0 0
    %988 = vmatpush1.bf16.msra.mxu0 0
    %989 = vmatprep.subr.bf16.mxu0 0
    %990 = vmatpush1.bf16.msra.mxu0 0
    %991 = vmatprep.subr.bf16.mxu0 0
    %992 = vmatpush1.bf16.msra.mxu0 0
    %993 = vmatprep.subr.bf16.mxu0 0
    %994 = vmatpush1.bf16.msra.mxu0 0
    %995 = vmatprep.subr.bf16.mxu0 0
    %996 = vmatpush1.bf16.msra.mxu0 0
    %997 = vmatprep.subr.bf16.mxu0 0
    %998 = vmatpush1.bf16.msra.mxu0 0
    %999 = vmatprep.subr.bf16.mxu0 0
    %1000 = vmatpush1.bf16.msra.mxu0 0
    %1001 = vmatprep.subr.bf16.mxu0 0
    %1002 = vmatpush1.bf16.msra.mxu0 0
    %1003 = vmatprep.subr.bf16.mxu0 0
    %1004 = vmatpush1.bf16.msra.mxu0 0
    %1005 = vmatprep.mubr.bf16.mxu0 0
    %1006 = vmatmul.mubr.bf16.gmra.mrb[0].mxu0 %v971
    %v1007 = vpop.f32.mrb[0].mxu0
    %v1008 = vadd.f32 0.0, %v1007
    %v1009 = vpop.f32.mrb[0].mxu0
    %v1010 = vpop.f32.mrb[0].mxu0
    %v1011 = vadd.f32 0.0, %v1010
    %v1012 = vpop.f32.mrb[0].mxu0
    %1013 = vdwg.mxu0
    %1014 = vrot.lane.b32.xlu0 %v155, 48
    %v1015 = vpop.permute.xlu0 %1014
    %v1018 = vsel %vm296, %v966, 0
    %1020 = vmatprep.subr.bf16.mxu0 0
    %1021 = vmatpush1.bf16.msra.mxu0 %v1015
    %1022 = vmatprep.subr.bf16.mxu0 0
    %1023 = vmatpush1.bf16.msra.mxu0 0
    %1024 = vmatprep.subr.bf16.mxu0 0
    %1025 = vmatpush1.bf16.msra.mxu0 0
    %1026 = vmatprep.subr.bf16.mxu0 0
    %1027 = vmatpush1.bf16.msra.mxu0 0
    %1028 = vmatprep.subr.bf16.mxu0 0
    %1029 = vmatpush1.bf16.msra.mxu0 0
    %1030 = vmatprep.subr.bf16.mxu0 0
    %1031 = vmatpush1.bf16.msra.mxu0 0
    %1032 = vmatprep.subr.bf16.mxu0 0
    %1033 = vmatpush1.bf16.msra.mxu0 0
    %1034 = vmatprep.subr.bf16.mxu0 0
    %1035 = vmatpush1.bf16.msra.mxu0 0
    %1036 = vmatprep.subr.bf16.mxu0 0
    %1037 = vmatpush1.bf16.msra.mxu0 0
    %1038 = vmatprep.subr.bf16.mxu0 0
    %1039 = vmatpush1.bf16.msra.mxu0 0
    %1040 = vmatprep.subr.bf16.mxu0 0
    %1041 = vmatpush1.bf16.msra.mxu0 0
    %1042 = vmatprep.subr.bf16.mxu0 0
    %1043 = vmatpush1.bf16.msra.mxu0 0
    %1044 = vmatprep.subr.bf16.mxu0 0
    %1045 = vmatpush1.bf16.msra.mxu0 0
    %1046 = vmatprep.subr.bf16.mxu0 0
    %1047 = vmatpush1.bf16.msra.mxu0 0
    %1048 = vmatprep.subr.bf16.mxu0 0
    %1049 = vmatpush1.bf16.msra.mxu0 0
    %1050 = vmatprep.subr.bf16.mxu0 0
    %1051 = vmatpush1.bf16.msra.mxu0 0
    %1052 = vmatprep.mubr.bf16.mxu0 0
    %1053 = vmatmul.mubr.bf16.gmra.mrb[0].mxu0 %v1018
    %v1054 = vpop.f32.mrb[0].mxu0
    %v1055 = vadd.f32 0.0, %v1054
    %v1056 = vpop.f32.mrb[0].mxu0
    %v1057 = vpop.f32.mrb[0].mxu0
    %v1058 = vadd.f32 0.0, %v1057
    %v1059 = vpop.f32.mrb[0].mxu0
    %1060 = vdwg.mxu0
    %v1061 = vpack.c.bf16 %v1011, %v1008
    %v1062 = vpack.c.bf16 %v1058, %v1055
    %s1063 = scalar_lea.vmem %s4, 8
    %v1064 = vld [vmem:[%s1063] sm:$0xf]
    %v1066 = vsel %vm190, %v1061, 0
    %v1069 = vsel %vm190, %v1062, 0
    %v1072 = vsel %vm700, %v1064, 0
    %1074 = vmatprep.subr.bf16.mxu0 0
    %1075 = vmatpush1.bf16.msra.mxu0 %v1072
    %1076 = vmatprep.subr.bf16.mxu0 0
    %1077 = vmatpush1.bf16.msra.mxu0 0
    %1078 = vmatprep.subr.bf16.mxu0 0
    %1079 = vmatpush1.bf16.msra.mxu0 0
    %1080 = vmatprep.subr.bf16.mxu0 0
    %1081 = vmatpush1.bf16.msra.mxu0 0
    %1082 = vmatprep.subr.bf16.mxu0 0
    %1083 = vmatpush1.bf16.msra.mxu0 0
    %1084 = vmatprep.subr.bf16.mxu0 0
    %1085 = vmatpush1.bf16.msra.mxu0 0
    %1086 = vmatprep.subr.bf16.mxu0 0
    %1087 = vmatpush1.bf16.msra.mxu0 0
    %1088 = vmatprep.subr.bf16.mxu0 0
    %1089 = vmatpush1.bf16.msra.mxu0 0
    %1090 = vmatprep.subr.bf16.mxu0 0
    %1091 = vmatpush1.bf16.msra.mxu0 0
    %1092 = vmatprep.subr.bf16.mxu0 0
    %1093 = vmatpush1.bf16.msra.mxu0 0
    %1094 = vmatprep.subr.bf16.mxu0 0
    %1095 = vmatpush1.bf16.msra.mxu0 0
    %1096 = vmatprep.subr.bf16.mxu0 0
    %1097 = vmatpush1.bf16.msra.mxu0 0
    %1098 = vmatprep.subr.bf16.mxu0 0
    %1099 = vmatpush1.bf16.msra.mxu0 0
    %1100 = vmatprep.subr.bf16.mxu0 0
    %1101 = vmatpush1.bf16.msra.mxu0 0
    %1102 = vmatprep.subr.bf16.mxu0 0
    %1103 = vmatpush1.bf16.msra.mxu0 0
    %1104 = vmatprep.subr.bf16.mxu0 0
    %1105 = vmatpush1.bf16.msra.mxu0 0
    %1106 = vmatprep.mubr.bf16.mxu0 0
    %1107 = vmatmul.mubr.bf16.gmra.mrb[0].mxu0 %v1066
    %v1108 = vpop.f32.mrb[0].mxu0
    %v1109 = vadd.f32 0.0, %v1108
    %v1110 = vpop.f32.mrb[0].mxu0
    %v1111 = vpop.f32.mrb[0].mxu0
    %v1112 = vadd.f32 0.0, %v1111
    %v1113 = vpop.f32.mrb[0].mxu0
    %1114 = vmatprep.mubr.bf16.mxu0 0
    %1115 = vmatmul.mubr.bf16.gmra.mrb[0].mxu0 %v1069
    %v1116 = vpop.f32.mrb[0].mxu0
    %v1117 = vadd.f32 0.0, %v1116
    %v1118 = vpop.f32.mrb[0].mxu0
    %v1119 = vpop.f32.mrb[0].mxu0
    %v1120 = vadd.f32 0.0, %v1119
    %v1121 = vpop.f32.mrb[0].mxu0
    %1122 = vdwg.mxu0
    %v1123 = vadd.f32 %v797, %v1109
    %v1124 = vadd.f32 %v800, %v1112
    %v1125 = vadd.f32 %v805, %v1117
    %v1126 = vadd.f32 %v808, %v1120
    %1127 = vrot.lane.b32.xlu0 %v154, 104
    %v1128 = vpop.permute.xlu0 %1127
    %1129 = vrot.lane.b32.xlu0 %v154, 72
    %v1130 = vpop.permute.xlu0 %1129
    %v1132 = vsel %vm190, %v1128, 0
    %v1135 = vsel %vm190, %v1130, 0
    %1137 = vmatprep.subr.bf16.mxu0 0
    %1138 = vmatpush1.bf16.xpose.msra.mxu0 %v1135
    %1139 = vmatprep.subr.bf16.mxu0 0
    %1140 = vmatpush1.bf16.xpose.msra.mxu0 0
    %1141 = vmatprep.subr.bf16.mxu0 0
    %1142 = vmatpush1.bf16.xpose.msra.mxu0 0
    %1143 = vmatprep.subr.bf16.mxu0 0
    %1144 = vmatpush1.bf16.xpose.msra.mxu0 0
    %1145 = vmatprep.subr.bf16.mxu0 0
    %1146 = vmatpush1.bf16.xpose.msra.mxu0 0
    %1147 = vmatprep.subr.bf16.mxu0 0
    %1148 = vmatpush1.bf16.xpose.msra.mxu0 0
    %1149 = vmatprep.subr.bf16.mxu0 0
    %1150 = vmatpush1.bf16.xpose.msra.mxu0 0
    %1151 = vmatprep.subr.bf16.mxu0 0
    %1152 = vmatpush1.bf16.xpose.msra.mxu0 0
    %1153 = vmatprep.subr.bf16.mxu0 0
    %1154 = vmatpush1.bf16.xpose.msra.mxu0 0
    %1155 = vmatprep.subr.bf16.mxu0 0
    %1156 = vmatpush1.bf16.xpose.msra.mxu0 0
    %1157 = vmatprep.subr.bf16.mxu0 0
    %1158 = vmatpush1.bf16.xpose.msra.mxu0 0
    %1159 = vmatprep.subr.bf16.mxu0 0
    %1160 = vmatpush1.bf16.xpose.msra.mxu0 0
    %1161 = vmatprep.subr.bf16.mxu0 0
    %1162 = vmatpush1.bf16.xpose.msra.mxu0 0
    %1163 = vmatprep.subr.bf16.mxu0 0
    %1164 = vmatpush1.bf16.xpose.msra.mxu0 0
    %1165 = vmatprep.subr.bf16.mxu0 0
    %1166 = vmatpush1.bf16.xpose.msra.mxu0 0
    %1167 = vmatprep.subr.bf16.mxu0 0
    %1168 = vmatpush1.bf16.xpose.msra.mxu0 0
    %1169 = vmatprep.mubr.bf16.mxu0 0
    %1170 = vmatmul.mubr.bf16.gmra.mrb[0].mxu0 %v1132
    %v1171 = vpop.f32.mrb[0].mxu0
    %v1172 = vadd.f32 0.0, %v1171
    %v1173 = vpop.f32.mrb[0].mxu0
    %v1174 = vpop.f32.mrb[0].mxu0
    %v1175 = vadd.f32 0.0, %v1174
    %v1176 = vpop.f32.mrb[0].mxu0
    %1177 = vdwg.mxu0
    %1178 = vrot.lane.b32.xlu0 %v155, 104
    %v1179 = vpop.permute.xlu0 %1178
    %1180 = vrot.lane.b32.xlu0 %v155, 72
    %v1181 = vpop.permute.xlu0 %1180
    %v1183 = vsel %vm190, %v1179, 0
    %v1186 = vsel %vm190, %v1181, 0
    %1188 = vmatprep.subr.bf16.mxu0 0
    %1189 = vmatpush1.bf16.xpose.msra.mxu0 %v1186
    %1190 = vmatprep.subr.bf16.mxu0 0
    %1191 = vmatpush1.bf16.xpose.msra.mxu0 0
    %1192 = vmatprep.subr.bf16.mxu0 0
    %1193 = vmatpush1.bf16.xpose.msra.mxu0 0
    %1194 = vmatprep.subr.bf16.mxu0 0
    %1195 = vmatpush1.bf16.xpose.msra.mxu0 0
    %1196 = vmatprep.subr.bf16.mxu0 0
    %1197 = vmatpush1.bf16.xpose.msra.mxu0 0
    %1198 = vmatprep.subr.bf16.mxu0 0
    %1199 = vmatpush1.bf16.xpose.msra.mxu0 0
    %1200 = vmatprep.subr.bf16.mxu0 0
    %1201 = vmatpush1.bf16.xpose.msra.mxu0 0
    %1202 = vmatprep.subr.bf16.mxu0 0
    %1203 = vmatpush1.bf16.xpose.msra.mxu0 0
    %1204 = vmatprep.subr.bf16.mxu0 0
    %1205 = vmatpush1.bf16.xpose.msra.mxu0 0
    %1206 = vmatprep.subr.bf16.mxu0 0
    %1207 = vmatpush1.bf16.xpose.msra.mxu0 0
    %1208 = vmatprep.subr.bf16.mxu0 0
    %1209 = vmatpush1.bf16.xpose.msra.mxu0 0
    %1210 = vmatprep.subr.bf16.mxu0 0
    %1211 = vmatpush1.bf16.xpose.msra.mxu0 0
    %1212 = vmatprep.subr.bf16.mxu0 0
    %1213 = vmatpush1.bf16.xpose.msra.mxu0 0
    %1214 = vmatprep.subr.bf16.mxu0 0
    %1215 = vmatpush1.bf16.xpose.msra.mxu0 0
    %1216 = vmatprep.subr.bf16.mxu0 0
    %1217 = vmatpush1.bf16.xpose.msra.mxu0 0
    %1218 = vmatprep.subr.bf16.mxu0 0
    %1219 = vmatpush1.bf16.xpose.msra.mxu0 0
    %1220 = vmatprep.mubr.bf16.mxu0 0
    %1221 = vmatmul.mubr.bf16.gmra.mrb[0].mxu0 %v1183
    %v1222 = vpop.f32.mrb[0].mxu0
    %v1223 = vadd.f32 0.0, %v1222
    %v1224 = vpop.f32.mrb[0].mxu0
    %v1225 = vpop.f32.mrb[0].mxu0
    %v1226 = vadd.f32 0.0, %v1225
    %v1227 = vpop.f32.mrb[0].mxu0
    %1228 = vdwg.mxu0
    %v1229 = vmul.f32 %v1172, 0.35355338
    %v1230 = vmul.f32 %v1175, 0.35355338
    %v1231 = vmul.f32 %v1223, 0.35355338
    %v1232 = vmul.f32 %v1226, 0.35355338
    %v1233 = vsel %vm183, -1e+30, %v1229
    %v1234 = vsel %vm184, -1e+30, %v1230
    %v1235 = vsel %vm185, -1e+30, %v1231
    %v1236 = vsel %vm186, -1e+30, %v1232
    %v1237 = vsel %vm296, %v1233, -inf
    %1238 = vmax.xlane.f32.xlu0 %v1237
    %v1239 = vpop.xlane.xlu0 %1238
    %v1240 = vsel %vm296, %v1234, -inf
    %1241 = vmax.xlane.f32.xlu0 %v1240
    %v1242 = vpop.xlane.xlu0 %1241
    %v1243 = vsel %vm296, %v1235, -inf
    %1244 = vmax.xlane.f32.xlu0 %v1243
    %v1245 = vpop.xlane.xlu0 %1244
    %v1246 = vsel %vm296, %v1236, -inf
    %1247 = vmax.xlane.f32.xlu0 %v1246
    %v1248 = vpop.xlane.xlu0 %1247
    %v1249 = vsub.f32 %v1233, %v1239
    %v1250 = vsub.f32 %v1234, %v1242
    %v1251 = vsub.f32 %v1235, %v1245
    %v1252 = vsub.f32 %v1236, %v1248
    %v1253 = vmul.f32 %v1249, 1.442695
    %v1254 = vpow.pop %v1253
    %v1255 = vmul.f32 %v1250, 1.442695
    %v1256 = vpow.pop %v1255
    %v1257 = vmul.f32 %v1251, 1.442695
    %v1258 = vpow.pop %v1257
    %v1259 = vmul.f32 %v1252, 1.442695
    %v1260 = vpow.pop %v1259
    %v1261 = vsel %vm296, %v1254, 0.0
    %1262 = vadd.xlane.f32.xlu0 %v1261
    %v1263 = vpop.xlane.xlu0 %1262
    %v1264 = vsel %vm296, %v1256, 0.0
    %1265 = vadd.xlane.f32.xlu0 %v1264
    %v1266 = vpop.xlane.xlu0 %1265
    %v1267 = vsel %vm296, %v1258, 0.0
    %1268 = vadd.xlane.f32.xlu0 %v1267
    %v1269 = vpop.xlane.xlu0 %1268
    %v1270 = vsel %vm296, %v1260, 0.0
    %1271 = vadd.xlane.f32.xlu0 %v1270
    %v1272 = vpop.xlane.xlu0 %1271
    %v1273 = vrcp.pop %v1263
    %v1274 = vrcp.pop %v1266
    %v1275 = vrcp.pop %v1269
    %v1276 = vrcp.pop %v1272
    %v1277 = vmul.f32 %v1254, %v1273
    %v1278 = vmul.f32 %v1256, %v1274
    %v1279 = vmul.f32 %v1258, %v1275
    %v1280 = vmul.f32 %v1260, %v1276
    %v1281 = vpack.c.bf16 %v1278, %v1277
    %v1282 = vpack.c.bf16 %v1280, %v1279
    %1283 = vrot.lane.b32.xlu0 %v154, 40
    %v1284 = vpop.permute.xlu0 %1283
    %v1287 = vsel %vm296, %v1281, 0
    %1289 = vmatprep.subr.bf16.mxu0 0
    %1290 = vmatpush1.bf16.msra.mxu0 %v1284
    %1291 = vmatprep.subr.bf16.mxu0 0
    %1292 = vmatpush1.bf16.msra.mxu0 0
    %1293 = vmatprep.subr.bf16.mxu0 0
    %1294 = vmatpush1.bf16.msra.mxu0 0
    %1295 = vmatprep.subr.bf16.mxu0 0
    %1296 = vmatpush1.bf16.msra.mxu0 0
    %1297 = vmatprep.subr.bf16.mxu0 0
    %1298 = vmatpush1.bf16.msra.mxu0 0
    %1299 = vmatprep.subr.bf16.mxu0 0
    %1300 = vmatpush1.bf16.msra.mxu0 0
    %1301 = vmatprep.subr.bf16.mxu0 0
    %1302 = vmatpush1.bf16.msra.mxu0 0
    %1303 = vmatprep.subr.bf16.mxu0 0
    %1304 = vmatpush1.bf16.msra.mxu0 0
    %1305 = vmatprep.subr.bf16.mxu0 0
    %1306 = vmatpush1.bf16.msra.mxu0 0
    %1307 = vmatprep.subr.bf16.mxu0 0
    %1308 = vmatpush1.bf16.msra.mxu0 0
    %1309 = vmatprep.subr.bf16.mxu0 0
    %1310 = vmatpush1.bf16.msra.mxu0 0
    %1311 = vmatprep.subr.bf16.mxu0 0
    %1312 = vmatpush1.bf16.msra.mxu0 0
    %1313 = vmatprep.subr.bf16.mxu0 0
    %1314 = vmatpush1.bf16.msra.mxu0 0
    %1315 = vmatprep.subr.bf16.mxu0 0
    %1316 = vmatpush1.bf16.msra.mxu0 0
    %1317 = vmatprep.subr.bf16.mxu0 0
    %1318 = vmatpush1.bf16.msra.mxu0 0
    %1319 = vmatprep.subr.bf16.mxu0 0
    %1320 = vmatpush1.bf16.msra.mxu0 0
    %1321 = vmatprep.mubr.bf16.mxu0 0
    %1322 = vmatmul.mubr.bf16.gmra.mrb[0].mxu0 %v1287
    %v1323 = vpop.f32.mrb[0].mxu0
    %v1324 = vadd.f32 0.0, %v1323
    %v1325 = vpop.f32.mrb[0].mxu0
    %v1326 = vpop.f32.mrb[0].mxu0
    %v1327 = vadd.f32 0.0, %v1326
    %v1328 = vpop.f32.mrb[0].mxu0
    %1329 = vdwg.mxu0
    %1330 = vrot.lane.b32.xlu0 %v155, 40
    %v1331 = vpop.permute.xlu0 %1330
    %v1334 = vsel %vm296, %v1282, 0
    %1336 = vmatprep.subr.bf16.mxu0 0
    %1337 = vmatpush1.bf16.msra.mxu0 %v1331
    %1338 = vmatprep.subr.bf16.mxu0 0
    %1339 = vmatpush1.bf16.msra.mxu0 0
    %1340 = vmatprep.subr.bf16.mxu0 0
    %1341 = vmatpush1.bf16.msra.mxu0 0
    %1342 = vmatprep.subr.bf16.mxu0 0
    %1343 = vmatpush1.bf16.msra.mxu0 0
    %1344 = vmatprep.subr.bf16.mxu0 0
    %1345 = vmatpush1.bf16.msra.mxu0 0
    %1346 = vmatprep.subr.bf16.mxu0 0
    %1347 = vmatpush1.bf16.msra.mxu0 0
    %1348 = vmatprep.subr.bf16.mxu0 0
    %1349 = vmatpush1.bf16.msra.mxu0 0
    %1350 = vmatprep.subr.bf16.mxu0 0
    %1351 = vmatpush1.bf16.msra.mxu0 0
    %1352 = vmatprep.subr.bf16.mxu0 0
    %1353 = vmatpush1.bf16.msra.mxu0 0
    %1354 = vmatprep.subr.bf16.mxu0 0
    %1355 = vmatpush1.bf16.msra.mxu0 0
    %1356 = vmatprep.subr.bf16.mxu0 0
    %1357 = vmatpush1.bf16.msra.mxu0 0
    %1358 = vmatprep.subr.bf16.mxu0 0
    %1359 = vmatpush1.bf16.msra.mxu0 0
    %1360 = vmatprep.subr.bf16.mxu0 0
    %1361 = vmatpush1.bf16.msra.mxu0 0
    %1362 = vmatprep.subr.bf16.mxu0 0
    %1363 = vmatpush1.bf16.msra.mxu0 0
    %1364 = vmatprep.subr.bf16.mxu0 0
    %1365 = vmatpush1.bf16.msra.mxu0 0
    %1366 = vmatprep.subr.bf16.mxu0 0
    %1367 = vmatpush1.bf16.msra.mxu0 0
    %1368 = vmatprep.mubr.bf16.mxu0 0
    %1369 = vmatmul.mubr.bf16.gmra.mrb[0].mxu0 %v1334
    %v1370 = vpop.f32.mrb[0].mxu0
    %v1371 = vadd.f32 0.0, %v1370
    %v1372 = vpop.f32.mrb[0].mxu0
    %v1373 = vpop.f32.mrb[0].mxu0
    %v1374 = vadd.f32 0.0, %v1373
    %v1375 = vpop.f32.mrb[0].mxu0
    %1376 = vdwg.mxu0
    %v1377 = vpack.c.bf16 %v1327, %v1324
    %v1378 = vpack.c.bf16 %v1374, %v1371
    %s1379 = scalar_lea.vmem %s4, 12
    %v1380 = vld [vmem:[%s1379] sm:$0xf]
    %v1382 = vsel %vm190, %v1377, 0
    %v1385 = vsel %vm190, %v1378, 0
    %v1388 = vsel %vm700, %v1380, 0
    %1390 = vmatprep.subr.bf16.mxu0 0
    %1391 = vmatpush1.bf16.msra.mxu0 %v1388
    %1392 = vmatprep.subr.bf16.mxu0 0
    %1393 = vmatpush1.bf16.msra.mxu0 0
    %1394 = vmatprep.subr.bf16.mxu0 0
    %1395 = vmatpush1.bf16.msra.mxu0 0
    %1396 = vmatprep.subr.bf16.mxu0 0
    %1397 = vmatpush1.bf16.msra.mxu0 0
    %1398 = vmatprep.subr.bf16.mxu0 0
    %1399 = vmatpush1.bf16.msra.mxu0 0
    %1400 = vmatprep.subr.bf16.mxu0 0
    %1401 = vmatpush1.bf16.msra.mxu0 0
    %1402 = vmatprep.subr.bf16.mxu0 0
    %1403 = vmatpush1.bf16.msra.mxu0 0
    %1404 = vmatprep.subr.bf16.mxu0 0
    %1405 = vmatpush1.bf16.msra.mxu0 0
    %1406 = vmatprep.subr.bf16.mxu0 0
    %1407 = vmatpush1.bf16.msra.mxu0 0
    %1408 = vmatprep.subr.bf16.mxu0 0
    %1409 = vmatpush1.bf16.msra.mxu0 0
    %1410 = vmatprep.subr.bf16.mxu0 0
    %1411 = vmatpush1.bf16.msra.mxu0 0
    %1412 = vmatprep.subr.bf16.mxu0 0
    %1413 = vmatpush1.bf16.msra.mxu0 0
    %1414 = vmatprep.subr.bf16.mxu0 0
    %1415 = vmatpush1.bf16.msra.mxu0 0
    %1416 = vmatprep.subr.bf16.mxu0 0
    %1417 = vmatpush1.bf16.msra.mxu0 0
    %1418 = vmatprep.subr.bf16.mxu0 0
    %1419 = vmatpush1.bf16.msra.mxu0 0
    %1420 = vmatprep.subr.bf16.mxu0 0
    %1421 = vmatpush1.bf16.msra.mxu0 0
    %1422 = vmatprep.mubr.bf16.mxu0 0
    %1423 = vmatmul.mubr.bf16.gmra.mrb[0].mxu0 %v1382
    %v1424 = vpop.f32.mrb[0].mxu0
    %v1425 = vadd.f32 0.0, %v1424
    %v1426 = vpop.f32.mrb[0].mxu0
    %v1427 = vpop.f32.mrb[0].mxu0
    %v1428 = vadd.f32 0.0, %v1427
    %v1429 = vpop.f32.mrb[0].mxu0
    %1430 = vmatprep.mubr.bf16.mxu0 0
    %1431 = vmatmul.mubr.bf16.gmra.mrb[0].mxu0 %v1385
    %v1432 = vpop.f32.mrb[0].mxu0
    %v1433 = vadd.f32 0.0, %v1432
    %v1434 = vpop.f32.mrb[0].mxu0
    %v1435 = vpop.f32.mrb[0].mxu0
    %v1436 = vadd.f32 0.0, %v1435
    %v1437 = vpop.f32.mrb[0].mxu0
    %1438 = vdwg.mxu0
    %v1439 = vadd.f32 %v1123, %v1425
    %v1440 = vadd.f32 %v1124, %v1428
    %v1441 = vadd.f32 %v1125, %v1433
    %v1442 = vadd.f32 %v1126, %v1436
    %v1443 = vld [vmem:[%s5] sm:$0x1]
    %v1445 = vlaneseq
    %v1446 = vshrl.u32 %v1445, 7
    %v1447 = vsub.s32 0, %v1446
    %v1448 = vrot.slane %v1443, %v1447
    %v1450 = vadd.f32 %v1439, %v1448
    %v1451 = vadd.f32 %v1440, %v1448
    %v1452 = vadd.f32 %v1441, %v1448
    %v1453 = vadd.f32 %v1442, %v1448
    %v1454 = vadd.f32 %v61, %v1450
    %v1455 = vadd.f32 %v62, %v1451
    %v1456 = vadd.f32 %v63, %v1452
    %v1457 = vadd.f32 %v64, %v1453
    %v1458 = vsel %vm98, %v1454, 0.0
    %1459 = vadd.xlane.f32.xlu0 %v1458
    %v1460 = vpop.xlane.xlu0 %1459
    %v1461 = vsel %vm98, %v1455, 0.0
    %1462 = vadd.xlane.f32.xlu0 %v1461
    %v1463 = vpop.xlane.xlu0 %1462
    %v1464 = vsel %vm98, %v1456, 0.0
    %1465 = vadd.xlane.f32.xlu0 %v1464
    %v1466 = vpop.xlane.xlu0 %1465
    %v1467 = vsel %vm98, %v1457, 0.0
    %1468 = vadd.xlane.f32.xlu0 %v1467
    %v1469 = vpop.xlane.xlu0 %1468
    %v1470 = vrcp.pop 32.0
    %v1471 = vmul.f32 %v1460, %v1470
    %v1472 = vmul.f32 %v1463, %v1470
    %v1473 = vmul.f32 %v1466, %v1470
    %v1474 = vmul.f32 %v1469, %v1470
    %v1475 = vsub.f32 %v1454, %v1471
    %v1476 = vsub.f32 %v1455, %v1472
    %v1477 = vsub.f32 %v1456, %v1473
    %v1478 = vsub.f32 %v1457, %v1474
    %v1479 = vmul.f32 %v1475, %v1475
    %v1480 = vmul.f32 %v1476, %v1476
    %v1481 = vmul.f32 %v1477, %v1477
    %v1482 = vmul.f32 %v1478, %v1478
    %v1483 = vsel %vm98, %v1479, 0.0
    %1484 = vadd.xlane.f32.xlu0 %v1483
    %v1485 = vpop.xlane.xlu0 %1484
    %v1486 = vsel %vm98, %v1480, 0.0
    %1487 = vadd.xlane.f32.xlu0 %v1486
    %v1488 = vpop.xlane.xlu0 %1487
    %v1489 = vsel %vm98, %v1481, 0.0
    %1490 = vadd.xlane.f32.xlu0 %v1489
    %v1491 = vpop.xlane.xlu0 %1490
    %v1492 = vsel %vm98, %v1482, 0.0
    %1493 = vadd.xlane.f32.xlu0 %v1492
    %v1494 = vpop.xlane.xlu0 %1493
    %v1495 = vmul.f32 %v1485, %v1470
    %v1496 = vmul.f32 %v1488, %v1470
    %v1497 = vmul.f32 %v1491, %v1470
    %v1498 = vmul.f32 %v1494, %v1470
    %v1499 = vadd.f32 %v1495, 1e-05
    %v1500 = vadd.f32 %v1496, 1e-05
    %v1501 = vadd.f32 %v1497, 1e-05
    %v1502 = vadd.f32 %v1498, 1e-05
    %v1503 = vrsqrt.pop %v1499
    %v1504 = vrsqrt.pop %v1500
    %v1505 = vrsqrt.pop %v1501
    %v1506 = vrsqrt.pop %v1502
    %v1507 = vmul.f32 %v1475, %v1503
    %v1508 = vmul.f32 %v1476, %v1504
    %v1509 = vmul.f32 %v1477, %v1505
    %v1510 = vmul.f32 %v1478, %v1506
    %v1511 = vld [vmem:[%s6] sm:$0x1]
    %v1513 = vlaneseq
    %v1514 = vshrl.u32 %v1513, 7
    %v1515 = vsub.s32 0, %v1514
    %v1516 = vrot.slane %v1511, %v1515
    %v1518 = vmul.f32 %v1507, %v1516
    %v1519 = vmul.f32 %v1508, %v1516
    %v1520 = vmul.f32 %v1509, %v1516
    %v1521 = vmul.f32 %v1510, %v1516
    %v1522 = vld [vmem:[%s7] sm:$0x1]
    %v1524 = vlaneseq
    %v1525 = vshrl.u32 %v1524, 7
    %v1526 = vsub.s32 0, %v1525
    %v1527 = vrot.slane %v1522, %v1526
    %v1529 = vadd.f32 %v1518, %v1527
    %v1530 = vadd.f32 %v1519, %v1527
    %v1531 = vadd.f32 %v1520, %v1527
    %v1532 = vadd.f32 %v1521, %v1527
    %v1533 = vpack.c.bf16 %v1530, %v1529
    %v1534 = vpack.c.bf16 %v1532, %v1531
    %v1535 = vld [vmem:[#allocation2] sm:$0xf]
    %v1536 = vld [vmem:[#allocation2 + $0x4] sm:$0xf]
    %v1537 = vld [vmem:[#allocation2 + $0x8] sm:$0xf]
    %v1538 = vld [vmem:[#allocation2 + $0xc] sm:$0xf]
    %v1539 = vld [vmem:[%s9] sm:$0x1]
    %v1541 = vlaneseq
    %v1542 = vshrl.u32 %v1541, 7
    %v1543 = vsub.s32 0, %v1542
    %v1544 = vrot.slane %v1539, %v1543
    %v1550 = vunpack.c.l.b16 %v1535
    %v1551 = vunpack.c.l.b16 %v1536
    %v1552 = vunpack.c.l.b16 %v1537
    %v1553 = vunpack.c.l.b16 %v1538
    %v1554 = vpack.c.b16 %v1551, %v1550
    %v1555 = vpack.c.b16 %v1553, %v1552
    %v1559 = vsel %vm98, %v1533, 0
    %v1562 = vsel %vm98, %v1534, 0
    %1564 = vmatprep.subr.bf16.mxu0 0
    %1565 = vmatpush1.bf16.msra.mxu0 %v1554
    %1566 = vmatprep.subr.bf16.mxu0 0
    %1567 = vmatpush1.bf16.msra.mxu0 %v1555
    %1568 = vmatprep.subr.bf16.mxu0 0
    %1569 = vmatpush1.bf16.msra.mxu0 0
    %1570 = vmatprep.subr.bf16.mxu0 0
    %1571 = vmatpush1.bf16.msra.mxu0 0
    %1572 = vmatprep.subr.bf16.mxu0 0
    %1573 = vmatpush1.bf16.msra.mxu0 0
    %1574 = vmatprep.subr.bf16.mxu0 0
    %1575 = vmatpush1.bf16.msra.mxu0 0
    %1576 = vmatprep.subr.bf16.mxu0 0
    %1577 = vmatpush1.bf16.msra.mxu0 0
    %1578 = vmatprep.subr.bf16.mxu0 0
    %1579 = vmatpush1.bf16.msra.mxu0 0
    %1580 = vmatprep.subr.bf16.mxu0 0
    %1581 = vmatpush1.bf16.msra.mxu0 0
    %1582 = vmatprep.subr.bf16.mxu0 0
    %1583 = vmatpush1.bf16.msra.mxu0 0
    %1584 = vmatprep.subr.bf16.mxu0 0
    %1585 = vmatpush1.bf16.msra.mxu0 0
    %1586 = vmatprep.subr.bf16.mxu0 0
    %1587 = vmatpush1.bf16.msra.mxu0 0
    %1588 = vmatprep.subr.bf16.mxu0 0
    %1589 = vmatpush1.bf16.msra.mxu0 0
    %1590 = vmatprep.subr.bf16.mxu0 0
    %1591 = vmatpush1.bf16.msra.mxu0 0
    %1592 = vmatprep.subr.bf16.mxu0 0
    %1593 = vmatpush1.bf16.msra.mxu0 0
    %1594 = vmatprep.subr.bf16.mxu0 0
    %1595 = vmatpush1.bf16.msra.mxu0 0
    %1596 = vmatprep.mubr.bf16.mxu0 0
    %1597 = vmatmul.mubr.bf16.gmra.mrb[0].mxu0 %v1559
    %v1598 = vpop.f32.mrb[0].mxu0
    %v1599 = vadd.f32 %v1544, %v1598
    %v1600 = vpop.f32.mrb[0].mxu0
    %v1601 = vpop.f32.mrb[0].mxu0
    %v1602 = vadd.f32 %v1544, %v1601
    %v1603 = vpop.f32.mrb[0].mxu0
    %1604 = vmatprep.mubr.bf16.mxu0 0
    %1605 = vmatmul.mubr.bf16.gmra.mrb[0].mxu0 %v1562
    %v1606 = vpop.f32.mrb[0].mxu0
    %v1607 = vadd.f32 %v1544, %v1606
    %v1608 = vpop.f32.mrb[0].mxu0
    %v1609 = vpop.f32.mrb[0].mxu0
    %v1610 = vadd.f32 %v1544, %v1609
    %v1611 = vpop.f32.mrb[0].mxu0
    %1612 = vdwg.mxu0
    %v1613 = vmax.f32 %v1599, 0.0
    %v1614 = vmax.f32 %v1602, 0.0
    %v1615 = vmax.f32 %v1607, 0.0
    %v1616 = vmax.f32 %v1610, 0.0
    %v1617 = vpack.c.bf16 %v1614, %v1613
    %v1618 = vpack.c.bf16 %v1616, %v1615
    %v1619 = vld [vmem:[%s10] sm:$0xf]
    %v1620 = vld [vmem:[%s10 + $0x4] sm:$0xf]
    %v1621 = vld [vmem:[%s10 + $0x8] sm:$0xf]
    %v1622 = vld [vmem:[%s10 + $0xc] sm:$0xf]
    %v1623 = vld [vmem:[%s10 + $0x10] sm:$0xf]
    %v1624 = vld [vmem:[%s10 + $0x14] sm:$0xf]
    %v1625 = vld [vmem:[%s10 + $0x18] sm:$0xf]
    %v1626 = vld [vmem:[%s10 + $0x1c] sm:$0xf]
    %v1627 = vld [vmem:[%s11] sm:$0x1]
    %v1629 = vlaneseq
    %v1630 = vshrl.u32 %v1629, 7
    %v1631 = vsub.s32 0, %v1630
    %v1632 = vrot.slane %v1627, %v1631
    %v1642 = vunpack.c.l.b16 %v1619
    %v1643 = vunpack.c.l.b16 %v1620
    %v1644 = vunpack.c.l.b16 %v1621
    %v1645 = vunpack.c.l.b16 %v1622
    %v1646 = vunpack.c.l.b16 %v1623
    %v1647 = vunpack.c.l.b16 %v1624
    %v1648 = vunpack.c.l.b16 %v1625
    %v1649 = vunpack.c.l.b16 %v1626
    %v1650 = vpack.c.b16 %v1643, %v1642
    %v1651 = vpack.c.b16 %v1645, %v1644
    %v1652 = vpack.c.b16 %v1647, %v1646
    %v1653 = vpack.c.b16 %v1649, %v1648
    %vm1658 = vcmask 523264
    %v1660 = vsel %vm1658, %v1617, 0
    %v1663 = vsel %vm1658, %v1618, 0
    %1665 = vmatprep.subr.bf16.mxu0 0
    %1666 = vmatpush1.bf16.msra.mxu0 %v1650
    %1667 = vmatprep.subr.bf16.mxu0 0
    %1668 = vmatpush1.bf16.msra.mxu0 %v1651
    %1669 = vmatprep.subr.bf16.mxu0 0
    %1670 = vmatpush1.bf16.msra.mxu0 %v1652
    %1671 = vmatprep.subr.bf16.mxu0 0
    %1672 = vmatpush1.bf16.msra.mxu0 %v1653
    %1673 = vmatprep.subr.bf16.mxu0 0
    %1674 = vmatpush1.bf16.msra.mxu0 0
    %1675 = vmatprep.subr.bf16.mxu0 0
    %1676 = vmatpush1.bf16.msra.mxu0 0
    %1677 = vmatprep.subr.bf16.mxu0 0
    %1678 = vmatpush1.bf16.msra.mxu0 0
    %1679 = vmatprep.subr.bf16.mxu0 0
    %1680 = vmatpush1.bf16.msra.mxu0 0
    %1681 = vmatprep.subr.bf16.mxu0 0
    %1682 = vmatpush1.bf16.msra.mxu0 0
    %1683 = vmatprep.subr.bf16.mxu0 0
    %1684 = vmatpush1.bf16.msra.mxu0 0
    %1685 = vmatprep.subr.bf16.mxu0 0
    %1686 = vmatpush1.bf16.msra.mxu0 0
    %1687 = vmatprep.subr.bf16.mxu0 0
    %1688 = vmatpush1.bf16.msra.mxu0 0
    %1689 = vmatprep.subr.bf16.mxu0 0
    %1690 = vmatpush1.bf16.msra.mxu0 0
    %1691 = vmatprep.subr.bf16.mxu0 0
    %1692 = vmatpush1.bf16.msra.mxu0 0
    %1693 = vmatprep.subr.bf16.mxu0 0
    %1694 = vmatpush1.bf16.msra.mxu0 0
    %1695 = vmatprep.subr.bf16.mxu0 0
    %1696 = vmatpush1.bf16.msra.mxu0 0
    %1697 = vmatprep.mubr.bf16.mxu0 0
    %1698 = vmatmul.mubr.bf16.gmra.mrb[0].mxu0 %v1660
    %v1699 = vpop.f32.mrb[0].mxu0
    %v1700 = vadd.f32 %v1632, %v1699
    %v1701 = vpop.f32.mrb[0].mxu0
    %v1702 = vpop.f32.mrb[0].mxu0
    %v1703 = vadd.f32 %v1632, %v1702
    %v1704 = vpop.f32.mrb[0].mxu0
    %1705 = vmatprep.mubr.bf16.mxu0 0
    %1706 = vmatmul.mubr.bf16.gmra.mrb[0].mxu0 %v1663
    %v1707 = vpop.f32.mrb[0].mxu0
    %v1708 = vadd.f32 %v1632, %v1707
    %v1709 = vpop.f32.mrb[0].mxu0
    %v1710 = vpop.f32.mrb[0].mxu0
    %v1711 = vadd.f32 %v1632, %v1710
    %v1712 = vpop.f32.mrb[0].mxu0
    %1713 = vdwg.mxu0
    %v1714 = vadd.f32 %v1454, %v1700
    %v1715 = vadd.f32 %v1455, %v1703
    %v1716 = vadd.f32 %v1456, %v1708
    %v1717 = vadd.f32 %v1457, %v1711
    %v1718 = vpack.c.bf16 %v1715, %v1714
    %v1719 = vpack.c.bf16 %v1717, %v1716
    %v1722 = vunpack.c.l.b16 %v1718
    %v1723 = vunpack.c.h.b16 %v1718
    %v1724 = vunpack.c.l.b16 %v1719
    %v1725 = vunpack.c.h.b16 %v1719
    %v1726 = vpack.c.b16 %v1722, %v1722
    %v1727 = vpack.c.b16 %v1723, %v1723
    %v1728 = vpack.c.b16 %v1724, %v1724
    %v1729 = vpack.c.b16 %v1725, %v1725
    %vm1734 = vcmask 257024
    %1735 = vst.msk [vmem:[#allocation5] sm:$0xf] %vm1734, %v1726
    %1736 = vst.msk [vmem:[#allocation5 + $0x4] sm:$0xf] %vm1734, %v1727
    %1737 = vst.msk [vmem:[#allocation5 + $0x8] sm:$0xf] %vm1734, %v1728
    %1738 = vst.msk [vmem:[#allocation5 + $0xc] sm:$0xf] %vm1734, %v1729
    // Predicated region
    $region54: #{tpu_custom_call.1} parent=1 // pred_check
      _
    $region55: #{tpu_custom_call.1} parent=1 // pred_check_branch
      %1740 = sbr.rel (0) target = $region57
    $region56: #{tpu_custom_call.1} parent=1 // pred_region
      %s1742 = ssub.s32 256, 256
      %1743 = vsyncadd [#allocation4], %s1742
      %s1744 = sshll.u32 [#allocation5], 4
      %s1745 = int_to_ptr.vmem [resolvable:$true] %s1744
      %1750 = dma.vmem_to_hbm [thread:$0]  %s1745, 256, %s12, [#allocation4], 64, 64, 4
    $region57: #{tpu_custom_call.1} parent=1 // pred_fallthru
      _
    // Predicated region
    $region58: #{tpu_custom_call.1} parent=1 // pred_check
      _
    $region59: #{tpu_custom_call.1} parent=1 // pred_check_branch
      %1752 = sbr.rel (0) target = $region61
    $region60: #{tpu_custom_call.1} parent=1 // pred_region
      %1753 = dma.done [#allocation4], 256
    $region61: #{tpu_custom_call.1} parent=1 // pred_fallthru
      _
    %1754 = vsyncpa [#allocation3], 1
    %1755 = vsyncpa [#allocation4], 1

</llo_original>
